<compile_context>
chip_gen: v5e
topology: v5e:2x2
jax: 0.10.0
libtpu: 0.0.40
codegen_flags: <defaults>
</compile_context>

<pallas_src>
import jax
import jax.numpy as jnp
from jax.experimental import pallas as pl
from jax.experimental.pallas import tpu as pltpu

NOUT = 10
C = 40            # real channel count of conv1/conv2/fc1
CPAD = 128        # lane-dense channel padding

# Static spatial sizes implied by the module (28x28 MNIST input).
H0, W0 = 28, 28
H1, W1 = 26, 26       # conv1 output
W1P = 32              # conv1 output width padded so in-kernel reshapes stay free
HP1, WP1 = 13, 13     # pool1 output
H2, W2 = 11, 11       # conv2 output
W2P = 16              # conv2 output width padded to a multiple of 8
HP2, WP2 = 5, 5       # pool2 output
KT = 16               # conv1 im2col taps (9 real) padded
NGRP = 9              # fc1 lane groups: ceil(25 / 3) positions per 128 lanes
KFC1 = NGRP * CPAD    # 1152


# ---------------- fused Pallas kernel (one batch sample per grid step) --------

def _lenet_kernel(xcol_ref, w1_ref, b1_ref, w2_ref, b2_ref,
                  wf1_ref, bf1_ref, wf2_ref, bf2_ref,
                  o_ref,
                  a1_ref, r1_ref, p1p_ref, acc2_ref):
    f32 = jnp.float32

    # ---- conv1 (1 -> 40): single im2col MXU matmul (bias/ReLU folded into pool1).
    lhs1 = xcol_ref[...].reshape(H1 * W1P, KT)                     # free view
    a1_ref[...] = jnp.dot(lhs1, w1_ref[...],
                          preferred_element_type=f32).reshape(H1, W1P, CPAD)

    # ---- pool1 (H): pairwise row max via reshape-split (free view).
    a1 = a1_ref[...].reshape(HP1, 2, W1P, CPAD)
    r1_ref[...] = jnp.maximum(a1[:, 0, :, :], a1[:, 1, :, :])      # (13, 32, 128)

    # ---- pool1 (W) + bias + ReLU + conv2 kw-packing.
    # p1p[i, j, 40*kw + c] = relu(maxpool1[i, j + kw, c] + b1[c]).
    # Only the 3 pad columns are zeroed (not the whole buffer).
    p1p_ref[:, pl.ds(WP1, W2P - WP1), :] = jnp.zeros(
        (HP1, W2P - WP1, CPAD), f32)
    p1p = None
    for kw in range(3):
        even = r1_ref[:, pl.ds(2 * kw, WP1, 2), :]
        odd = r1_ref[:, pl.ds(2 * kw + 1, WP1, 2), :]
        band = jnp.maximum(jnp.maximum(even, odd) + b1_ref[...], 0.0)  # (13,13,128)
        if kw:
            band = pltpu.roll(band, C * kw, axis=2)                # lanes += 40*kw
        p1p = band if p1p is None else p1p + band
    p1p_ref[:, pl.ds(0, WP1), :] = p1p

    # ---- conv2 (40 -> 40): 3 MXU matmuls over kh, K packs kw*40 + cin (120 real).
    rows2 = H2 * W2P
    acc2_ref[...] = jnp.dot(
        p1p_ref[0:H2, :, :].reshape(rows2, CPAD), w2_ref[0],
        preferred_element_type=f32).reshape(H2, W2P, CPAD)
    for kh in (1, 2):
        acc2_ref[...] += jnp.dot(
            p1p_ref[kh:kh + H2, :, :].reshape(rows2, CPAD), w2_ref[kh],
            preferred_element_type=f32).reshape(H2, W2P, CPAD)

    # ---- pool2 (floor 2x2) + bias + ReLU + fc1 lane packing, then fc1/fc2 (MXU).
    # fc1 lane layout: group g holds spatial positions 3g..3g+2 at offsets 0/40/80.
    groups = []
    for g in range(NGRP):
        acc = None
        for r in range(3):
            pos = 3 * g + r
            if pos >= HP2 * WP2:
                break
            i, j = divmod(pos, WP2)
            top = acc2_ref[pl.ds(2 * i, 1), pl.ds(2 * j, 2), :]     # (1, 2, 128)
            bot = acc2_ref[pl.ds(2 * i + 1, 1), pl.ds(2 * j, 2), :]  # (1, 2, 128)
            m = jnp.maximum(top, bot)
            q = jnp.maximum(jnp.maximum(m[:, 0, :], m[:, 1, :])
                            + b2_ref[...], 0.0)                     # (1, 128)
            if r:
                q = pltpu.roll(q, C * r, axis=1)
            acc = q if acc is None else acc + q
        groups.append(acc)
    flat = jnp.concatenate(groups, axis=-1)                         # (1, 1152)

    z = jnp.maximum(jnp.dot(flat, wf1_ref[...], preferred_element_type=f32)
                    + bf1_ref[...], 0.0)                            # (1, 40)
    out = jnp.dot(z, wf2_ref[...], preferred_element_type=f32) + bf2_ref[...]
    o_ref[...] = out.reshape(1, 1, -1)


def _lenet_fused(xcol, prep):
    B = xcol.shape[0]
    nout = prep["wf2"].shape[1]

    def const2(b):
        return (0, 0)

    def const3(b):
        return (0, 0, 0)

    in_specs = [
        pl.BlockSpec((1, H1, W1P, KT), lambda b: (b, 0, 0, 0)),   # conv1 im2col LHS
        pl.BlockSpec((KT, CPAD), const2),                         # w1  (tap, out)
        pl.BlockSpec((1, CPAD), const2),                          # b1
        pl.BlockSpec((3, CPAD, CPAD), const3),                    # w2  (kh)(kw*40+cin, out)
        pl.BlockSpec((1, CPAD), const2),                          # b2
        pl.BlockSpec((KFC1, C), const2),                          # wf1 (lane-packed, out)
        pl.BlockSpec((1, C), const2),                             # bf1
        pl.BlockSpec((C, nout), const2),                          # wf2
        pl.BlockSpec((1, nout), const2),                          # bf2
    ]
    scratch_shapes = [
        pltpu.VMEM((H1, W1P, CPAD), jnp.float32),     # conv1 output (pre-activation)
        pltpu.VMEM((HP1, W1P, CPAD), jnp.float32),    # pool1 row-max buffer
        pltpu.VMEM((HP1, W2P, CPAD), jnp.float32),    # kw-packed pool1 output
        pltpu.VMEM((H2, W2P, CPAD), jnp.float32),     # conv2 accumulator
    ]
    out = pl.pallas_call(
        _lenet_kernel,
        out_shape=jax.ShapeDtypeStruct((B, 1, nout), jnp.float32),
        grid_spec=pltpu.PrefetchScalarGridSpec(
            num_scalar_prefetch=0,
            grid=(B,),
            in_specs=in_specs,
            out_specs=pl.BlockSpec((1, 1, nout), lambda b: (b, 0, 0)),
            scratch_shapes=scratch_shapes),
        compiler_params=pltpu.CompilerParams(
            dimension_semantics=("parallel",)),
    )(xcol, prep["w1"], prep["b1"], prep["w2"], prep["b2"],
      prep["wf1"], prep["bf1"], prep["wf2"], prep["bf2"])
    return out.reshape(B, nout)


# ---------------- parameters & one-time weight prep ----------------

def init_params(key, nout=10):
    ks = jax.random.split(key, 8)

    def u(k, shape, fan_in):
        bound = 1.0 / jnp.sqrt(float(fan_in))
        return jax.random.uniform(k, shape, jnp.float32, -bound, bound)

    p = {}
    p["w1"] = u(ks[0], (40, 1, 3, 3), 1 * 3 * 3)            # conv1 weight (OIHW)
    p["b1"] = u(ks[1], (40,), 1 * 3 * 3)
    p["w2"] = u(ks[2], (40, 40, 3, 3), 40 * 3 * 3)           # conv2 weight (OIHW)
    p["b2"] = u(ks[3], (40,), 40 * 3 * 3)
    p["wf1"] = u(ks[4], (40 * 5 * 5, 40), 40 * 5 * 5)        # fc1 weight (in, out)
    p["bf1"] = u(ks[5], (40,), 40 * 5 * 5)
    p["wf2"] = u(ks[6], (40, nout), 40)                      # fc2 weight (in, out)
    p["bf2"] = u(ks[7], (nout,), 40)
    return p


def prepare_params(p):
    """One-time weight transform (outside the jitted hot path)."""
    f32 = jnp.float32
    nout = p["wf2"].shape[1]

    # conv1: (O=40, 1, 3, 3) -> (16, 128): rows = kh*3 + kw (im2col tap order).
    w1 = jnp.transpose(p["w1"][:, 0, :, :], (1, 2, 0)).reshape(9, C).astype(f32)
    w1p = jnp.zeros((KT, CPAD), f32).at[:9, :C].set(w1)
    b1p = jnp.zeros((1, CPAD), f32).at[0, :C].set(p["b1"].astype(f32))

    # conv2: (O, I, 3, 3) -> (3, 128, 128): [kh][kw*40 + cin, cout].
    w2 = jnp.transpose(p["w2"], (2, 3, 1, 0)).reshape(3, 3 * C, C).astype(f32)
    w2p = jnp.zeros((3, CPAD, CPAD), f32).at[:, :3 * C, :C].set(w2)
    b2p = jnp.zeros((1, CPAD), f32).at[0, :C].set(p["b2"].astype(f32))

    # fc1: rows reordered to the kernel's lane packing.  Kernel lane index is
    # 128*g + 40*r + cin with spatial position pos = i*5 + j = 3*g + r, while
    # PyTorch's NCHW flatten index is cin*25 + pos.
    wf1_src = p["wf1"].reshape(C, HP2 * WP2, C).astype(f32)    # (cin, pos, out)
    wf1p = jnp.zeros((KFC1, C), f32)
    for pos in range(HP2 * WP2):
        g, r = divmod(pos, 3)
        off = CPAD * g + C * r
        wf1p = wf1p.at[off:off + C, :].set(wf1_src[:, pos, :])
    bf1p = p["bf1"].reshape(1, C).astype(f32)

    wf2p = p["wf2"].astype(f32)                                 # (40, nout)
    bf2p = p["bf2"].reshape(1, nout).astype(f32)

    return {"w1": w1p, "b1": b1p, "w2": w2p, "b2": b2p,
            "wf1": wf1p, "bf1": bf1p, "wf2": wf2p, "bf2": bf2p}


# ---------------- forward ----------------

@jax.jit
def lenet_forward(prep, x_nchw):
    """x_nchw: (B, 1, 28, 28).  The conv1 im2col patch extraction is pure data
    movement, so it is built here (XLA) and fed straight to the in-kernel MXU
    matmul; all multiply/accumulate, pooling and FC math runs in the kernel."""
    x = x_nchw.astype(jnp.float32)[:, 0, :, :]                      # (B, 28, 28)
    taps = [x[:, kh:kh + H1, kw:kw + W1] for kh in range(3) for kw in range(3)]
    xcol = jnp.stack(taps, axis=-1)                                 # (B, 26, 26, 9)
    xcol = jnp.pad(xcol, ((0, 0), (0, 0), (0, W1P - W1), (0, KT - 9)))
    return _lenet_fused(xcol, prep)


# ---------------- pure-JAX reference (for correctness check) ----------------

def lenet_reference(params, x_nchw):
    x = jnp.transpose(x_nchw, (0, 2, 3, 1)).astype(jnp.float32)

    def conv(x, w, b):                       # w: (O, I, 3, 3), valid, stride 1
        B, H, W, _ = x.shape
        Ho, Wo = H - 2, W - 2
        acc = jnp.zeros((B, Ho, Wo, w.shape[0]), jnp.float32)
        for kh in range(3):
            for kw in range(3):
                patch = x[:, kh:kh + Ho, kw:kw + Wo, :]
                acc = acc + jnp.einsum("bhwc,oc->bhwo", patch, w[:, :, kh, kw])
        return acc + b

    def pool(x):
        B, H, W, Cc = x.shape
        Hp, Wp = H // 2, W // 2
        x = x[:, :2 * Hp, :2 * Wp, :].reshape(B, Hp, 2, Wp, 2, Cc)
        return jnp.max(x, axis=(2, 4))

    x = pool(jax.nn.relu(conv(x, params["w1"], params["b1"])))
    x = pool(jax.nn.relu(conv(x, params["w2"], params["b2"])))
    B = x.shape[0]
    x = jnp.transpose(x, (0, 3, 1, 2)).reshape(B, 40 * 5 * 5)   # NCHW flatten
    x = jax.nn.relu(x @ params["wf1"] + params["bf1"])
    return x @ params["wf2"] + params["bf2"]


if __name__ == "__main__":
    key = jax.random.PRNGKey(0)
    kp, kx = jax.random.split(key)
    params = init_params(kp, nout=NOUT)
    prep = prepare_params(params)            # one-time weight prep, outside the jit
    x = jax.random.normal(kx, (2, 1, 28, 28), jnp.float32)

    out = jax.block_until_ready(lenet_forward(prep, x))
    assert out.shape == (2, NOUT) and out.dtype == jnp.float32

    ref = jax.block_until_ready(jax.jit(lenet_reference)(params, x))
    err = float(jnp.max(jnp.abs(out - ref)))
    assert err < 1e-3, f"mismatch vs reference: max abs err = {err}"
    print("KERNEL_OK")
</pallas_src>

<mosaic_0001>
module attributes {stable_mosaic.version = 11 : i64} {
  func.func @_lenet_kernel(%arg0: i32, %arg1: memref<1x26x32x16xf32, #tpu.memory_space<vmem>>, %arg2: memref<16x128xf32, #tpu.memory_space<vmem>>, %arg3: memref<1x128xf32, #tpu.memory_space<vmem>>, %arg4: memref<3x128x128xf32, #tpu.memory_space<vmem>>, %arg5: memref<1x128xf32, #tpu.memory_space<vmem>>, %arg6: memref<1152x40xf32, #tpu.memory_space<vmem>>, %arg7: memref<1x40xf32, #tpu.memory_space<vmem>>, %arg8: memref<40x10xf32, #tpu.memory_space<vmem>>, %arg9: memref<1x10xf32, #tpu.memory_space<vmem>>, %arg10: memref<1x1x10xf32, #tpu.memory_space<vmem>>, %arg11: memref<26x32x128xf32, #tpu.memory_space<vmem>>, %arg12: memref<13x32x128xf32, #tpu.memory_space<vmem>>, %arg13: memref<13x16x128xf32, #tpu.memory_space<vmem>>, %arg14: memref<11x16x128xf32, #tpu.memory_space<vmem>>) attributes {dimension_semantics = [#tpu.dimension_semantics<parallel>], iteration_bounds = array<i64: 2>, scalar_prefetch = 0 : i64, scratch_operands = 4 : i64, tpu.core_type = #tpu.core_type<tc>, window_params = [{transform_indices = @transform_0, window_bounds = array<i64: 1, 26, 32, 16>}, {pipeline_mode = #tpu.pipeline_mode<synchronous>, transform_indices = @transform_1, window_bounds = array<i64: 16, 128>}, {pipeline_mode = #tpu.pipeline_mode<synchronous>, transform_indices = @transform_2, window_bounds = array<i64: 1, 128>}, {pipeline_mode = #tpu.pipeline_mode<synchronous>, transform_indices = @transform_3, window_bounds = array<i64: 3, 128, 128>}, {pipeline_mode = #tpu.pipeline_mode<synchronous>, transform_indices = @transform_4, window_bounds = array<i64: 1, 128>}, {pipeline_mode = #tpu.pipeline_mode<synchronous>, transform_indices = @transform_5, window_bounds = array<i64: 1152, 40>}, {pipeline_mode = #tpu.pipeline_mode<synchronous>, transform_indices = @transform_6, window_bounds = array<i64: 1, 40>}, {pipeline_mode = #tpu.pipeline_mode<synchronous>, transform_indices = @transform_7, window_bounds = array<i64: 40, 10>}, {pipeline_mode = #tpu.pipeline_mode<synchronous>, transform_indices = @transform_8, window_bounds = array<i64: 1, 10>}, {transform_indices = @transform_9, window_bounds = array<i64: 1, 1, 10>}]} {
    %c0 = arith.constant 0 : index
    %c0_0 = arith.constant 0 : index
    %c0_1 = arith.constant 0 : index
    %c0_2 = arith.constant 0 : index
    %0 = vector.load %arg1[%c0, %c0_0, %c0_1, %c0_2] : memref<1x26x32x16xf32, #tpu.memory_space<vmem>>, vector<1x26x32x16xf32>
    %1 = vector.shape_cast %0 : vector<1x26x32x16xf32> to vector<832x16xf32>
    %c0_3 = arith.constant 0 : index
    %c0_4 = arith.constant 0 : index
    %2 = vector.load %arg2[%c0_3, %c0_4] : memref<16x128xf32, #tpu.memory_space<vmem>>, vector<16x128xf32>
    %cst = arith.constant dense<0.000000e+00> : vector<832x128xf32>
    %3 = tpu.matmul %1, %2, %cst {dimension_numbers = #tpu.dot_dimension_numbers<[1], [0], [0], [1], [0, 0, 1, 1], [], []>} : vector<832x16xf32>, vector<16x128xf32>, vector<832x128xf32> -> vector<832x128xf32>
    %4 = vector.shape_cast %3 : vector<832x128xf32> to vector<26x32x128xf32>
    %c0_5 = arith.constant 0 : index
    %c0_6 = arith.constant 0 : index
    %c0_7 = arith.constant 0 : index
    %5 = vector.load %arg11[%c0_5, %c0_6, %c0_7] : memref<26x32x128xf32, #tpu.memory_space<vmem>>, vector<26x32x128xf32>
    tpu.vector_store %arg11[%c0_5, %c0_6, %c0_7], %4 {strides = array<i32>} : memref<26x32x128xf32, #tpu.memory_space<vmem>>, vector<26x32x128xf32>,
    %c0_8 = arith.constant 0 : index
    %c0_9 = arith.constant 0 : index
    %c0_10 = arith.constant 0 : index
    %6 = vector.load %arg11[%c0_8, %c0_9, %c0_10] : memref<26x32x128xf32, #tpu.memory_space<vmem>>, vector<26x32x128xf32>
    %7 = vector.shape_cast %6 : vector<26x32x128xf32> to vector<13x2x32x128xf32>
    %8 = vector.extract_strided_slice %7 {offsets = [0, 0, 0, 0], sizes = [13, 1, 32, 128], strides = [1, 1, 1, 1]} : vector<13x2x32x128xf32> to vector<13x1x32x128xf32>
    %9 = vector.shape_cast %8 : vector<13x1x32x128xf32> to vector<13x32x128xf32>
    %10 = vector.extract_strided_slice %7 {offsets = [0, 1, 0, 0], sizes = [13, 1, 32, 128], strides = [1, 1, 1, 1]} : vector<13x2x32x128xf32> to vector<13x1x32x128xf32>
    %11 = vector.shape_cast %10 : vector<13x1x32x128xf32> to vector<13x32x128xf32>
    %12 = arith.maximumf %9, %11 : vector<13x32x128xf32>
    %c0_11 = arith.constant 0 : index
    %c0_12 = arith.constant 0 : index
    %c0_13 = arith.constant 0 : index
    %13 = vector.load %arg12[%c0_11, %c0_12, %c0_13] : memref<13x32x128xf32, #tpu.memory_space<vmem>>, vector<13x32x128xf32>
    tpu.vector_store %arg12[%c0_11, %c0_12, %c0_13], %12 {strides = array<i32>} : memref<13x32x128xf32, #tpu.memory_space<vmem>>, vector<13x32x128xf32>,
    %cst_14 = arith.constant 0.000000e+00 : f32
    %14 = vector.broadcast %cst_14 : f32 to vector<13x3x128xf32>
    %c0_15 = arith.constant 0 : index
    %c13 = arith.constant 13 : index
    %c0_16 = arith.constant 0 : index
    %15 = vector.load %arg13[%c0_15, %c13, %c0_16] : memref<13x16x128xf32, #tpu.memory_space<vmem>>, vector<13x3x128xf32>
    tpu.vector_store %arg13[%c0_15, %c13, %c0_16], %14 {strides = array<i32>} : memref<13x16x128xf32, #tpu.memory_space<vmem>>, vector<13x3x128xf32>,
    %c0_17 = arith.constant 0 : index
    %c0_18 = arith.constant 0 : index
    %c0_19 = arith.constant 0 : index
    %16 = tpu.strided_load %arg12[%c0_17, %c0_18, %c0_19] {strides = array<i32: 1, 2, 1>} : memref<13x32x128xf32, #tpu.memory_space<vmem>>, vector<13x13x128xf32>
    %c0_20 = arith.constant 0 : index
    %c1 = arith.constant 1 : index
    %c0_21 = arith.constant 0 : index
    %17 = tpu.strided_load %arg12[%c0_20, %c1, %c0_21] {strides = array<i32: 1, 2, 1>} : memref<13x32x128xf32, #tpu.memory_space<vmem>>, vector<13x13x128xf32>
    %18 = arith.maximumf %16, %17 : vector<13x13x128xf32>
    %c0_22 = arith.constant 0 : index
    %c0_23 = arith.constant 0 : index
    %19 = vector.load %arg3[%c0_22, %c0_23] : memref<1x128xf32, #tpu.memory_space<vmem>>, vector<1x128xf32>
    %20 = vector.shape_cast %19 : vector<1x128xf32> to vector<1x1x128xf32>
    %21 = vector.broadcast %20 : vector<1x1x128xf32> to vector<13x13x128xf32>
    %22 = arith.addf %18, %21 : vector<13x13x128xf32>
    %cst_24 = arith.constant 0.000000e+00 : f32
    %23 = vector.broadcast %cst_24 : f32 to vector<13x13x128xf32>
    %24 = arith.maximumf %22, %23 : vector<13x13x128xf32>
    %c0_25 = arith.constant 0 : index
    %c2 = arith.constant 2 : index
    %c0_26 = arith.constant 0 : index
    %25 = tpu.strided_load %arg12[%c0_25, %c2, %c0_26] {strides = array<i32: 1, 2, 1>} : memref<13x32x128xf32, #tpu.memory_space<vmem>>, vector<13x13x128xf32>
    %c0_27 = arith.constant 0 : index
    %c3 = arith.constant 3 : index
    %c0_28 = arith.constant 0 : index
    %26 = tpu.strided_load %arg12[%c0_27, %c3, %c0_28] {strides = array<i32: 1, 2, 1>} : memref<13x32x128xf32, #tpu.memory_space<vmem>>, vector<13x13x128xf32>
    %27 = arith.maximumf %25, %26 : vector<13x13x128xf32>
    %c0_29 = arith.constant 0 : index
    %c0_30 = arith.constant 0 : index
    %28 = vector.load %arg3[%c0_29, %c0_30] : memref<1x128xf32, #tpu.memory_space<vmem>>, vector<1x128xf32>
    %29 = vector.shape_cast %28 : vector<1x128xf32> to vector<1x1x128xf32>
    %30 = vector.broadcast %29 : vector<1x1x128xf32> to vector<13x13x128xf32>
    %31 = arith.addf %27, %30 : vector<13x13x128xf32>
    %cst_31 = arith.constant 0.000000e+00 : f32
    %32 = vector.broadcast %cst_31 : f32 to vector<13x13x128xf32>
    %33 = arith.maximumf %31, %32 : vector<13x13x128xf32>
    %c40_i32 = arith.constant 40 : i32
    %34 = tpu.dynamic_rotate %33 by %c40_i32 dim 2 : vector<13x13x128xf32>, i32 -> vector<13x13x128xf32>
    %35 = arith.addf %24, %34 : vector<13x13x128xf32>
    %c0_32 = arith.constant 0 : index
    %c4 = arith.constant 4 : index
    %c0_33 = arith.constant 0 : index
    %36 = tpu.strided_load %arg12[%c0_32, %c4, %c0_33] {strides = array<i32: 1, 2, 1>} : memref<13x32x128xf32, #tpu.memory_space<vmem>>, vector<13x13x128xf32>
    %c0_34 = arith.constant 0 : index
    %c5 = arith.constant 5 : index
    %c0_35 = arith.constant 0 : index
    %37 = tpu.strided_load %arg12[%c0_34, %c5, %c0_35] {strides = array<i32: 1, 2, 1>} : memref<13x32x128xf32, #tpu.memory_space<vmem>>, vector<13x13x128xf32>
    %38 = arith.maximumf %36, %37 : vector<13x13x128xf32>
    %c0_36 = arith.constant 0 : index
    %c0_37 = arith.constant 0 : index
    %39 = vector.load %arg3[%c0_36, %c0_37] : memref<1x128xf32, #tpu.memory_space<vmem>>, vector<1x128xf32>
    %40 = vector.shape_cast %39 : vector<1x128xf32> to vector<1x1x128xf32>
    %41 = vector.broadcast %40 : vector<1x1x128xf32> to vector<13x13x128xf32>
    %42 = arith.addf %38, %41 : vector<13x13x128xf32>
    %cst_38 = arith.constant 0.000000e+00 : f32
    %43 = vector.broadcast %cst_38 : f32 to vector<13x13x128xf32>
    %44 = arith.maximumf %42, %43 : vector<13x13x128xf32>
    %c80_i32 = arith.constant 80 : i32
    %45 = tpu.dynamic_rotate %44 by %c80_i32 dim 2 : vector<13x13x128xf32>, i32 -> vector<13x13x128xf32>
    %46 = arith.addf %35, %45 : vector<13x13x128xf32>
    %c0_39 = arith.constant 0 : index
    %c0_40 = arith.constant 0 : index
    %c0_41 = arith.constant 0 : index
    %47 = vector.load %arg13[%c0_39, %c0_40, %c0_41] : memref<13x16x128xf32, #tpu.memory_space<vmem>>, vector<13x13x128xf32>
    tpu.vector_store %arg13[%c0_39, %c0_40, %c0_41], %46 {strides = array<i32>} : memref<13x16x128xf32, #tpu.memory_space<vmem>>, vector<13x13x128xf32>,
    %c0_42 = arith.constant 0 : index
    %c0_43 = arith.constant 0 : index
    %c0_44 = arith.constant 0 : index
    %48 = vector.load %arg13[%c0_42, %c0_43, %c0_44] : memref<13x16x128xf32, #tpu.memory_space<vmem>>, vector<11x16x128xf32>
    %49 = vector.shape_cast %48 : vector<11x16x128xf32> to vector<176x128xf32>
    %c0_45 = arith.constant 0 : index
    %c0_46 = arith.constant 0 : index
    %c0_47 = arith.constant 0 : index
    %50 = vector.load %arg4[%c0_45, %c0_46, %c0_47] : memref<3x128x128xf32, #tpu.memory_space<vmem>>, vector<1x128x128xf32>
    %51 = vector.shape_cast %50 : vector<1x128x128xf32> to vector<128x128xf32>
    %cst_48 = arith.constant dense<0.000000e+00> : vector<176x128xf32>
    %52 = tpu.matmul %49, %51, %cst_48 {dimension_numbers = #tpu.dot_dimension_numbers<[1], [0], [0], [1], [0, 0, 1, 1], [], []>} : vector<176x128xf32>, vector<128x128xf32>, vector<176x128xf32> -> vector<176x128xf32>
    %53 = vector.shape_cast %52 : vector<176x128xf32> to vector<11x16x128xf32>
    %c0_49 = arith.constant 0 : index
    %c0_50 = arith.constant 0 : index
    %c0_51 = arith.constant 0 : index
    %54 = vector.load %arg14[%c0_49, %c0_50, %c0_51] : memref<11x16x128xf32, #tpu.memory_space<vmem>>, vector<11x16x128xf32>
    tpu.vector_store %arg14[%c0_49, %c0_50, %c0_51], %53 {strides = array<i32>} : memref<11x16x128xf32, #tpu.memory_space<vmem>>, vector<11x16x128xf32>,
    %c0_52 = arith.constant 0 : index
    %c0_53 = arith.constant 0 : index
    %c0_54 = arith.constant 0 : index
    %55 = vector.load %arg14[%c0_52, %c0_53, %c0_54] : memref<11x16x128xf32, #tpu.memory_space<vmem>>, vector<11x16x128xf32>
    %c1_55 = arith.constant 1 : index
    %c0_56 = arith.constant 0 : index
    %c0_57 = arith.constant 0 : index
    %56 = vector.load %arg13[%c1_55, %c0_56, %c0_57] : memref<13x16x128xf32, #tpu.memory_space<vmem>>, vector<11x16x128xf32>
    %57 = vector.shape_cast %56 : vector<11x16x128xf32> to vector<176x128xf32>
    %c1_58 = arith.constant 1 : index
    %c0_59 = arith.constant 0 : index
    %c0_60 = arith.constant 0 : index
    %58 = vector.load %arg4[%c1_58, %c0_59, %c0_60] : memref<3x128x128xf32, #tpu.memory_space<vmem>>, vector<1x128x128xf32>
    %59 = vector.shape_cast %58 : vector<1x128x128xf32> to vector<128x128xf32>
    %cst_61 = arith.constant dense<0.000000e+00> : vector<176x128xf32>
    %60 = tpu.matmul %57, %59, %cst_61 {dimension_numbers = #tpu.dot_dimension_numbers<[1], [0], [0], [1], [0, 0, 1, 1], [], []>} : vector<176x128xf32>, vector<128x128xf32>, vector<176x128xf32> -> vector<176x128xf32>
    %61 = vector.shape_cast %60 : vector<176x128xf32> to vector<11x16x128xf32>
    %62 = arith.addf %55, %61 : vector<11x16x128xf32>
    %c0_62 = arith.constant 0 : index
    %c0_63 = arith.constant 0 : index
    %c0_64 = arith.constant 0 : index
    %63 = vector.load %arg14[%c0_62, %c0_63, %c0_64] : memref<11x16x128xf32, #tpu.memory_space<vmem>>, vector<11x16x128xf32>
    tpu.vector_store %arg14[%c0_62, %c0_63, %c0_64], %62 {strides = array<i32>} : memref<11x16x128xf32, #tpu.memory_space<vmem>>, vector<11x16x128xf32>,
    %c0_65 = arith.constant 0 : index
    %c0_66 = arith.constant 0 : index
    %c0_67 = arith.constant 0 : index
    %64 = vector.load %arg14[%c0_65, %c0_66, %c0_67] : memref<11x16x128xf32, #tpu.memory_space<vmem>>, vector<11x16x128xf32>
    %c2_68 = arith.constant 2 : index
    %c0_69 = arith.constant 0 : index
    %c0_70 = arith.constant 0 : index
    %65 = vector.load %arg13[%c2_68, %c0_69, %c0_70] : memref<13x16x128xf32, #tpu.memory_space<vmem>>, vector<11x16x128xf32>
    %66 = vector.shape_cast %65 : vector<11x16x128xf32> to vector<176x128xf32>
    %c2_71 = arith.constant 2 : index
    %c0_72 = arith.constant 0 : index
    %c0_73 = arith.constant 0 : index
    %67 = vector.load %arg4[%c2_71, %c0_72, %c0_73] : memref<3x128x128xf32, #tpu.memory_space<vmem>>, vector<1x128x128xf32>
    %68 = vector.shape_cast %67 : vector<1x128x128xf32> to vector<128x128xf32>
    %cst_74 = arith.constant dense<0.000000e+00> : vector<176x128xf32>
    %69 = tpu.matmul %66, %68, %cst_74 {dimension_numbers = #tpu.dot_dimension_numbers<[1], [0], [0], [1], [0, 0, 1, 1], [], []>} : vector<176x128xf32>, vector<128x128xf32>, vector<176x128xf32> -> vector<176x128xf32>
    %70 = vector.shape_cast %69 : vector<176x128xf32> to vector<11x16x128xf32>
    %71 = arith.addf %64, %70 : vector<11x16x128xf32>
    %c0_75 = arith.constant 0 : index
    %c0_76 = arith.constant 0 : index
    %c0_77 = arith.constant 0 : index
    %72 = vector.load %arg14[%c0_75, %c0_76, %c0_77] : memref<11x16x128xf32, #tpu.memory_space<vmem>>, vector<11x16x128xf32>
    tpu.vector_store %arg14[%c0_75, %c0_76, %c0_77], %71 {strides = array<i32>} : memref<11x16x128xf32, #tpu.memory_space<vmem>>, vector<11x16x128xf32>,
    %c0_78 = arith.constant 0 : index
    %c0_79 = arith.constant 0 : index
    %c0_80 = arith.constant 0 : index
    %73 = vector.load %arg14[%c0_78, %c0_79, %c0_80] : memref<11x16x128xf32, #tpu.memory_space<vmem>>, vector<1x2x128xf32>
    %c1_81 = arith.constant 1 : index
    %c0_82 = arith.constant 0 : index
    %c0_83 = arith.constant 0 : index
    %74 = vector.load %arg14[%c1_81, %c0_82, %c0_83] : memref<11x16x128xf32, #tpu.memory_space<vmem>>, vector<1x2x128xf32>
    %75 = arith.maximumf %73, %74 : vector<1x2x128xf32>
    %76 = vector.extract_strided_slice %75 {offsets = [0, 0, 0], sizes = [1, 1, 128], strides = [1, 1, 1]} : vector<1x2x128xf32> to vector<1x1x128xf32>
    %77 = vector.shape_cast %76 : vector<1x1x128xf32> to vector<1x128xf32>
    %78 = vector.extract_strided_slice %75 {offsets = [0, 1, 0], sizes = [1, 1, 128], strides = [1, 1, 1]} : vector<1x2x128xf32> to vector<1x1x128xf32>
    %79 = vector.shape_cast %78 : vector<1x1x128xf32> to vector<1x128xf32>
    %80 = arith.maximumf %77, %79 : vector<1x128xf32>
    %c0_84 = arith.constant 0 : index
    %c0_85 = arith.constant 0 : index
    %81 = vector.load %arg5[%c0_84, %c0_85] : memref<1x128xf32, #tpu.memory_space<vmem>>, vector<1x128xf32>
    %82 = arith.addf %80, %81 : vector<1x128xf32>
    %cst_86 = arith.constant 0.000000e+00 : f32
    %83 = vector.broadcast %cst_86 : f32 to vector<1x128xf32>
    %84 = arith.maximumf %82, %83 : vector<1x128xf32>
    %c0_87 = arith.constant 0 : index
    %c2_88 = arith.constant 2 : index
    %c0_89 = arith.constant 0 : index
    %85 = vector.load %arg14[%c0_87, %c2_88, %c0_89] : memref<11x16x128xf32, #tpu.memory_space<vmem>>, vector<1x2x128xf32>
    %c1_90 = arith.constant 1 : index
    %c2_91 = arith.constant 2 : index
    %c0_92 = arith.constant 0 : index
    %86 = vector.load %arg14[%c1_90, %c2_91, %c0_92] : memref<11x16x128xf32, #tpu.memory_space<vmem>>, vector<1x2x128xf32>
    %87 = arith.maximumf %85, %86 : vector<1x2x128xf32>
    %88 = vector.extract_strided_slice %87 {offsets = [0, 0, 0], sizes = [1, 1, 128], strides = [1, 1, 1]} : vector<1x2x128xf32> to vector<1x1x128xf32>
    %89 = vector.shape_cast %88 : vector<1x1x128xf32> to vector<1x128xf32>
    %90 = vector.extract_strided_slice %87 {offsets = [0, 1, 0], sizes = [1, 1, 128], strides = [1, 1, 1]} : vector<1x2x128xf32> to vector<1x1x128xf32>
    %91 = vector.shape_cast %90 : vector<1x1x128xf32> to vector<1x128xf32>
    %92 = arith.maximumf %89, %91 : vector<1x128xf32>
    %c0_93 = arith.constant 0 : index
    %c0_94 = arith.constant 0 : index
    %93 = vector.load %arg5[%c0_93, %c0_94] : memref<1x128xf32, #tpu.memory_space<vmem>>, vector<1x128xf32>
    %94 = arith.addf %92, %93 : vector<1x128xf32>
    %cst_95 = arith.constant 0.000000e+00 : f32
    %95 = vector.broadcast %cst_95 : f32 to vector<1x128xf32>
    %96 = arith.maximumf %94, %95 : vector<1x128xf32>
    %c40_i32_96 = arith.constant 40 : i32
    %97 = tpu.dynamic_rotate %96 by %c40_i32_96 dim 1 : vector<1x128xf32>, i32 -> vector<1x128xf32>
    %98 = arith.addf %84, %97 : vector<1x128xf32>
    %c0_97 = arith.constant 0 : index
    %c4_98 = arith.constant 4 : index
    %c0_99 = arith.constant 0 : index
    %99 = vector.load %arg14[%c0_97, %c4_98, %c0_99] : memref<11x16x128xf32, #tpu.memory_space<vmem>>, vector<1x2x128xf32>
    %c1_100 = arith.constant 1 : index
    %c4_101 = arith.constant 4 : index
    %c0_102 = arith.constant 0 : index
    %100 = vector.load %arg14[%c1_100, %c4_101, %c0_102] : memref<11x16x128xf32, #tpu.memory_space<vmem>>, vector<1x2x128xf32>
    %101 = arith.maximumf %99, %100 : vector<1x2x128xf32>
    %102 = vector.extract_strided_slice %101 {offsets = [0, 0, 0], sizes = [1, 1, 128], strides = [1, 1, 1]} : vector<1x2x128xf32> to vector<1x1x128xf32>
    %103 = vector.shape_cast %102 : vector<1x1x128xf32> to vector<1x128xf32>
    %104 = vector.extract_strided_slice %101 {offsets = [0, 1, 0], sizes = [1, 1, 128], strides = [1, 1, 1]} : vector<1x2x128xf32> to vector<1x1x128xf32>
    %105 = vector.shape_cast %104 : vector<1x1x128xf32> to vector<1x128xf32>
    %106 = arith.maximumf %103, %105 : vector<1x128xf32>
    %c0_103 = arith.constant 0 : index
    %c0_104 = arith.constant 0 : index
    %107 = vector.load %arg5[%c0_103, %c0_104] : memref<1x128xf32, #tpu.memory_space<vmem>>, vector<1x128xf32>
    %108 = arith.addf %106, %107 : vector<1x128xf32>
    %cst_105 = arith.constant 0.000000e+00 : f32
    %109 = vector.broadcast %cst_105 : f32 to vector<1x128xf32>
    %110 = arith.maximumf %108, %109 : vector<1x128xf32>
    %c80_i32_106 = arith.constant 80 : i32
    %111 = tpu.dynamic_rotate %110 by %c80_i32_106 dim 1 : vector<1x128xf32>, i32 -> vector<1x128xf32>
    %112 = arith.addf %98, %111 : vector<1x128xf32>
    %c0_107 = arith.constant 0 : index
    %c6 = arith.constant 6 : index
    %c0_108 = arith.constant 0 : index
    %113 = vector.load %arg14[%c0_107, %c6, %c0_108] : memref<11x16x128xf32, #tpu.memory_space<vmem>>, vector<1x2x128xf32>
    %c1_109 = arith.constant 1 : index
    %c6_110 = arith.constant 6 : index
    %c0_111 = arith.constant 0 : index
    %114 = vector.load %arg14[%c1_109, %c6_110, %c0_111] : memref<11x16x128xf32, #tpu.memory_space<vmem>>, vector<1x2x128xf32>
    %115 = arith.maximumf %113, %114 : vector<1x2x128xf32>
    %116 = vector.extract_strided_slice %115 {offsets = [0, 0, 0], sizes = [1, 1, 128], strides = [1, 1, 1]} : vector<1x2x128xf32> to vector<1x1x128xf32>
    %117 = vector.shape_cast %116 : vector<1x1x128xf32> to vector<1x128xf32>
    %118 = vector.extract_strided_slice %115 {offsets = [0, 1, 0], sizes = [1, 1, 128], strides = [1, 1, 1]} : vector<1x2x128xf32> to vector<1x1x128xf32>
    %119 = vector.shape_cast %118 : vector<1x1x128xf32> to vector<1x128xf32>
    %120 = arith.maximumf %117, %119 : vector<1x128xf32>
    %c0_112 = arith.constant 0 : index
    %c0_113 = arith.constant 0 : index
    %121 = vector.load %arg5[%c0_112, %c0_113] : memref<1x128xf32, #tpu.memory_space<vmem>>, vector<1x128xf32>
    %122 = arith.addf %120, %121 : vector<1x128xf32>
    %cst_114 = arith.constant 0.000000e+00 : f32
    %123 = vector.broadcast %cst_114 : f32 to vector<1x128xf32>
    %124 = arith.maximumf %122, %123 : vector<1x128xf32>
    %c0_115 = arith.constant 0 : index
    %c8 = arith.constant 8 : index
    %c0_116 = arith.constant 0 : index
    %125 = vector.load %arg14[%c0_115, %c8, %c0_116] : memref<11x16x128xf32, #tpu.memory_space<vmem>>, vector<1x2x128xf32>
    %c1_117 = arith.constant 1 : index
    %c8_118 = arith.constant 8 : index
    %c0_119 = arith.constant 0 : index
    %126 = vector.load %arg14[%c1_117, %c8_118, %c0_119] : memref<11x16x128xf32, #tpu.memory_space<vmem>>, vector<1x2x128xf32>
    %127 = arith.maximumf %125, %126 : vector<1x2x128xf32>
    %128 = vector.extract_strided_slice %127 {offsets = [0, 0, 0], sizes = [1, 1, 128], strides = [1, 1, 1]} : vector<1x2x128xf32> to vector<1x1x128xf32>
    %129 = vector.shape_cast %128 : vector<1x1x128xf32> to vector<1x128xf32>
    %130 = vector.extract_strided_slice %127 {offsets = [0, 1, 0], sizes = [1, 1, 128], strides = [1, 1, 1]} : vector<1x2x128xf32> to vector<1x1x128xf32>
    %131 = vector.shape_cast %130 : vector<1x1x128xf32> to vector<1x128xf32>
    %132 = arith.maximumf %129, %131 : vector<1x128xf32>
    %c0_120 = arith.constant 0 : index
    %c0_121 = arith.constant 0 : index
    %133 = vector.load %arg5[%c0_120, %c0_121] : memref<1x128xf32, #tpu.memory_space<vmem>>, vector<1x128xf32>
    %134 = arith.addf %132, %133 : vector<1x128xf32>
    %cst_122 = arith.constant 0.000000e+00 : f32
    %135 = vector.broadcast %cst_122 : f32 to vector<1x128xf32>
    %136 = arith.maximumf %134, %135 : vector<1x128xf32>
    %c40_i32_123 = arith.constant 40 : i32
    %137 = tpu.dynamic_rotate %136 by %c40_i32_123 dim 1 : vector<1x128xf32>, i32 -> vector<1x128xf32>
    %138 = arith.addf %124, %137 : vector<1x128xf32>
    %c2_124 = arith.constant 2 : index
    %c0_125 = arith.constant 0 : index
    %c0_126 = arith.constant 0 : index
    %139 = vector.load %arg14[%c2_124, %c0_125, %c0_126] : memref<11x16x128xf32, #tpu.memory_space<vmem>>, vector<1x2x128xf32>
    %c3_127 = arith.constant 3 : index
    %c0_128 = arith.constant 0 : index
    %c0_129 = arith.constant 0 : index
    %140 = vector.load %arg14[%c3_127, %c0_128, %c0_129] : memref<11x16x128xf32, #tpu.memory_space<vmem>>, vector<1x2x128xf32>
    %141 = arith.maximumf %139, %140 : vector<1x2x128xf32>
    %142 = vector.extract_strided_slice %141 {offsets = [0, 0, 0], sizes = [1, 1, 128], strides = [1, 1, 1]} : vector<1x2x128xf32> to vector<1x1x128xf32>
    %143 = vector.shape_cast %142 : vector<1x1x128xf32> to vector<1x128xf32>
    %144 = vector.extract_strided_slice %141 {offsets = [0, 1, 0], sizes = [1, 1, 128], strides = [1, 1, 1]} : vector<1x2x128xf32> to vector<1x1x128xf32>
    %145 = vector.shape_cast %144 : vector<1x1x128xf32> to vector<1x128xf32>
    %146 = arith.maximumf %143, %145 : vector<1x128xf32>
    %c0_130 = arith.constant 0 : index
    %c0_131 = arith.constant 0 : index
    %147 = vector.load %arg5[%c0_130, %c0_131] : memref<1x128xf32, #tpu.memory_space<vmem>>, vector<1x128xf32>
    %148 = arith.addf %146, %147 : vector<1x128xf32>
    %cst_132 = arith.constant 0.000000e+00 : f32
    %149 = vector.broadcast %cst_132 : f32 to vector<1x128xf32>
    %150 = arith.maximumf %148, %149 : vector<1x128xf32>
    %c80_i32_133 = arith.constant 80 : i32
    %151 = tpu.dynamic_rotate %150 by %c80_i32_133 dim 1 : vector<1x128xf32>, i32 -> vector<1x128xf32>
    %152 = arith.addf %138, %151 : vector<1x128xf32>
    %c2_134 = arith.constant 2 : index
    %c2_135 = arith.constant 2 : index
    %c0_136 = arith.constant 0 : index
    %153 = vector.load %arg14[%c2_134, %c2_135, %c0_136] : memref<11x16x128xf32, #tpu.memory_space<vmem>>, vector<1x2x128xf32>
    %c3_137 = arith.constant 3 : index
    %c2_138 = arith.constant 2 : index
    %c0_139 = arith.constant 0 : index
    %154 = vector.load %arg14[%c3_137, %c2_138, %c0_139] : memref<11x16x128xf32, #tpu.memory_space<vmem>>, vector<1x2x128xf32>
    %155 = arith.maximumf %153, %154 : vector<1x2x128xf32>
    %156 = vector.extract_strided_slice %155 {offsets = [0, 0, 0], sizes = [1, 1, 128], strides = [1, 1, 1]} : vector<1x2x128xf32> to vector<1x1x128xf32>
    %157 = vector.shape_cast %156 : vector<1x1x128xf32> to vector<1x128xf32>
    %158 = vector.extract_strided_slice %155 {offsets = [0, 1, 0], sizes = [1, 1, 128], strides = [1, 1, 1]} : vector<1x2x128xf32> to vector<1x1x128xf32>
    %159 = vector.shape_cast %158 : vector<1x1x128xf32> to vector<1x128xf32>
    %160 = arith.maximumf %157, %159 : vector<1x128xf32>
    %c0_140 = arith.constant 0 : index
    %c0_141 = arith.constant 0 : index
    %161 = vector.load %arg5[%c0_140, %c0_141] : memref<1x128xf32, #tpu.memory_space<vmem>>, vector<1x128xf32>
    %162 = arith.addf %160, %161 : vector<1x128xf32>
    %cst_142 = arith.constant 0.000000e+00 : f32
    %163 = vector.broadcast %cst_142 : f32 to vector<1x128xf32>
    %164 = arith.maximumf %162, %163 : vector<1x128xf32>
    %c2_143 = arith.constant 2 : index
    %c4_144 = arith.constant 4 : index
    %c0_145 = arith.constant 0 : index
    %165 = vector.load %arg14[%c2_143, %c4_144, %c0_145] : memref<11x16x128xf32, #tpu.memory_space<vmem>>, vector<1x2x128xf32>
    %c3_146 = arith.constant 3 : index
    %c4_147 = arith.constant 4 : index
    %c0_148 = arith.constant 0 : index
    %166 = vector.load %arg14[%c3_146, %c4_147, %c0_148] : memref<11x16x128xf32, #tpu.memory_space<vmem>>, vector<1x2x128xf32>
    %167 = arith.maximumf %165, %166 : vector<1x2x128xf32>
    %168 = vector.extract_strided_slice %167 {offsets = [0, 0, 0], sizes = [1, 1, 128], strides = [1, 1, 1]} : vector<1x2x128xf32> to vector<1x1x128xf32>
    %169 = vector.shape_cast %168 : vector<1x1x128xf32> to vector<1x128xf32>
    %170 = vector.extract_strided_slice %167 {offsets = [0, 1, 0], sizes = [1, 1, 128], strides = [1, 1, 1]} : vector<1x2x128xf32> to vector<1x1x128xf32>
    %171 = vector.shape_cast %170 : vector<1x1x128xf32> to vector<1x128xf32>
    %172 = arith.maximumf %169, %171 : vector<1x128xf32>
    %c0_149 = arith.constant 0 : index
    %c0_150 = arith.constant 0 : index
    %173 = vector.load %arg5[%c0_149, %c0_150] : memref<1x128xf32, #tpu.memory_space<vmem>>, vector<1x128xf32>
    %174 = arith.addf %172, %173 : vector<1x128xf32>
    %cst_151 = arith.constant 0.000000e+00 : f32
    %175 = vector.broadcast %cst_151 : f32 to vector<1x128xf32>
    %176 = arith.maximumf %174, %175 : vector<1x128xf32>
    %c40_i32_152 = arith.constant 40 : i32
    %177 = tpu.dynamic_rotate %176 by %c40_i32_152 dim 1 : vector<1x128xf32>, i32 -> vector<1x128xf32>
    %178 = arith.addf %164, %177 : vector<1x128xf32>
    %c2_153 = arith.constant 2 : index
    %c6_154 = arith.constant 6 : index
    %c0_155 = arith.constant 0 : index
    %179 = vector.load %arg14[%c2_153, %c6_154, %c0_155] : memref<11x16x128xf32, #tpu.memory_space<vmem>>, vector<1x2x128xf32>
    %c3_156 = arith.constant 3 : index
    %c6_157 = arith.constant 6 : index
    %c0_158 = arith.constant 0 : index
    %180 = vector.load %arg14[%c3_156, %c6_157, %c0_158] : memref<11x16x128xf32, #tpu.memory_space<vmem>>, vector<1x2x128xf32>
    %181 = arith.maximumf %179, %180 : vector<1x2x128xf32>
    %182 = vector.extract_strided_slice %181 {offsets = [0, 0, 0], sizes = [1, 1, 128], strides = [1, 1, 1]} : vector<1x2x128xf32> to vector<1x1x128xf32>
    %183 = vector.shape_cast %182 : vector<1x1x128xf32> to vector<1x128xf32>
    %184 = vector.extract_strided_slice %181 {offsets = [0, 1, 0], sizes = [1, 1, 128], strides = [1, 1, 1]} : vector<1x2x128xf32> to vector<1x1x128xf32>
    %185 = vector.shape_cast %184 : vector<1x1x128xf32> to vector<1x128xf32>
    %186 = arith.maximumf %183, %185 : vector<1x128xf32>
    %c0_159 = arith.constant 0 : index
    %c0_160 = arith.constant 0 : index
    %187 = vector.load %arg5[%c0_159, %c0_160] : memref<1x128xf32, #tpu.memory_space<vmem>>, vector<1x128xf32>
    %188 = arith.addf %186, %187 : vector<1x128xf32>
    %cst_161 = arith.constant 0.000000e+00 : f32
    %189 = vector.broadcast %cst_161 : f32 to vector<1x128xf32>
    %190 = arith.maximumf %188, %189 : vector<1x128xf32>
    %c80_i32_162 = arith.constant 80 : i32
    %191 = tpu.dynamic_rotate %190 by %c80_i32_162 dim 1 : vector<1x128xf32>, i32 -> vector<1x128xf32>
    %192 = arith.addf %178, %191 : vector<1x128xf32>
    %c2_163 = arith.constant 2 : index
    %c8_164 = arith.constant 8 : index
    %c0_165 = arith.constant 0 : index
    %193 = vector.load %arg14[%c2_163, %c8_164, %c0_165] : memref<11x16x128xf32, #tpu.memory_space<vmem>>, vector<1x2x128xf32>
    %c3_166 = arith.constant 3 : index
    %c8_167 = arith.constant 8 : index
    %c0_168 = arith.constant 0 : index
    %194 = vector.load %arg14[%c3_166, %c8_167, %c0_168] : memref<11x16x128xf32, #tpu.memory_space<vmem>>, vector<1x2x128xf32>
    %195 = arith.maximumf %193, %194 : vector<1x2x128xf32>
    %196 = vector.extract_strided_slice %195 {offsets = [0, 0, 0], sizes = [1, 1, 128], strides = [1, 1, 1]} : vector<1x2x128xf32> to vector<1x1x128xf32>
    %197 = vector.shape_cast %196 : vector<1x1x128xf32> to vector<1x128xf32>
    %198 = vector.extract_strided_slice %195 {offsets = [0, 1, 0], sizes = [1, 1, 128], strides = [1, 1, 1]} : vector<1x2x128xf32> to vector<1x1x128xf32>
    %199 = vector.shape_cast %198 : vector<1x1x128xf32> to vector<1x128xf32>
    %200 = arith.maximumf %197, %199 : vector<1x128xf32>
    %c0_169 = arith.constant 0 : index
    %c0_170 = arith.constant 0 : index
    %201 = vector.load %arg5[%c0_169, %c0_170] : memref<1x128xf32, #tpu.memory_space<vmem>>, vector<1x128xf32>
    %202 = arith.addf %200, %201 : vector<1x128xf32>
    %cst_171 = arith.constant 0.000000e+00 : f32
    %203 = vector.broadcast %cst_171 : f32 to vector<1x128xf32>
    %204 = arith.maximumf %202, %203 : vector<1x128xf32>
    %c4_172 = arith.constant 4 : index
    %c0_173 = arith.constant 0 : index
    %c0_174 = arith.constant 0 : index
    %205 = vector.load %arg14[%c4_172, %c0_173, %c0_174] : memref<11x16x128xf32, #tpu.memory_space<vmem>>, vector<1x2x128xf32>
    %c5_175 = arith.constant 5 : index
    %c0_176 = arith.constant 0 : index
    %c0_177 = arith.constant 0 : index
    %206 = vector.load %arg14[%c5_175, %c0_176, %c0_177] : memref<11x16x128xf32, #tpu.memory_space<vmem>>, vector<1x2x128xf32>
    %207 = arith.maximumf %205, %206 : vector<1x2x128xf32>
    %208 = vector.extract_strided_slice %207 {offsets = [0, 0, 0], sizes = [1, 1, 128], strides = [1, 1, 1]} : vector<1x2x128xf32> to vector<1x1x128xf32>
    %209 = vector.shape_cast %208 : vector<1x1x128xf32> to vector<1x128xf32>
    %210 = vector.extract_strided_slice %207 {offsets = [0, 1, 0], sizes = [1, 1, 128], strides = [1, 1, 1]} : vector<1x2x128xf32> to vector<1x1x128xf32>
    %211 = vector.shape_cast %210 : vector<1x1x128xf32> to vector<1x128xf32>
    %212 = arith.maximumf %209, %211 : vector<1x128xf32>
    %c0_178 = arith.constant 0 : index
    %c0_179 = arith.constant 0 : index
    %213 = vector.load %arg5[%c0_178, %c0_179] : memref<1x128xf32, #tpu.memory_space<vmem>>, vector<1x128xf32>
    %214 = arith.addf %212, %213 : vector<1x128xf32>
    %cst_180 = arith.constant 0.000000e+00 : f32
    %215 = vector.broadcast %cst_180 : f32 to vector<1x128xf32>
    %216 = arith.maximumf %214, %215 : vector<1x128xf32>
    %c40_i32_181 = arith.constant 40 : i32
    %217 = tpu.dynamic_rotate %216 by %c40_i32_181 dim 1 : vector<1x128xf32>, i32 -> vector<1x128xf32>
    %218 = arith.addf %204, %217 : vector<1x128xf32>
    %c4_182 = arith.constant 4 : index
    %c2_183 = arith.constant 2 : index
    %c0_184 = arith.constant 0 : index
    %219 = vector.load %arg14[%c4_182, %c2_183, %c0_184] : memref<11x16x128xf32, #tpu.memory_space<vmem>>, vector<1x2x128xf32>
    %c5_185 = arith.constant 5 : index
    %c2_186 = arith.constant 2 : index
    %c0_187 = arith.constant 0 : index
    %220 = vector.load %arg14[%c5_185, %c2_186, %c0_187] : memref<11x16x128xf32, #tpu.memory_space<vmem>>, vector<1x2x128xf32>
    %221 = arith.maximumf %219, %220 : vector<1x2x128xf32>
    %222 = vector.extract_strided_slice %221 {offsets = [0, 0, 0], sizes = [1, 1, 128], strides = [1, 1, 1]} : vector<1x2x128xf32> to vector<1x1x128xf32>
    %223 = vector.shape_cast %222 : vector<1x1x128xf32> to vector<1x128xf32>
    %224 = vector.extract_strided_slice %221 {offsets = [0, 1, 0], sizes = [1, 1, 128], strides = [1, 1, 1]} : vector<1x2x128xf32> to vector<1x1x128xf32>
    %225 = vector.shape_cast %224 : vector<1x1x128xf32> to vector<1x128xf32>
    %226 = arith.maximumf %223, %225 : vector<1x128xf32>
    %c0_188 = arith.constant 0 : index
    %c0_189 = arith.constant 0 : index
    %227 = vector.load %arg5[%c0_188, %c0_189] : memref<1x128xf32, #tpu.memory_space<vmem>>, vector<1x128xf32>
    %228 = arith.addf %226, %227 : vector<1x128xf32>
    %cst_190 = arith.constant 0.000000e+00 : f32
    %229 = vector.broadcast %cst_190 : f32 to vector<1x128xf32>
    %230 = arith.maximumf %228, %229 : vector<1x128xf32>
    %c80_i32_191 = arith.constant 80 : i32
    %231 = tpu.dynamic_rotate %230 by %c80_i32_191 dim 1 : vector<1x128xf32>, i32 -> vector<1x128xf32>
    %232 = arith.addf %218, %231 : vector<1x128xf32>
    %c4_192 = arith.constant 4 : index
    %c4_193 = arith.constant 4 : index
    %c0_194 = arith.constant 0 : index
    %233 = vector.load %arg14[%c4_192, %c4_193, %c0_194] : memref<11x16x128xf32, #tpu.memory_space<vmem>>, vector<1x2x128xf32>
    %c5_195 = arith.constant 5 : index
    %c4_196 = arith.constant 4 : index
    %c0_197 = arith.constant 0 : index
    %234 = vector.load %arg14[%c5_195, %c4_196, %c0_197] : memref<11x16x128xf32, #tpu.memory_space<vmem>>, vector<1x2x128xf32>
    %235 = arith.maximumf %233, %234 : vector<1x2x128xf32>
    %236 = vector.extract_strided_slice %235 {offsets = [0, 0, 0], sizes = [1, 1, 128], strides = [1, 1, 1]} : vector<1x2x128xf32> to vector<1x1x128xf32>
    %237 = vector.shape_cast %236 : vector<1x1x128xf32> to vector<1x128xf32>
    %238 = vector.extract_strided_slice %235 {offsets = [0, 1, 0], sizes = [1, 1, 128], strides = [1, 1, 1]} : vector<1x2x128xf32> to vector<1x1x128xf32>
    %239 = vector.shape_cast %238 : vector<1x1x128xf32> to vector<1x128xf32>
    %240 = arith.maximumf %237, %239 : vector<1x128xf32>
    %c0_198 = arith.constant 0 : index
    %c0_199 = arith.constant 0 : index
    %241 = vector.load %arg5[%c0_198, %c0_199] : memref<1x128xf32, #tpu.memory_space<vmem>>, vector<1x128xf32>
    %242 = arith.addf %240, %241 : vector<1x128xf32>
    %cst_200 = arith.constant 0.000000e+00 : f32
    %243 = vector.broadcast %cst_200 : f32 to vector<1x128xf32>
    %244 = arith.maximumf %242, %243 : vector<1x128xf32>
    %c4_201 = arith.constant 4 : index
    %c6_202 = arith.constant 6 : index
    %c0_203 = arith.constant 0 : index
    %245 = vector.load %arg14[%c4_201, %c6_202, %c0_203] : memref<11x16x128xf32, #tpu.memory_space<vmem>>, vector<1x2x128xf32>
    %c5_204 = arith.constant 5 : index
    %c6_205 = arith.constant 6 : index
    %c0_206 = arith.constant 0 : index
    %246 = vector.load %arg14[%c5_204, %c6_205, %c0_206] : memref<11x16x128xf32, #tpu.memory_space<vmem>>, vector<1x2x128xf32>
    %247 = arith.maximumf %245, %246 : vector<1x2x128xf32>
    %248 = vector.extract_strided_slice %247 {offsets = [0, 0, 0], sizes = [1, 1, 128], strides = [1, 1, 1]} : vector<1x2x128xf32> to vector<1x1x128xf32>
    %249 = vector.shape_cast %248 : vector<1x1x128xf32> to vector<1x128xf32>
    %250 = vector.extract_strided_slice %247 {offsets = [0, 1, 0], sizes = [1, 1, 128], strides = [1, 1, 1]} : vector<1x2x128xf32> to vector<1x1x128xf32>
    %251 = vector.shape_cast %250 : vector<1x1x128xf32> to vector<1x128xf32>
    %252 = arith.maximumf %249, %251 : vector<1x128xf32>
    %c0_207 = arith.constant 0 : index
    %c0_208 = arith.constant 0 : index
    %253 = vector.load %arg5[%c0_207, %c0_208] : memref<1x128xf32, #tpu.memory_space<vmem>>, vector<1x128xf32>
    %254 = arith.addf %252, %253 : vector<1x128xf32>
    %cst_209 = arith.constant 0.000000e+00 : f32
    %255 = vector.broadcast %cst_209 : f32 to vector<1x128xf32>
    %256 = arith.maximumf %254, %255 : vector<1x128xf32>
    %c40_i32_210 = arith.constant 40 : i32
    %257 = tpu.dynamic_rotate %256 by %c40_i32_210 dim 1 : vector<1x128xf32>, i32 -> vector<1x128xf32>
    %258 = arith.addf %244, %257 : vector<1x128xf32>
    %c4_211 = arith.constant 4 : index
    %c8_212 = arith.constant 8 : index
    %c0_213 = arith.constant 0 : index
    %259 = vector.load %arg14[%c4_211, %c8_212, %c0_213] : memref<11x16x128xf32, #tpu.memory_space<vmem>>, vector<1x2x128xf32>
    %c5_214 = arith.constant 5 : index
    %c8_215 = arith.constant 8 : index
    %c0_216 = arith.constant 0 : index
    %260 = vector.load %arg14[%c5_214, %c8_215, %c0_216] : memref<11x16x128xf32, #tpu.memory_space<vmem>>, vector<1x2x128xf32>
    %261 = arith.maximumf %259, %260 : vector<1x2x128xf32>
    %262 = vector.extract_strided_slice %261 {offsets = [0, 0, 0], sizes = [1, 1, 128], strides = [1, 1, 1]} : vector<1x2x128xf32> to vector<1x1x128xf32>
    %263 = vector.shape_cast %262 : vector<1x1x128xf32> to vector<1x128xf32>
    %264 = vector.extract_strided_slice %261 {offsets = [0, 1, 0], sizes = [1, 1, 128], strides = [1, 1, 1]} : vector<1x2x128xf32> to vector<1x1x128xf32>
    %265 = vector.shape_cast %264 : vector<1x1x128xf32> to vector<1x128xf32>
    %266 = arith.maximumf %263, %265 : vector<1x128xf32>
    %c0_217 = arith.constant 0 : index
    %c0_218 = arith.constant 0 : index
    %267 = vector.load %arg5[%c0_217, %c0_218] : memref<1x128xf32, #tpu.memory_space<vmem>>, vector<1x128xf32>
    %268 = arith.addf %266, %267 : vector<1x128xf32>
    %cst_219 = arith.constant 0.000000e+00 : f32
    %269 = vector.broadcast %cst_219 : f32 to vector<1x128xf32>
    %270 = arith.maximumf %268, %269 : vector<1x128xf32>
    %c80_i32_220 = arith.constant 80 : i32
    %271 = tpu.dynamic_rotate %270 by %c80_i32_220 dim 1 : vector<1x128xf32>, i32 -> vector<1x128xf32>
    %272 = arith.addf %258, %271 : vector<1x128xf32>
    %c6_221 = arith.constant 6 : index
    %c0_222 = arith.constant 0 : index
    %c0_223 = arith.constant 0 : index
    %273 = vector.load %arg14[%c6_221, %c0_222, %c0_223] : memref<11x16x128xf32, #tpu.memory_space<vmem>>, vector<1x2x128xf32>
    %c7 = arith.constant 7 : index
    %c0_224 = arith.constant 0 : index
    %c0_225 = arith.constant 0 : index
    %274 = vector.load %arg14[%c7, %c0_224, %c0_225] : memref<11x16x128xf32, #tpu.memory_space<vmem>>, vector<1x2x128xf32>
    %275 = arith.maximumf %273, %274 : vector<1x2x128xf32>
    %276 = vector.extract_strided_slice %275 {offsets = [0, 0, 0], sizes = [1, 1, 128], strides = [1, 1, 1]} : vector<1x2x128xf32> to vector<1x1x128xf32>
    %277 = vector.shape_cast %276 : vector<1x1x128xf32> to vector<1x128xf32>
    %278 = vector.extract_strided_slice %275 {offsets = [0, 1, 0], sizes = [1, 1, 128], strides = [1, 1, 1]} : vector<1x2x128xf32> to vector<1x1x128xf32>
    %279 = vector.shape_cast %278 : vector<1x1x128xf32> to vector<1x128xf32>
    %280 = arith.maximumf %277, %279 : vector<1x128xf32>
    %c0_226 = arith.constant 0 : index
    %c0_227 = arith.constant 0 : index
    %281 = vector.load %arg5[%c0_226, %c0_227] : memref<1x128xf32, #tpu.memory_space<vmem>>, vector<1x128xf32>
    %282 = arith.addf %280, %281 : vector<1x128xf32>
    %cst_228 = arith.constant 0.000000e+00 : f32
    %283 = vector.broadcast %cst_228 : f32 to vector<1x128xf32>
    %284 = arith.maximumf %282, %283 : vector<1x128xf32>
    %c6_229 = arith.constant 6 : index
    %c2_230 = arith.constant 2 : index
    %c0_231 = arith.constant 0 : index
    %285 = vector.load %arg14[%c6_229, %c2_230, %c0_231] : memref<11x16x128xf32, #tpu.memory_space<vmem>>, vector<1x2x128xf32>
    %c7_232 = arith.constant 7 : index
    %c2_233 = arith.constant 2 : index
    %c0_234 = arith.constant 0 : index
    %286 = vector.load %arg14[%c7_232, %c2_233, %c0_234] : memref<11x16x128xf32, #tpu.memory_space<vmem>>, vector<1x2x128xf32>
    %287 = arith.maximumf %285, %286 : vector<1x2x128xf32>
    %288 = vector.extract_strided_slice %287 {offsets = [0, 0, 0], sizes = [1, 1, 128], strides = [1, 1, 1]} : vector<1x2x128xf32> to vector<1x1x128xf32>
    %289 = vector.shape_cast %288 : vector<1x1x128xf32> to vector<1x128xf32>
    %290 = vector.extract_strided_slice %287 {offsets = [0, 1, 0], sizes = [1, 1, 128], strides = [1, 1, 1]} : vector<1x2x128xf32> to vector<1x1x128xf32>
    %291 = vector.shape_cast %290 : vector<1x1x128xf32> to vector<1x128xf32>
    %292 = arith.maximumf %289, %291 : vector<1x128xf32>
    %c0_235 = arith.constant 0 : index
    %c0_236 = arith.constant 0 : index
    %293 = vector.load %arg5[%c0_235, %c0_236] : memref<1x128xf32, #tpu.memory_space<vmem>>, vector<1x128xf32>
    %294 = arith.addf %292, %293 : vector<1x128xf32>
    %cst_237 = arith.constant 0.000000e+00 : f32
    %295 = vector.broadcast %cst_237 : f32 to vector<1x128xf32>
    %296 = arith.maximumf %294, %295 : vector<1x128xf32>
    %c40_i32_238 = arith.constant 40 : i32
    %297 = tpu.dynamic_rotate %296 by %c40_i32_238 dim 1 : vector<1x128xf32>, i32 -> vector<1x128xf32>
    %298 = arith.addf %284, %297 : vector<1x128xf32>
    %c6_239 = arith.constant 6 : index
    %c4_240 = arith.constant 4 : index
    %c0_241 = arith.constant 0 : index
    %299 = vector.load %arg14[%c6_239, %c4_240, %c0_241] : memref<11x16x128xf32, #tpu.memory_space<vmem>>, vector<1x2x128xf32>
    %c7_242 = arith.constant 7 : index
    %c4_243 = arith.constant 4 : index
    %c0_244 = arith.constant 0 : index
    %300 = vector.load %arg14[%c7_242, %c4_243, %c0_244] : memref<11x16x128xf32, #tpu.memory_space<vmem>>, vector<1x2x128xf32>
    %301 = arith.maximumf %299, %300 : vector<1x2x128xf32>
    %302 = vector.extract_strided_slice %301 {offsets = [0, 0, 0], sizes = [1, 1, 128], strides = [1, 1, 1]} : vector<1x2x128xf32> to vector<1x1x128xf32>
    %303 = vector.shape_cast %302 : vector<1x1x128xf32> to vector<1x128xf32>
    %304 = vector.extract_strided_slice %301 {offsets = [0, 1, 0], sizes = [1, 1, 128], strides = [1, 1, 1]} : vector<1x2x128xf32> to vector<1x1x128xf32>
    %305 = vector.shape_cast %304 : vector<1x1x128xf32> to vector<1x128xf32>
    %306 = arith.maximumf %303, %305 : vector<1x128xf32>
    %c0_245 = arith.constant 0 : index
    %c0_246 = arith.constant 0 : index
    %307 = vector.load %arg5[%c0_245, %c0_246] : memref<1x128xf32, #tpu.memory_space<vmem>>, vector<1x128xf32>
    %308 = arith.addf %306, %307 : vector<1x128xf32>
    %cst_247 = arith.constant 0.000000e+00 : f32
    %309 = vector.broadcast %cst_247 : f32 to vector<1x128xf32>
    %310 = arith.maximumf %308, %309 : vector<1x128xf32>
    %c80_i32_248 = arith.constant 80 : i32
    %311 = tpu.dynamic_rotate %310 by %c80_i32_248 dim 1 : vector<1x128xf32>, i32 -> vector<1x128xf32>
    %312 = arith.addf %298, %311 : vector<1x128xf32>
    %c6_249 = arith.constant 6 : index
    %c6_250 = arith.constant 6 : index
    %c0_251 = arith.constant 0 : index
    %313 = vector.load %arg14[%c6_249, %c6_250, %c0_251] : memref<11x16x128xf32, #tpu.memory_space<vmem>>, vector<1x2x128xf32>
    %c7_252 = arith.constant 7 : index
    %c6_253 = arith.constant 6 : index
    %c0_254 = arith.constant 0 : index
    %314 = vector.load %arg14[%c7_252, %c6_253, %c0_254] : memref<11x16x128xf32, #tpu.memory_space<vmem>>, vector<1x2x128xf32>
    %315 = arith.maximumf %313, %314 : vector<1x2x128xf32>
    %316 = vector.extract_strided_slice %315 {offsets = [0, 0, 0], sizes = [1, 1, 128], strides = [1, 1, 1]} : vector<1x2x128xf32> to vector<1x1x128xf32>
    %317 = vector.shape_cast %316 : vector<1x1x128xf32> to vector<1x128xf32>
    %318 = vector.extract_strided_slice %315 {offsets = [0, 1, 0], sizes = [1, 1, 128], strides = [1, 1, 1]} : vector<1x2x128xf32> to vector<1x1x128xf32>
    %319 = vector.shape_cast %318 : vector<1x1x128xf32> to vector<1x128xf32>
    %320 = arith.maximumf %317, %319 : vector<1x128xf32>
    %c0_255 = arith.constant 0 : index
    %c0_256 = arith.constant 0 : index
    %321 = vector.load %arg5[%c0_255, %c0_256] : memref<1x128xf32, #tpu.memory_space<vmem>>, vector<1x128xf32>
    %322 = arith.addf %320, %321 : vector<1x128xf32>
    %cst_257 = arith.constant 0.000000e+00 : f32
    %323 = vector.broadcast %cst_257 : f32 to vector<1x128xf32>
    %324 = arith.maximumf %322, %323 : vector<1x128xf32>
    %c6_258 = arith.constant 6 : index
    %c8_259 = arith.constant 8 : index
    %c0_260 = arith.constant 0 : index
    %325 = vector.load %arg14[%c6_258, %c8_259, %c0_260] : memref<11x16x128xf32, #tpu.memory_space<vmem>>, vector<1x2x128xf32>
    %c7_261 = arith.constant 7 : index
    %c8_262 = arith.constant 8 : index
    %c0_263 = arith.constant 0 : index
    %326 = vector.load %arg14[%c7_261, %c8_262, %c0_263] : memref<11x16x128xf32, #tpu.memory_space<vmem>>, vector<1x2x128xf32>
    %327 = arith.maximumf %325, %326 : vector<1x2x128xf32>
    %328 = vector.extract_strided_slice %327 {offsets = [0, 0, 0], sizes = [1, 1, 128], strides = [1, 1, 1]} : vector<1x2x128xf32> to vector<1x1x128xf32>
    %329 = vector.shape_cast %328 : vector<1x1x128xf32> to vector<1x128xf32>
    %330 = vector.extract_strided_slice %327 {offsets = [0, 1, 0], sizes = [1, 1, 128], strides = [1, 1, 1]} : vector<1x2x128xf32> to vector<1x1x128xf32>
    %331 = vector.shape_cast %330 : vector<1x1x128xf32> to vector<1x128xf32>
    %332 = arith.maximumf %329, %331 : vector<1x128xf32>
    %c0_264 = arith.constant 0 : index
    %c0_265 = arith.constant 0 : index
    %333 = vector.load %arg5[%c0_264, %c0_265] : memref<1x128xf32, #tpu.memory_space<vmem>>, vector<1x128xf32>
    %334 = arith.addf %332, %333 : vector<1x128xf32>
    %cst_266 = arith.constant 0.000000e+00 : f32
    %335 = vector.broadcast %cst_266 : f32 to vector<1x128xf32>
    %336 = arith.maximumf %334, %335 : vector<1x128xf32>
    %c40_i32_267 = arith.constant 40 : i32
    %337 = tpu.dynamic_rotate %336 by %c40_i32_267 dim 1 : vector<1x128xf32>, i32 -> vector<1x128xf32>
    %338 = arith.addf %324, %337 : vector<1x128xf32>
    %c8_268 = arith.constant 8 : index
    %c0_269 = arith.constant 0 : index
    %c0_270 = arith.constant 0 : index
    %339 = vector.load %arg14[%c8_268, %c0_269, %c0_270] : memref<11x16x128xf32, #tpu.memory_space<vmem>>, vector<1x2x128xf32>
    %c9 = arith.constant 9 : index
    %c0_271 = arith.constant 0 : index
    %c0_272 = arith.constant 0 : index
    %340 = vector.load %arg14[%c9, %c0_271, %c0_272] : memref<11x16x128xf32, #tpu.memory_space<vmem>>, vector<1x2x128xf32>
    %341 = arith.maximumf %339, %340 : vector<1x2x128xf32>
    %342 = vector.extract_strided_slice %341 {offsets = [0, 0, 0], sizes = [1, 1, 128], strides = [1, 1, 1]} : vector<1x2x128xf32> to vector<1x1x128xf32>
    %343 = vector.shape_cast %342 : vector<1x1x128xf32> to vector<1x128xf32>
    %344 = vector.extract_strided_slice %341 {offsets = [0, 1, 0], sizes = [1, 1, 128], strides = [1, 1, 1]} : vector<1x2x128xf32> to vector<1x1x128xf32>
    %345 = vector.shape_cast %344 : vector<1x1x128xf32> to vector<1x128xf32>
    %346 = arith.maximumf %343, %345 : vector<1x128xf32>
    %c0_273 = arith.constant 0 : index
    %c0_274 = arith.constant 0 : index
    %347 = vector.load %arg5[%c0_273, %c0_274] : memref<1x128xf32, #tpu.memory_space<vmem>>, vector<1x128xf32>
    %348 = arith.addf %346, %347 : vector<1x128xf32>
    %cst_275 = arith.constant 0.000000e+00 : f32
    %349 = vector.broadcast %cst_275 : f32 to vector<1x128xf32>
    %350 = arith.maximumf %348, %349 : vector<1x128xf32>
    %c80_i32_276 = arith.constant 80 : i32
    %351 = tpu.dynamic_rotate %350 by %c80_i32_276 dim 1 : vector<1x128xf32>, i32 -> vector<1x128xf32>
    %352 = arith.addf %338, %351 : vector<1x128xf32>
    %c8_277 = arith.constant 8 : index
    %c2_278 = arith.constant 2 : index
    %c0_279 = arith.constant 0 : index
    %353 = vector.load %arg14[%c8_277, %c2_278, %c0_279] : memref<11x16x128xf32, #tpu.memory_space<vmem>>, vector<1x2x128xf32>
    %c9_280 = arith.constant 9 : index
    %c2_281 = arith.constant 2 : index
    %c0_282 = arith.constant 0 : index
    %354 = vector.load %arg14[%c9_280, %c2_281, %c0_282] : memref<11x16x128xf32, #tpu.memory_space<vmem>>, vector<1x2x128xf32>
    %355 = arith.maximumf %353, %354 : vector<1x2x128xf32>
    %356 = vector.extract_strided_slice %355 {offsets = [0, 0, 0], sizes = [1, 1, 128], strides = [1, 1, 1]} : vector<1x2x128xf32> to vector<1x1x128xf32>
    %357 = vector.shape_cast %356 : vector<1x1x128xf32> to vector<1x128xf32>
    %358 = vector.extract_strided_slice %355 {offsets = [0, 1, 0], sizes = [1, 1, 128], strides = [1, 1, 1]} : vector<1x2x128xf32> to vector<1x1x128xf32>
    %359 = vector.shape_cast %358 : vector<1x1x128xf32> to vector<1x128xf32>
    %360 = arith.maximumf %357, %359 : vector<1x128xf32>
    %c0_283 = arith.constant 0 : index
    %c0_284 = arith.constant 0 : index
    %361 = vector.load %arg5[%c0_283, %c0_284] : memref<1x128xf32, #tpu.memory_space<vmem>>, vector<1x128xf32>
    %362 = arith.addf %360, %361 : vector<1x128xf32>
    %cst_285 = arith.constant 0.000000e+00 : f32
    %363 = vector.broadcast %cst_285 : f32 to vector<1x128xf32>
    %364 = arith.maximumf %362, %363 : vector<1x128xf32>
    %c8_286 = arith.constant 8 : index
    %c4_287 = arith.constant 4 : index
    %c0_288 = arith.constant 0 : index
    %365 = vector.load %arg14[%c8_286, %c4_287, %c0_288] : memref<11x16x128xf32, #tpu.memory_space<vmem>>, vector<1x2x128xf32>
    %c9_289 = arith.constant 9 : index
    %c4_290 = arith.constant 4 : index
    %c0_291 = arith.constant 0 : index
    %366 = vector.load %arg14[%c9_289, %c4_290, %c0_291] : memref<11x16x128xf32, #tpu.memory_space<vmem>>, vector<1x2x128xf32>
    %367 = arith.maximumf %365, %366 : vector<1x2x128xf32>
    %368 = vector.extract_strided_slice %367 {offsets = [0, 0, 0], sizes = [1, 1, 128], strides = [1, 1, 1]} : vector<1x2x128xf32> to vector<1x1x128xf32>
    %369 = vector.shape_cast %368 : vector<1x1x128xf32> to vector<1x128xf32>
    %370 = vector.extract_strided_slice %367 {offsets = [0, 1, 0], sizes = [1, 1, 128], strides = [1, 1, 1]} : vector<1x2x128xf32> to vector<1x1x128xf32>
    %371 = vector.shape_cast %370 : vector<1x1x128xf32> to vector<1x128xf32>
    %372 = arith.maximumf %369, %371 : vector<1x128xf32>
    %c0_292 = arith.constant 0 : index
    %c0_293 = arith.constant 0 : index
    %373 = vector.load %arg5[%c0_292, %c0_293] : memref<1x128xf32, #tpu.memory_space<vmem>>, vector<1x128xf32>
    %374 = arith.addf %372, %373 : vector<1x128xf32>
    %cst_294 = arith.constant 0.000000e+00 : f32
    %375 = vector.broadcast %cst_294 : f32 to vector<1x128xf32>
    %376 = arith.maximumf %374, %375 : vector<1x128xf32>
    %c40_i32_295 = arith.constant 40 : i32
    %377 = tpu.dynamic_rotate %376 by %c40_i32_295 dim 1 : vector<1x128xf32>, i32 -> vector<1x128xf32>
    %378 = arith.addf %364, %377 : vector<1x128xf32>
    %c8_296 = arith.constant 8 : index
    %c6_297 = arith.constant 6 : index
    %c0_298 = arith.constant 0 : index
    %379 = vector.load %arg14[%c8_296, %c6_297, %c0_298] : memref<11x16x128xf32, #tpu.memory_space<vmem>>, vector<1x2x128xf32>
    %c9_299 = arith.constant 9 : index
    %c6_300 = arith.constant 6 : index
    %c0_301 = arith.constant 0 : index
    %380 = vector.load %arg14[%c9_299, %c6_300, %c0_301] : memref<11x16x128xf32, #tpu.memory_space<vmem>>, vector<1x2x128xf32>
    %381 = arith.maximumf %379, %380 : vector<1x2x128xf32>
    %382 = vector.extract_strided_slice %381 {offsets = [0, 0, 0], sizes = [1, 1, 128], strides = [1, 1, 1]} : vector<1x2x128xf32> to vector<1x1x128xf32>
    %383 = vector.shape_cast %382 : vector<1x1x128xf32> to vector<1x128xf32>
    %384 = vector.extract_strided_slice %381 {offsets = [0, 1, 0], sizes = [1, 1, 128], strides = [1, 1, 1]} : vector<1x2x128xf32> to vector<1x1x128xf32>
    %385 = vector.shape_cast %384 : vector<1x1x128xf32> to vector<1x128xf32>
    %386 = arith.maximumf %383, %385 : vector<1x128xf32>
    %c0_302 = arith.constant 0 : index
    %c0_303 = arith.constant 0 : index
    %387 = vector.load %arg5[%c0_302, %c0_303] : memref<1x128xf32, #tpu.memory_space<vmem>>, vector<1x128xf32>
    %388 = arith.addf %386, %387 : vector<1x128xf32>
    %cst_304 = arith.constant 0.000000e+00 : f32
    %389 = vector.broadcast %cst_304 : f32 to vector<1x128xf32>
    %390 = arith.maximumf %388, %389 : vector<1x128xf32>
    %c80_i32_305 = arith.constant 80 : i32
    %391 = tpu.dynamic_rotate %390 by %c80_i32_305 dim 1 : vector<1x128xf32>, i32 -> vector<1x128xf32>
    %392 = arith.addf %378, %391 : vector<1x128xf32>
    %c8_306 = arith.constant 8 : index
    %c8_307 = arith.constant 8 : index
    %c0_308 = arith.constant 0 : index
    %393 = vector.load %arg14[%c8_306, %c8_307, %c0_308] : memref<11x16x128xf32, #tpu.memory_space<vmem>>, vector<1x2x128xf32>
    %c9_309 = arith.constant 9 : index
    %c8_310 = arith.constant 8 : index
    %c0_311 = arith.constant 0 : index
    %394 = vector.load %arg14[%c9_309, %c8_310, %c0_311] : memref<11x16x128xf32, #tpu.memory_space<vmem>>, vector<1x2x128xf32>
    %395 = arith.maximumf %393, %394 : vector<1x2x128xf32>
    %396 = vector.extract_strided_slice %395 {offsets = [0, 0, 0], sizes = [1, 1, 128], strides = [1, 1, 1]} : vector<1x2x128xf32> to vector<1x1x128xf32>
    %397 = vector.shape_cast %396 : vector<1x1x128xf32> to vector<1x128xf32>
    %398 = vector.extract_strided_slice %395 {offsets = [0, 1, 0], sizes = [1, 1, 128], strides = [1, 1, 1]} : vector<1x2x128xf32> to vector<1x1x128xf32>
    %399 = vector.shape_cast %398 : vector<1x1x128xf32> to vector<1x128xf32>
    %400 = arith.maximumf %397, %399 : vector<1x128xf32>
    %c0_312 = arith.constant 0 : index
    %c0_313 = arith.constant 0 : index
    %401 = vector.load %arg5[%c0_312, %c0_313] : memref<1x128xf32, #tpu.memory_space<vmem>>, vector<1x128xf32>
    %402 = arith.addf %400, %401 : vector<1x128xf32>
    %cst_314 = arith.constant 0.000000e+00 : f32
    %403 = vector.broadcast %cst_314 : f32 to vector<1x128xf32>
    %404 = arith.maximumf %402, %403 : vector<1x128xf32>
    %405 = tpu.concatenate %112, %152, %192, %232, %272, %312, %352, %392, %404 in 1 : vector<1x128xf32>, vector<1x128xf32>, vector<1x128xf32>, vector<1x128xf32>, vector<1x128xf32>, vector<1x128xf32>, vector<1x128xf32>, vector<1x128xf32>, vector<1x128xf32> -> vector<1x1152xf32>
    %c0_315 = arith.constant 0 : index
    %c0_316 = arith.constant 0 : index
    %406 = vector.load %arg6[%c0_315, %c0_316] : memref<1152x40xf32, #tpu.memory_space<vmem>>, vector<1152x40xf32>
    %cst_317 = arith.constant dense<0.000000e+00> : vector<1x40xf32>
    %407 = tpu.matmul %405, %406, %cst_317 {dimension_numbers = #tpu.dot_dimension_numbers<[1], [0], [0], [1], [0, 0, 1, 1], [], []>} : vector<1x1152xf32>, vector<1152x40xf32>, vector<1x40xf32> -> vector<1x40xf32>
    %c0_318 = arith.constant 0 : index
    %c0_319 = arith.constant 0 : index
    %408 = vector.load %arg7[%c0_318, %c0_319] : memref<1x40xf32, #tpu.memory_space<vmem>>, vector<1x40xf32>
    %409 = arith.addf %407, %408 : vector<1x40xf32>
    %cst_320 = arith.constant 0.000000e+00 : f32
    %410 = vector.broadcast %cst_320 : f32 to vector<1x40xf32>
    %411 = arith.maximumf %409, %410 : vector<1x40xf32>
    %c0_321 = arith.constant 0 : index
    %c0_322 = arith.constant 0 : index
    %412 = vector.load %arg8[%c0_321, %c0_322] : memref<40x10xf32, #tpu.memory_space<vmem>>, vector<40x10xf32>
    %cst_323 = arith.constant dense<0.000000e+00> : vector<1x10xf32>
    %413 = tpu.matmul %411, %412, %cst_323 {dimension_numbers = #tpu.dot_dimension_numbers<[1], [0], [0], [1], [0, 0, 1, 1], [], []>} : vector<1x40xf32>, vector<40x10xf32>, vector<1x10xf32> -> vector<1x10xf32>
    %c0_324 = arith.constant 0 : index
    %c0_325 = arith.constant 0 : index
    %414 = vector.load %arg9[%c0_324, %c0_325] : memref<1x10xf32, #tpu.memory_space<vmem>>, vector<1x10xf32>
    %415 = arith.addf %413, %414 : vector<1x10xf32>
    %416 = vector.shape_cast %415 : vector<1x10xf32> to vector<1x1x10xf32>
    %c0_326 = arith.constant 0 : index
    %c0_327 = arith.constant 0 : index
    %c0_328 = arith.constant 0 : index
    %417 = vector.load %arg10[%c0_326, %c0_327, %c0_328] : memref<1x1x10xf32, #tpu.memory_space<vmem>>, vector<1x1x10xf32>
    tpu.vector_store %arg10[%c0_326, %c0_327, %c0_328], %416 {strides = array<i32>} : memref<1x1x10xf32, #tpu.memory_space<vmem>>, vector<1x1x10xf32>,
    return
  }
  func.func @transform_0(%arg0: i32) -> (i32, i32, i32, i32) {
    %c0_i32 = arith.constant 0 : i32
    %c0_i32_0 = arith.constant 0 : i32
    %c0_i32_1 = arith.constant 0 : i32
    %c0_i32_2 = arith.constant 0 : i32
    return %arg0, %c0_i32, %c0_i32_0, %c0_i32_1 : i32, i32, i32, i32
  }
  func.func @transform_1(%arg0: i32) -> (i32, i32) {
    %c0_i32 = arith.constant 0 : i32
    %c0_i32_0 = arith.constant 0 : i32
    %c0_i32_1 = arith.constant 0 : i32
    return %c0_i32, %c0_i32_0 : i32, i32
  }
  func.func @transform_2(%arg0: i32) -> (i32, i32) {
    %c0_i32 = arith.constant 0 : i32
    %c0_i32_0 = arith.constant 0 : i32
    %c0_i32_1 = arith.constant 0 : i32
    return %c0_i32, %c0_i32_0 : i32, i32
  }
  func.func @transform_3(%arg0: i32) -> (i32, i32, i32) {
    %c0_i32 = arith.constant 0 : i32
    %c0_i32_0 = arith.constant 0 : i32
    %c0_i32_1 = arith.constant 0 : i32
    %c0_i32_2 = arith.constant 0 : i32
    return %c0_i32, %c0_i32_0, %c0_i32_1 : i32, i32, i32
  }
  func.func @transform_4(%arg0: i32) -> (i32, i32) {
    %c0_i32 = arith.constant 0 : i32
    %c0_i32_0 = arith.constant 0 : i32
    %c0_i32_1 = arith.constant 0 : i32
    return %c0_i32, %c0_i32_0 : i32, i32
  }
  func.func @transform_5(%arg0: i32) -> (i32, i32) {
    %c0_i32 = arith.constant 0 : i32
    %c0_i32_0 = arith.constant 0 : i32
    %c0_i32_1 = arith.constant 0 : i32
    return %c0_i32, %c0_i32_0 : i32, i32
  }
  func.func @transform_6(%arg0: i32) -> (i32, i32) {
    %c0_i32 = arith.constant 0 : i32
    %c0_i32_0 = arith.constant 0 : i32
    %c0_i32_1 = arith.constant 0 : i32
    return %c0_i32, %c0_i32_0 : i32, i32
  }
  func.func @transform_7(%arg0: i32) -> (i32, i32) {
    %c0_i32 = arith.constant 0 : i32
    %c0_i32_0 = arith.constant 0 : i32
    %c0_i32_1 = arith.constant 0 : i32
    return %c0_i32, %c0_i32_0 : i32, i32
  }
  func.func @transform_8(%arg0: i32) -> (i32, i32) {
    %c0_i32 = arith.constant 0 : i32
    %c0_i32_0 = arith.constant 0 : i32
    %c0_i32_1 = arith.constant 0 : i32
    return %c0_i32, %c0_i32_0 : i32, i32
  }
  func.func @transform_9(%arg0: i32) -> (i32, i32, i32) {
    %c0_i32 = arith.constant 0 : i32
    %c0_i32_0 = arith.constant 0 : i32
    %c0_i32_1 = arith.constant 0 : i32
    return %arg0, %c0_i32, %c0_i32_0 : i32, i32, i32
  }
}

</mosaic_0001>

<llo_original>
// kernel: lenet_forward.1
$region0: #{lenet_forward.1}
  #allocation0 [shape = 'u32[]', space=smem, size = 0x4, offset = 0x4, fixed_abs, tag = 'smem constant byte address 0x4 - core index']
  #allocation1 [shape = 'u32[72,128]{1,0:T(1,128)}', space=vmem, size = 0x9000, scoped, tag = 'internal scratch']
  #allocation2 [shape = 'f32[26,32,128]{2,1,0:T(8,128)}', space=vmem, size = 0x68000, scoped, tag = 'scratch operand']
  #allocation3 [shape = 'f32[13,32,128]{2,1,0:T(8,128)}', space=vmem, size = 0x34000, scoped, tag = 'scratch operand']
  #allocation4 [shape = 'f32[13,16,128]{2,1,0:T(8,128)}', space=vmem, size = 0x1a000, scoped, tag = 'scratch operand']
  #allocation5 [shape = 'f32[11,16,128]{2,1,0:T(8,128)}', space=vmem, size = 0x16000, scoped, tag = 'scratch operand']
  %s0 = inlined_call_operand.vmem [shape: f32[2,26,32,16], index: 0, kind: input, shape index: {}]
  %s1 = inlined_call_operand.vmem [shape: f32[16,128], index: 1, kind: input, shape index: {}]
  %s2 = inlined_call_operand.vmem [shape: f32[1,128], index: 2, kind: input, shape index: {}]
  %s3 = inlined_call_operand.vmem [shape: f32[3,128,128], index: 3, kind: input, shape index: {}]
  %s4 = inlined_call_operand.vmem [shape: f32[1,128], index: 4, kind: input, shape index: {}]
  %s5 = inlined_call_operand.vmem [shape: f32[1152,40], index: 5, kind: input, shape index: {}]
  %s6 = inlined_call_operand.vmem [shape: f32[1,40], index: 6, kind: input, shape index: {}]
  %s7 = inlined_call_operand.vmem [shape: f32[40,10], index: 7, kind: input, shape index: {}]
  %s8 = inlined_call_operand.vmem [shape: f32[1,10], index: 8, kind: input, shape index: {}]
  %s9 = inlined_call_operand.hbm [shape: f32[2,1,10], index: 9, kind: output, shape index: {}]
  %s10 = sld [smem:[#allocation0]]
  $region69: #{lenet_forward.1} parent=0
    _
  %s12 = ssub.s32 1, %s10
  %s13 = scalar_select 0, %s12, %s10
  $region1: #{lenet_forward.1} parent=0
    #allocation6 [shape = 'u8[1024]{0}', space=vmem, size = 0x400, scoped, tag = 'output window, operand 0']
    #allocation7 [shape = 's32[2]{0}', space=sflag, size = 0x8, scoped, tag = 'scoped memory for lenet_forward.1']
    %14 = vsyncpa [#allocation7], 0
    %s15 = scalar_lea.sflag [#allocation7], 1
    %16 = vsyncpa %s15, 0
    loop: start=0, step=1, limit=4
    $region2: #{lenet_forward.1} parent=1 // loop_pre_header
      _
    $region3: #{lenet_forward.1} parent=1 // loop_header
      %s18 = sphi 0, %s22
      %p19 = scmp.ge.s32.totalorder %s18, 4
      %s28 = sphi 0, %s30
      %s31 = sphi 0, %s28
      %s32 = sphi 0, %s31
      %s48 = sphi 0, %s32
      %s52 = sphi 0, %s52
      %s54 = sphi 0, %s52
      %s55 = sphi 0, %s54
      %s69 = sphi 0, %s55
      %s73 = sphi 0, %s73
      %s75 = sphi 0, %s73
      %s76 = sphi 0, %s75
      %s90 = sphi 0, %s76
      %s94 = sphi 0, %s94
      %s96 = sphi 0, %s94
      %s97 = sphi 0, %s96
      %s111 = sphi 0, %s97
      %s115 = sphi 0, %s115
      %s117 = sphi 0, %s115
      %s118 = sphi 0, %s117
      %s132 = sphi 0, %s118
      %s136 = sphi 0, %s136
      %s138 = sphi 0, %s136
      %s139 = sphi 0, %s138
      %s153 = sphi 0, %s139
      %s157 = sphi 0, %s157
      %s159 = sphi 0, %s157
      %s160 = sphi 0, %s159
      %s174 = sphi 0, %s160
      %s178 = sphi 0, %s178
      %s180 = sphi 0, %s178
      %s181 = sphi 0, %s180
      %s195 = sphi 0, %s181
      %s199 = sphi 0, %s199
      %s201 = sphi 0, %s199
      %s202 = sphi 0, %s201
      %s216 = sphi 0, %s202
      %s222 = sphi 0, %s224
      %s225 = sphi 0, %s222
      %s226 = sphi 0, %s225
      %s242 = sphi 0, %s226
    $region4: #{lenet_forward.1} parent=1 // loop_header_branch
      %21 = sbr.rel (%p19) target = $region8
    $region5: #{lenet_forward.1} parent=1 // loop_body
      %s23 = ssub.s32 %s18, 1
      %s24 = ssub.s32 %s18, 2
      %s25 = sadd.s32 %s18, 1
      %s26 = ssub.s32 %s18, %s25
      %p27 = scmp.eq.s32.totalorder %s26, 0
      %s29 = sadd.s32 %s28, 1
      %s30 = scalar_select %p27, %s28, %s29
      %p33 = pneg %p27
      %p34 = scmp.eq.s32.totalorder %s18, 1
      %p35 = por %p33, %p34
      %p36 = scmp.ne.s32.totalorder %s28, %s31
      %p37 = scmp.eq.s32.totalorder %s18, 0
      %p38 = por %p36, %p37
      %p39 = scmp.ne.s32.totalorder %s28, %s31
      %p40 = scmp.eq.s32.totalorder %s23, 1
      %p41 = por %p39, %p40
      %p42 = scmp.ne.s32.totalorder %s31, %s32
      %p43 = scmp.eq.s32.totalorder %s23, 0
      %p44 = por %p42, %p43
      %p45 = scmp.ne.s32.totalorder %s31, %s32
      %p46 = scmp.eq.s32.totalorder %s24, 1
      %p47 = por %p45, %p46
      %p49 = scmp.ne.s32.totalorder %s32, %s48
      %p50 = scmp.eq.s32.totalorder %s24, 0
      %p51 = por %p49, %p50
      %s53 = sadd.s32 %s52, 1
      %p56 = scmp.eq.s32.totalorder %s18, 1
      %p57 = scmp.ne.s32.totalorder %s52, %s54
      %p58 = scmp.eq.s32.totalorder %s18, 0
      %p59 = por %p57, %p58
      %p60 = scmp.ne.s32.totalorder %s52, %s54
      %p61 = scmp.eq.s32.totalorder %s23, 1
      %p62 = por %p60, %p61
      %p63 = scmp.ne.s32.totalorder %s54, %s55
      %p64 = scmp.eq.s32.totalorder %s23, 0
      %p65 = por %p63, %p64
      %p66 = scmp.ne.s32.totalorder %s54, %s55
      %p67 = scmp.eq.s32.totalorder %s24, 1
      %p68 = por %p66, %p67
      %p70 = scmp.ne.s32.totalorder %s55, %s69
      %p71 = scmp.eq.s32.totalorder %s24, 0
      %p72 = por %p70, %p71
      %s74 = sadd.s32 %s73, 1
      %p77 = scmp.eq.s32.totalorder %s18, 1
      %p78 = scmp.ne.s32.totalorder %s73, %s75
      %p79 = scmp.eq.s32.totalorder %s18, 0
      %p80 = por %p78, %p79
      %p81 = scmp.ne.s32.totalorder %s73, %s75
      %p82 = scmp.eq.s32.totalorder %s23, 1
      %p83 = por %p81, %p82
      %p84 = scmp.ne.s32.totalorder %s75, %s76
      %p85 = scmp.eq.s32.totalorder %s23, 0
      %p86 = por %p84, %p85
      %p87 = scmp.ne.s32.totalorder %s75, %s76
      %p88 = scmp.eq.s32.totalorder %s24, 1
      %p89 = por %p87, %p88
      %p91 = scmp.ne.s32.totalorder %s76, %s90
      %p92 = scmp.eq.s32.totalorder %s24, 0
      %p93 = por %p91, %p92
      %s95 = sadd.s32 %s94, 1
      %p98 = scmp.eq.s32.totalorder %s18, 1
      %p99 = scmp.ne.s32.totalorder %s94, %s96
      %p100 = scmp.eq.s32.totalorder %s18, 0
      %p101 = por %p99, %p100
      %p102 = scmp.ne.s32.totalorder %s94, %s96
      %p103 = scmp.eq.s32.totalorder %s23, 1
      %p104 = por %p102, %p103
      %p105 = scmp.ne.s32.totalorder %s96, %s97
      %p106 = scmp.eq.s32.totalorder %s23, 0
      %p107 = por %p105, %p106
      %p108 = scmp.ne.s32.totalorder %s96, %s97
      %p109 = scmp.eq.s32.totalorder %s24, 1
      %p110 = por %p108, %p109
      %p112 = scmp.ne.s32.totalorder %s97, %s111
      %p113 = scmp.eq.s32.totalorder %s24, 0
      %p114 = por %p112, %p113
      %s116 = sadd.s32 %s115, 1
      %p119 = scmp.eq.s32.totalorder %s18, 1
      %p120 = scmp.ne.s32.totalorder %s115, %s117
      %p121 = scmp.eq.s32.totalorder %s18, 0
      %p122 = por %p120, %p121
      %p123 = scmp.ne.s32.totalorder %s115, %s117
      %p124 = scmp.eq.s32.totalorder %s23, 1
      %p125 = por %p123, %p124
      %p126 = scmp.ne.s32.totalorder %s117, %s118
      %p127 = scmp.eq.s32.totalorder %s23, 0
      %p128 = por %p126, %p127
      %p129 = scmp.ne.s32.totalorder %s117, %s118
      %p130 = scmp.eq.s32.totalorder %s24, 1
      %p131 = por %p129, %p130
      %p133 = scmp.ne.s32.totalorder %s118, %s132
      %p134 = scmp.eq.s32.totalorder %s24, 0
      %p135 = por %p133, %p134
      %s137 = sadd.s32 %s136, 1
      %p140 = scmp.eq.s32.totalorder %s18, 1
      %p141 = scmp.ne.s32.totalorder %s136, %s138
      %p142 = scmp.eq.s32.totalorder %s18, 0
      %p143 = por %p141, %p142
      %p144 = scmp.ne.s32.totalorder %s136, %s138
      %p145 = scmp.eq.s32.totalorder %s23, 1
      %p146 = por %p144, %p145
      %p147 = scmp.ne.s32.totalorder %s138, %s139
      %p148 = scmp.eq.s32.totalorder %s23, 0
      %p149 = por %p147, %p148
      %p150 = scmp.ne.s32.totalorder %s138, %s139
      %p151 = scmp.eq.s32.totalorder %s24, 1
      %p152 = por %p150, %p151
      %p154 = scmp.ne.s32.totalorder %s139, %s153
      %p155 = scmp.eq.s32.totalorder %s24, 0
      %p156 = por %p154, %p155
      %s158 = sadd.s32 %s157, 1
      %p161 = scmp.eq.s32.totalorder %s18, 1
      %p162 = scmp.ne.s32.totalorder %s157, %s159
      %p163 = scmp.eq.s32.totalorder %s18, 0
      %p164 = por %p162, %p163
      %p165 = scmp.ne.s32.totalorder %s157, %s159
      %p166 = scmp.eq.s32.totalorder %s23, 1
      %p167 = por %p165, %p166
      %p168 = scmp.ne.s32.totalorder %s159, %s160
      %p169 = scmp.eq.s32.totalorder %s23, 0
      %p170 = por %p168, %p169
      %p171 = scmp.ne.s32.totalorder %s159, %s160
      %p172 = scmp.eq.s32.totalorder %s24, 1
      %p173 = por %p171, %p172
      %p175 = scmp.ne.s32.totalorder %s160, %s174
      %p176 = scmp.eq.s32.totalorder %s24, 0
      %p177 = por %p175, %p176
      %s179 = sadd.s32 %s178, 1
      %p182 = scmp.eq.s32.totalorder %s18, 1
      %p183 = scmp.ne.s32.totalorder %s178, %s180
      %p184 = scmp.eq.s32.totalorder %s18, 0
      %p185 = por %p183, %p184
      %p186 = scmp.ne.s32.totalorder %s178, %s180
      %p187 = scmp.eq.s32.totalorder %s23, 1
      %p188 = por %p186, %p187
      %p189 = scmp.ne.s32.totalorder %s180, %s181
      %p190 = scmp.eq.s32.totalorder %s23, 0
      %p191 = por %p189, %p190
      %p192 = scmp.ne.s32.totalorder %s180, %s181
      %p193 = scmp.eq.s32.totalorder %s24, 1
      %p194 = por %p192, %p193
      %p196 = scmp.ne.s32.totalorder %s181, %s195
      %p197 = scmp.eq.s32.totalorder %s24, 0
      %p198 = por %p196, %p197
      %s200 = sadd.s32 %s199, 1
      %p203 = scmp.eq.s32.totalorder %s18, 1
      %p204 = scmp.ne.s32.totalorder %s199, %s201
      %p205 = scmp.eq.s32.totalorder %s18, 0
      %p206 = por %p204, %p205
      %p207 = scmp.ne.s32.totalorder %s199, %s201
      %p208 = scmp.eq.s32.totalorder %s23, 1
      %p209 = por %p207, %p208
      %p210 = scmp.ne.s32.totalorder %s201, %s202
      %p211 = scmp.eq.s32.totalorder %s23, 0
      %p212 = por %p210, %p211
      %p213 = scmp.ne.s32.totalorder %s201, %s202
      %p214 = scmp.eq.s32.totalorder %s24, 1
      %p215 = por %p213, %p214
      %p217 = scmp.ne.s32.totalorder %s202, %s216
      %p218 = scmp.eq.s32.totalorder %s24, 0
      %p219 = por %p217, %p218
      %s220 = ssub.s32 %s18, %s25
      %p221 = scmp.eq.s32.totalorder %s220, 0
      %s223 = sadd.s32 %s222, 1
      %s224 = scalar_select %p221, %s222, %s223
      %p227 = pneg %p221
      %p228 = scmp.eq.s32.totalorder %s18, 1
      %p229 = por %p227, %p228
      %p230 = scmp.ne.s32.totalorder %s222, %s225
      %p231 = scmp.eq.s32.totalorder %s18, 0
      %p232 = por %p230, %p231
      %p233 = scmp.ne.s32.totalorder %s222, %s225
      %p234 = scmp.eq.s32.totalorder %s23, 1
      %p235 = por %p233, %p234
      %p236 = scmp.ne.s32.totalorder %s225, %s226
      %p237 = scmp.eq.s32.totalorder %s23, 0
      %p238 = por %p236, %p237
      %p239 = scmp.ne.s32.totalorder %s225, %s226
      %p240 = scmp.eq.s32.totalorder %s24, 1
      %p241 = por %p239, %p240
      %p243 = scmp.ne.s32.totalorder %s226, %s242
      %p244 = scmp.eq.s32.totalorder %s24, 0
      %p245 = por %p243, %p244
      %p246 = scmp.le.s32.totalorder 1, %s18
      %p247 = scmp.lt.s32.totalorder %s18, 3
      %p248 = pnand %p246, %p247
      %p249 = pneg %p248
      // Predicated region
      $region9: #{lenet_forward.1} parent=5 // pred_check
        _
      $region10: #{lenet_forward.1} parent=5 // pred_check_branch
        %251 = sbr.rel (%p248) target = $region12
      $region11: #{lenet_forward.1} parent=5 // pred_region
        %s252 = ssub.s32 %s18, 1
        // Predicated region
        $region13: #{lenet_forward.1} parent=11 // pred_check
          %p253 = pneg %p65
        $region14: #{lenet_forward.1} parent=11 // pred_check_branch
          %255 = sbr.rel (%p253) target = $region16
        $region15: #{lenet_forward.1} parent=11 // pred_region
          _
        $region16: #{lenet_forward.1} parent=11 // pred_fallthru
          _
        // Predicated region
        $region17: #{lenet_forward.1} parent=11 // pred_check
          %p256 = pneg %p86
        $region18: #{lenet_forward.1} parent=11 // pred_check_branch
          %258 = sbr.rel (%p256) target = $region20
        $region19: #{lenet_forward.1} parent=11 // pred_region
          _
        $region20: #{lenet_forward.1} parent=11 // pred_fallthru
          _
        // Predicated region
        $region21: #{lenet_forward.1} parent=11 // pred_check
          %p259 = pneg %p107
        $region22: #{lenet_forward.1} parent=11 // pred_check_branch
          %261 = sbr.rel (%p259) target = $region24
        $region23: #{lenet_forward.1} parent=11 // pred_region
          _
        $region24: #{lenet_forward.1} parent=11 // pred_fallthru
          _
        // Predicated region
        $region25: #{lenet_forward.1} parent=11 // pred_check
          %p262 = pneg %p128
        $region26: #{lenet_forward.1} parent=11 // pred_check_branch
          %264 = sbr.rel (%p262) target = $region28
        $region27: #{lenet_forward.1} parent=11 // pred_region
          _
        $region28: #{lenet_forward.1} parent=11 // pred_fallthru
          _
        // Predicated region
        $region29: #{lenet_forward.1} parent=11 // pred_check
          %p265 = pneg %p149
        $region30: #{lenet_forward.1} parent=11 // pred_check_branch
          %267 = sbr.rel (%p265) target = $region32
        $region31: #{lenet_forward.1} parent=11 // pred_region
          _
        $region32: #{lenet_forward.1} parent=11 // pred_fallthru
          _
        // Predicated region
        $region33: #{lenet_forward.1} parent=11 // pred_check
          %p268 = pneg %p170
        $region34: #{lenet_forward.1} parent=11 // pred_check_branch
          %270 = sbr.rel (%p268) target = $region36
        $region35: #{lenet_forward.1} parent=11 // pred_region
          _
        $region36: #{lenet_forward.1} parent=11 // pred_fallthru
          _
        // Predicated region
        $region37: #{lenet_forward.1} parent=11 // pred_check
          %p271 = pneg %p191
        $region38: #{lenet_forward.1} parent=11 // pred_check_branch
          %273 = sbr.rel (%p271) target = $region40
        $region39: #{lenet_forward.1} parent=11 // pred_region
          _
        $region40: #{lenet_forward.1} parent=11 // pred_fallthru
          _
        // Predicated region
        $region41: #{lenet_forward.1} parent=11 // pred_check
          %p274 = pneg %p212
        $region42: #{lenet_forward.1} parent=11 // pred_check_branch
          %276 = sbr.rel (%p274) target = $region44
        $region43: #{lenet_forward.1} parent=11 // pred_region
          _
        $region44: #{lenet_forward.1} parent=11 // pred_fallthru
          _
      $region12: #{lenet_forward.1} parent=5 // pred_fallthru
        _
      %p277 = scmp.lt.s32.totalorder %s18, 2
      // Predicated region
      $region45: #{lenet_forward.1} parent=5 // pred_check
        %p278 = pneg %p277
      $region46: #{lenet_forward.1} parent=5 // pred_check_branch
        %280 = sbr.rel (%p278) target = $region48
      $region47: #{lenet_forward.1} parent=5 // pred_region
        // Predicated region
        $region49: #{lenet_forward.1} parent=47 // pred_check
          %p281 = pneg %p38
        $region50: #{lenet_forward.1} parent=47 // pred_check_branch
          %283 = sbr.rel (%p281) target = $region52
        $region51: #{lenet_forward.1} parent=47 // pred_region
          %p284 = scmp.lt.s32.totalorder %s18, 1
          %s285 = scalar_select %p284, %s18, 1
          %s286 = smul.addr %s285, 104
          %s287 = smul.addr %s286, 8
          %s288 = scalar_lea.vmem %s0, %s287
        $region52: #{lenet_forward.1} parent=47 // pred_fallthru
          _
      $region48: #{lenet_forward.1} parent=5 // pred_fallthru
        _
      %p289 = scmp.le.s32.totalorder 1, %s18
      %p290 = scmp.lt.s32.totalorder %s18, 3
      %p291 = pnand %p289, %p290
      %p292 = pneg %p291
      // Predicated region
      $region53: #{lenet_forward.1} parent=5 // pred_check
        _
      $region54: #{lenet_forward.1} parent=5 // pred_check_branch
        %294 = sbr.rel (%p291) target = $region56
      $region55: #{lenet_forward.1} parent=5 // pred_region
        %s295 = ssub.s32 %s18, 1
        %p296 = scmp.lt.s32.totalorder %s23, 1
        %s297 = scalar_select %p296, %s23, 1
        %s298 = smul.addr %s297, 104
        %s299 = smul.addr %s298, 8
        %s300 = scalar_lea.vmem %s0, %s299
        %p301 = pneg %p44
        %p302 = pneg %p41
        %p303 = pneg %p65
        %p304 = pneg %p62
        %p305 = pneg %p86
        %p306 = pneg %p83
        %p307 = pneg %p107
        %p308 = pneg %p104
        %p309 = pneg %p128
        %p310 = pneg %p125
        %p311 = pneg %p149
        %p312 = pneg %p146
        %p313 = pneg %p170
        %p314 = pneg %p167
        %p315 = pneg %p191
        %p316 = pneg %p188
        %p317 = pneg %p212
        %p318 = pneg %p209
        %p319 = pneg %p238
        %p320 = pneg %p235
        %s321 = sand.u32 %s225, 1
        %s322 = scalar_lea.sflag [#allocation7], %s321
        %s323 = sand.u32 %s225, 1
        %s324 = scalar_lea.vmem [#allocation6], %s323
        %p325 = scmp.lt.s32.totalorder %s23, 1
        %s326 = scalar_select %p325, %s23, 1
        %s327 = smul.addr %s326, 104
        %s328 = smul.addr %s327, 8
        %s329 = scalar_lea.vmem %s0, %s328
        %v330 = vld [vmem:[%s329] sm:$0xff]
        %v331 = vld [vmem:[%s329 + $0x8] sm:$0xff]
        %v332 = vld [vmem:[%s329 + $0x10] sm:$0xff]
        %v333 = vld [vmem:[%s329 + $0x18] sm:$0xff]
        %v334 = vld [vmem:[%s329 + $0x20] sm:$0xff]
        %v335 = vld [vmem:[%s329 + $0x28] sm:$0xff]
        %v336 = vld [vmem:[%s329 + $0x30] sm:$0xff]
        %v337 = vld [vmem:[%s329 + $0x38] sm:$0xff]
        %v338 = vld [vmem:[%s329 + $0x40] sm:$0xff]
        %v339 = vld [vmem:[%s329 + $0x48] sm:$0xff]
        %v340 = vld [vmem:[%s329 + $0x50] sm:$0xff]
        %v341 = vld [vmem:[%s329 + $0x58] sm:$0xff]
        %v342 = vld [vmem:[%s329 + $0x60] sm:$0xff]
        %v343 = vld [vmem:[%s329 + $0x68] sm:$0xff]
        %v344 = vld [vmem:[%s329 + $0x70] sm:$0xff]
        %v345 = vld [vmem:[%s329 + $0x78] sm:$0xff]
        %v346 = vld [vmem:[%s329 + $0x80] sm:$0xff]
        %v347 = vld [vmem:[%s329 + $0x88] sm:$0xff]
        %v348 = vld [vmem:[%s329 + $0x90] sm:$0xff]
        %v349 = vld [vmem:[%s329 + $0x98] sm:$0xff]
        %v350 = vld [vmem:[%s329 + $0xa0] sm:$0xff]
        %v351 = vld [vmem:[%s329 + $0xa8] sm:$0xff]
        %v352 = vld [vmem:[%s329 + $0xb0] sm:$0xff]
        %v353 = vld [vmem:[%s329 + $0xb8] sm:$0xff]
        %v354 = vld [vmem:[%s329 + $0xc0] sm:$0xff]
        %v355 = vld [vmem:[%s329 + $0xc8] sm:$0xff]
        %v356 = vld [vmem:[%s329 + $0xd0] sm:$0xff]
        %v357 = vld [vmem:[%s329 + $0xd8] sm:$0xff]
        %v358 = vld [vmem:[%s329 + $0xe0] sm:$0xff]
        %v359 = vld [vmem:[%s329 + $0xe8] sm:$0xff]
        %v360 = vld [vmem:[%s329 + $0xf0] sm:$0xff]
        %v361 = vld [vmem:[%s329 + $0xf8] sm:$0xff]
        %v362 = vld [vmem:[%s329 + $0x100] sm:$0xff]
        %v363 = vld [vmem:[%s329 + $0x108] sm:$0xff]
        %v364 = vld [vmem:[%s329 + $0x110] sm:$0xff]
        %v365 = vld [vmem:[%s329 + $0x118] sm:$0xff]
        %v366 = vld [vmem:[%s329 + $0x120] sm:$0xff]
        %v367 = vld [vmem:[%s329 + $0x128] sm:$0xff]
        %v368 = vld [vmem:[%s329 + $0x130] sm:$0xff]
        %v369 = vld [vmem:[%s329 + $0x138] sm:$0xff]
        %v370 = vld [vmem:[%s329 + $0x140] sm:$0xff]
        %v371 = vld [vmem:[%s329 + $0x148] sm:$0xff]
        %v372 = vld [vmem:[%s329 + $0x150] sm:$0xff]
        %v373 = vld [vmem:[%s329 + $0x158] sm:$0xff]
        %v374 = vld [vmem:[%s329 + $0x160] sm:$0xff]
        %v375 = vld [vmem:[%s329 + $0x168] sm:$0xff]
        %v376 = vld [vmem:[%s329 + $0x170] sm:$0xff]
        %v377 = vld [vmem:[%s329 + $0x178] sm:$0xff]
        %v378 = vld [vmem:[%s329 + $0x180] sm:$0xff]
        %v379 = vld [vmem:[%s329 + $0x188] sm:$0xff]
        %v380 = vld [vmem:[%s329 + $0x190] sm:$0xff]
        %v381 = vld [vmem:[%s329 + $0x198] sm:$0xff]
        %v382 = vld [vmem:[%s329 + $0x1a0] sm:$0xff]
        %v383 = vld [vmem:[%s329 + $0x1a8] sm:$0xff]
        %v384 = vld [vmem:[%s329 + $0x1b0] sm:$0xff]
        %v385 = vld [vmem:[%s329 + $0x1b8] sm:$0xff]
        %v386 = vld [vmem:[%s329 + $0x1c0] sm:$0xff]
        %v387 = vld [vmem:[%s329 + $0x1c8] sm:$0xff]
        %v388 = vld [vmem:[%s329 + $0x1d0] sm:$0xff]
        %v389 = vld [vmem:[%s329 + $0x1d8] sm:$0xff]
        %v390 = vld [vmem:[%s329 + $0x1e0] sm:$0xff]
        %v391 = vld [vmem:[%s329 + $0x1e8] sm:$0xff]
        %v392 = vld [vmem:[%s329 + $0x1f0] sm:$0xff]
        %v393 = vld [vmem:[%s329 + $0x1f8] sm:$0xff]
        %v394 = vld [vmem:[%s329 + $0x200] sm:$0xff]
        %v395 = vld [vmem:[%s329 + $0x208] sm:$0xff]
        %v396 = vld [vmem:[%s329 + $0x210] sm:$0xff]
        %v397 = vld [vmem:[%s329 + $0x218] sm:$0xff]
        %v398 = vld [vmem:[%s329 + $0x220] sm:$0xff]
        %v399 = vld [vmem:[%s329 + $0x228] sm:$0xff]
        %v400 = vld [vmem:[%s329 + $0x230] sm:$0xff]
        %v401 = vld [vmem:[%s329 + $0x238] sm:$0xff]
        %v402 = vld [vmem:[%s329 + $0x240] sm:$0xff]
        %v403 = vld [vmem:[%s329 + $0x248] sm:$0xff]
        %v404 = vld [vmem:[%s329 + $0x250] sm:$0xff]
        %v405 = vld [vmem:[%s329 + $0x258] sm:$0xff]
        %v406 = vld [vmem:[%s329 + $0x260] sm:$0xff]
        %v407 = vld [vmem:[%s329 + $0x268] sm:$0xff]
        %v408 = vld [vmem:[%s329 + $0x270] sm:$0xff]
        %v409 = vld [vmem:[%s329 + $0x278] sm:$0xff]
        %v410 = vld [vmem:[%s329 + $0x280] sm:$0xff]
        %v411 = vld [vmem:[%s329 + $0x288] sm:$0xff]
        %v412 = vld [vmem:[%s329 + $0x290] sm:$0xff]
        %v413 = vld [vmem:[%s329 + $0x298] sm:$0xff]
        %v414 = vld [vmem:[%s329 + $0x2a0] sm:$0xff]
        %v415 = vld [vmem:[%s329 + $0x2a8] sm:$0xff]
        %v416 = vld [vmem:[%s329 + $0x2b0] sm:$0xff]
        %v417 = vld [vmem:[%s329 + $0x2b8] sm:$0xff]
        %v418 = vld [vmem:[%s329 + $0x2c0] sm:$0xff]
        %v419 = vld [vmem:[%s329 + $0x2c8] sm:$0xff]
        %v420 = vld [vmem:[%s329 + $0x2d0] sm:$0xff]
        %v421 = vld [vmem:[%s329 + $0x2d8] sm:$0xff]
        %v422 = vld [vmem:[%s329 + $0x2e0] sm:$0xff]
        %v423 = vld [vmem:[%s329 + $0x2e8] sm:$0xff]
        %v424 = vld [vmem:[%s329 + $0x2f0] sm:$0xff]
        %v425 = vld [vmem:[%s329 + $0x2f8] sm:$0xff]
        %v426 = vld [vmem:[%s329 + $0x300] sm:$0xff]
        %v427 = vld [vmem:[%s329 + $0x308] sm:$0xff]
        %v428 = vld [vmem:[%s329 + $0x310] sm:$0xff]
        %v429 = vld [vmem:[%s329 + $0x318] sm:$0xff]
        %v430 = vld [vmem:[%s329 + $0x320] sm:$0xff]
        %v431 = vld [vmem:[%s329 + $0x328] sm:$0xff]
        %v432 = vld [vmem:[%s329 + $0x330] sm:$0xff]
        %v433 = vld [vmem:[%s329 + $0x338] sm:$0xff]
        %v434 = vld [vmem:[%s1] sm:$0xff]
        %v435 = vld [vmem:[%s1 + $0x8] sm:$0xff]
        %vm436 = vcmask 130048
        %v438 = vsel %vm436, %v330, 0
        %v441 = vsel %vm436, %v331, 0
        %v444 = vsel %vm436, %v332, 0
        %v447 = vsel %vm436, %v333, 0
        %v450 = vsel %vm436, %v334, 0
        %v453 = vsel %vm436, %v335, 0
        %v456 = vsel %vm436, %v336, 0
        %v459 = vsel %vm436, %v337, 0
        %v462 = vsel %vm436, %v338, 0
        %v465 = vsel %vm436, %v339, 0
        %v468 = vsel %vm436, %v340, 0
        %v471 = vsel %vm436, %v341, 0
        %v474 = vsel %vm436, %v342, 0
        %v477 = vsel %vm436, %v343, 0
        %v480 = vsel %vm436, %v344, 0
        %v483 = vsel %vm436, %v345, 0
        %v486 = vsel %vm436, %v346, 0
        %v489 = vsel %vm436, %v347, 0
        %v492 = vsel %vm436, %v348, 0
        %v495 = vsel %vm436, %v349, 0
        %v498 = vsel %vm436, %v350, 0
        %v501 = vsel %vm436, %v351, 0
        %v504 = vsel %vm436, %v352, 0
        %v507 = vsel %vm436, %v353, 0
        %v510 = vsel %vm436, %v354, 0
        %v513 = vsel %vm436, %v355, 0
        %v516 = vsel %vm436, %v356, 0
        %v519 = vsel %vm436, %v357, 0
        %v522 = vsel %vm436, %v358, 0
        %v525 = vsel %vm436, %v359, 0
        %v528 = vsel %vm436, %v360, 0
        %v531 = vsel %vm436, %v361, 0
        %v534 = vsel %vm436, %v362, 0
        %v537 = vsel %vm436, %v363, 0
        %v540 = vsel %vm436, %v364, 0
        %v543 = vsel %vm436, %v365, 0
        %v546 = vsel %vm436, %v366, 0
        %v549 = vsel %vm436, %v367, 0
        %v552 = vsel %vm436, %v368, 0
        %v555 = vsel %vm436, %v369, 0
        %v558 = vsel %vm436, %v370, 0
        %v561 = vsel %vm436, %v371, 0
        %v564 = vsel %vm436, %v372, 0
        %v567 = vsel %vm436, %v373, 0
        %v570 = vsel %vm436, %v374, 0
        %v573 = vsel %vm436, %v375, 0
        %v576 = vsel %vm436, %v376, 0
        %v579 = vsel %vm436, %v377, 0
        %v582 = vsel %vm436, %v378, 0
        %v585 = vsel %vm436, %v379, 0
        %v588 = vsel %vm436, %v380, 0
        %v591 = vsel %vm436, %v381, 0
        %v594 = vsel %vm436, %v382, 0
        %v597 = vsel %vm436, %v383, 0
        %v600 = vsel %vm436, %v384, 0
        %v603 = vsel %vm436, %v385, 0
        %v606 = vsel %vm436, %v386, 0
        %v609 = vsel %vm436, %v387, 0
        %v612 = vsel %vm436, %v388, 0
        %v615 = vsel %vm436, %v389, 0
        %v618 = vsel %vm436, %v390, 0
        %v621 = vsel %vm436, %v391, 0
        %v624 = vsel %vm436, %v392, 0
        %v627 = vsel %vm436, %v393, 0
        %v630 = vsel %vm436, %v394, 0
        %v633 = vsel %vm436, %v395, 0
        %v636 = vsel %vm436, %v396, 0
        %v639 = vsel %vm436, %v397, 0
        %v642 = vsel %vm436, %v398, 0
        %v645 = vsel %vm436, %v399, 0
        %v648 = vsel %vm436, %v400, 0
        %v651 = vsel %vm436, %v401, 0
        %v654 = vsel %vm436, %v402, 0
        %v657 = vsel %vm436, %v403, 0
        %v660 = vsel %vm436, %v404, 0
        %v663 = vsel %vm436, %v405, 0
        %v666 = vsel %vm436, %v406, 0
        %v669 = vsel %vm436, %v407, 0
        %v672 = vsel %vm436, %v408, 0
        %v675 = vsel %vm436, %v409, 0
        %v678 = vsel %vm436, %v410, 0
        %v681 = vsel %vm436, %v411, 0
        %v684 = vsel %vm436, %v412, 0
        %v687 = vsel %vm436, %v413, 0
        %v690 = vsel %vm436, %v414, 0
        %v693 = vsel %vm436, %v415, 0
        %v696 = vsel %vm436, %v416, 0
        %v699 = vsel %vm436, %v417, 0
        %v702 = vsel %vm436, %v418, 0
        %v705 = vsel %vm436, %v419, 0
        %v708 = vsel %vm436, %v420, 0
        %v711 = vsel %vm436, %v421, 0
        %v714 = vsel %vm436, %v422, 0
        %v717 = vsel %vm436, %v423, 0
        %v720 = vsel %vm436, %v424, 0
        %v723 = vsel %vm436, %v425, 0
        %v726 = vsel %vm436, %v426, 0
        %v729 = vsel %vm436, %v427, 0
        %v732 = vsel %vm436, %v428, 0
        %v735 = vsel %vm436, %v429, 0
        %v738 = vsel %vm436, %v430, 0
        %v741 = vsel %vm436, %v431, 0
        %v744 = vsel %vm436, %v432, 0
        %v747 = vsel %vm436, %v433, 0
        %749 = vmatpush.msra.mxu0 0.0
        %750 = vmatpush.msra.mxu0 0.0
        %751 = vmatpush.msra.mxu0 0.0
        %752 = vmatpush.msra.mxu0 0.0
        %753 = vmatpush.msra.mxu0 0.0
        %754 = vmatpush.msra.mxu0 0.0
        %755 = vmatpush.msra.mxu0 0.0
        %756 = vmatpush.msra.mxu0 0.0
        %757 = vmatpush.msra.mxu0 0.0
        %758 = vmatpush.msra.mxu0 0.0
        %759 = vmatpush.msra.mxu0 0.0
        %760 = vmatpush.msra.mxu0 0.0
        %761 = vmatpush.msra.mxu0 0.0
        %762 = vmatpush.msra.mxu0 0.0
        %763 = vmatpush.msra.mxu0 %v435
        %764 = vmatpush.msra.mxu0 %v434
        %765 = vmatmul.f32.gmra.mxu0 %v438
        %v766 = vpop.f32.mrf.mxu0
        %v767 = vadd.f32 0.0, %v766
        %768 = vmatmul.f32.gmra.mxu0 %v441
        %v769 = vpop.f32.mrf.mxu0
        %v770 = vadd.f32 0.0, %v769
        %771 = vmatmul.f32.gmra.mxu0 %v444
        %v772 = vpop.f32.mrf.mxu0
        %v773 = vadd.f32 0.0, %v772
        %774 = vmatmul.f32.gmra.mxu0 %v447
        %v775 = vpop.f32.mrf.mxu0
        %v776 = vadd.f32 0.0, %v775
        %777 = vmatmul.f32.gmra.mxu0 %v450
        %v778 = vpop.f32.mrf.mxu0
        %v779 = vadd.f32 0.0, %v778
        %780 = vmatmul.f32.gmra.mxu0 %v453
        %v781 = vpop.f32.mrf.mxu0
        %v782 = vadd.f32 0.0, %v781
        %783 = vmatmul.f32.gmra.mxu0 %v456
        %v784 = vpop.f32.mrf.mxu0
        %v785 = vadd.f32 0.0, %v784
        %786 = vmatmul.f32.gmra.mxu0 %v459
        %v787 = vpop.f32.mrf.mxu0
        %v788 = vadd.f32 0.0, %v787
        %789 = vmatmul.f32.gmra.mxu0 %v462
        %v790 = vpop.f32.mrf.mxu0
        %v791 = vadd.f32 0.0, %v790
        %792 = vmatmul.f32.gmra.mxu0 %v465
        %v793 = vpop.f32.mrf.mxu0
        %v794 = vadd.f32 0.0, %v793
        %795 = vmatmul.f32.gmra.mxu0 %v468
        %v796 = vpop.f32.mrf.mxu0
        %v797 = vadd.f32 0.0, %v796
        %798 = vmatmul.f32.gmra.mxu0 %v471
        %v799 = vpop.f32.mrf.mxu0
        %v800 = vadd.f32 0.0, %v799
        %801 = vmatmul.f32.gmra.mxu0 %v474
        %v802 = vpop.f32.mrf.mxu0
        %v803 = vadd.f32 0.0, %v802
        %804 = vmatmul.f32.gmra.mxu0 %v477
        %v805 = vpop.f32.mrf.mxu0
        %v806 = vadd.f32 0.0, %v805
        %807 = vmatmul.f32.gmra.mxu0 %v480
        %v808 = vpop.f32.mrf.mxu0
        %v809 = vadd.f32 0.0, %v808
        %810 = vmatmul.f32.gmra.mxu0 %v483
        %v811 = vpop.f32.mrf.mxu0
        %v812 = vadd.f32 0.0, %v811
        %813 = vmatmul.f32.gmra.mxu0 %v486
        %v814 = vpop.f32.mrf.mxu0
        %v815 = vadd.f32 0.0, %v814
        %816 = vmatmul.f32.gmra.mxu0 %v489
        %v817 = vpop.f32.mrf.mxu0
        %v818 = vadd.f32 0.0, %v817
        %819 = vmatmul.f32.gmra.mxu0 %v492
        %v820 = vpop.f32.mrf.mxu0
        %v821 = vadd.f32 0.0, %v820
        %822 = vmatmul.f32.gmra.mxu0 %v495
        %v823 = vpop.f32.mrf.mxu0
        %v824 = vadd.f32 0.0, %v823
        %825 = vmatmul.f32.gmra.mxu0 %v498
        %v826 = vpop.f32.mrf.mxu0
        %v827 = vadd.f32 0.0, %v826
        %828 = vmatmul.f32.gmra.mxu0 %v501
        %v829 = vpop.f32.mrf.mxu0
        %v830 = vadd.f32 0.0, %v829
        %831 = vmatmul.f32.gmra.mxu0 %v504
        %v832 = vpop.f32.mrf.mxu0
        %v833 = vadd.f32 0.0, %v832
        %834 = vmatmul.f32.gmra.mxu0 %v507
        %v835 = vpop.f32.mrf.mxu0
        %v836 = vadd.f32 0.0, %v835
        %837 = vmatmul.f32.gmra.mxu0 %v510
        %v838 = vpop.f32.mrf.mxu0
        %v839 = vadd.f32 0.0, %v838
        %840 = vmatmul.f32.gmra.mxu0 %v513
        %v841 = vpop.f32.mrf.mxu0
        %v842 = vadd.f32 0.0, %v841
        %843 = vmatmul.f32.gmra.mxu0 %v516
        %v844 = vpop.f32.mrf.mxu0
        %v845 = vadd.f32 0.0, %v844
        %846 = vmatmul.f32.gmra.mxu0 %v519
        %v847 = vpop.f32.mrf.mxu0
        %v848 = vadd.f32 0.0, %v847
        %849 = vmatmul.f32.gmra.mxu0 %v522
        %v850 = vpop.f32.mrf.mxu0
        %v851 = vadd.f32 0.0, %v850
        %852 = vmatmul.f32.gmra.mxu0 %v525
        %v853 = vpop.f32.mrf.mxu0
        %v854 = vadd.f32 0.0, %v853
        %855 = vmatmul.f32.gmra.mxu0 %v528
        %v856 = vpop.f32.mrf.mxu0
        %v857 = vadd.f32 0.0, %v856
        %858 = vmatmul.f32.gmra.mxu0 %v531
        %v859 = vpop.f32.mrf.mxu0
        %v860 = vadd.f32 0.0, %v859
        %861 = vmatmul.f32.gmra.mxu0 %v534
        %v862 = vpop.f32.mrf.mxu0
        %v863 = vadd.f32 0.0, %v862
        %864 = vmatmul.f32.gmra.mxu0 %v537
        %v865 = vpop.f32.mrf.mxu0
        %v866 = vadd.f32 0.0, %v865
        %867 = vmatmul.f32.gmra.mxu0 %v540
        %v868 = vpop.f32.mrf.mxu0
        %v869 = vadd.f32 0.0, %v868
        %870 = vmatmul.f32.gmra.mxu0 %v543
        %v871 = vpop.f32.mrf.mxu0
        %v872 = vadd.f32 0.0, %v871
        %873 = vmatmul.f32.gmra.mxu0 %v546
        %v874 = vpop.f32.mrf.mxu0
        %v875 = vadd.f32 0.0, %v874
        %876 = vmatmul.f32.gmra.mxu0 %v549
        %v877 = vpop.f32.mrf.mxu0
        %v878 = vadd.f32 0.0, %v877
        %879 = vmatmul.f32.gmra.mxu0 %v552
        %v880 = vpop.f32.mrf.mxu0
        %v881 = vadd.f32 0.0, %v880
        %882 = vmatmul.f32.gmra.mxu0 %v555
        %v883 = vpop.f32.mrf.mxu0
        %v884 = vadd.f32 0.0, %v883
        %885 = vmatmul.f32.gmra.mxu0 %v558
        %v886 = vpop.f32.mrf.mxu0
        %v887 = vadd.f32 0.0, %v886
        %888 = vmatmul.f32.gmra.mxu0 %v561
        %v889 = vpop.f32.mrf.mxu0
        %v890 = vadd.f32 0.0, %v889
        %891 = vmatmul.f32.gmra.mxu0 %v564
        %v892 = vpop.f32.mrf.mxu0
        %v893 = vadd.f32 0.0, %v892
        %894 = vmatmul.f32.gmra.mxu0 %v567
        %v895 = vpop.f32.mrf.mxu0
        %v896 = vadd.f32 0.0, %v895
        %897 = vmatmul.f32.gmra.mxu0 %v570
        %v898 = vpop.f32.mrf.mxu0
        %v899 = vadd.f32 0.0, %v898
        %900 = vmatmul.f32.gmra.mxu0 %v573
        %v901 = vpop.f32.mrf.mxu0
        %v902 = vadd.f32 0.0, %v901
        %903 = vmatmul.f32.gmra.mxu0 %v576
        %v904 = vpop.f32.mrf.mxu0
        %v905 = vadd.f32 0.0, %v904
        %906 = vmatmul.f32.gmra.mxu0 %v579
        %v907 = vpop.f32.mrf.mxu0
        %v908 = vadd.f32 0.0, %v907
        %909 = vmatmul.f32.gmra.mxu0 %v582
        %v910 = vpop.f32.mrf.mxu0
        %v911 = vadd.f32 0.0, %v910
        %912 = vmatmul.f32.gmra.mxu0 %v585
        %v913 = vpop.f32.mrf.mxu0
        %v914 = vadd.f32 0.0, %v913
        %915 = vmatmul.f32.gmra.mxu0 %v588
        %v916 = vpop.f32.mrf.mxu0
        %v917 = vadd.f32 0.0, %v916
        %918 = vmatmul.f32.gmra.mxu0 %v591
        %v919 = vpop.f32.mrf.mxu0
        %v920 = vadd.f32 0.0, %v919
        %921 = vmatmul.f32.gmra.mxu0 %v594
        %v922 = vpop.f32.mrf.mxu0
        %v923 = vadd.f32 0.0, %v922
        %924 = vmatmul.f32.gmra.mxu0 %v597
        %v925 = vpop.f32.mrf.mxu0
        %v926 = vadd.f32 0.0, %v925
        %927 = vmatmul.f32.gmra.mxu0 %v600
        %v928 = vpop.f32.mrf.mxu0
        %v929 = vadd.f32 0.0, %v928
        %930 = vmatmul.f32.gmra.mxu0 %v603
        %v931 = vpop.f32.mrf.mxu0
        %v932 = vadd.f32 0.0, %v931
        %933 = vmatmul.f32.gmra.mxu0 %v606
        %v934 = vpop.f32.mrf.mxu0
        %v935 = vadd.f32 0.0, %v934
        %936 = vmatmul.f32.gmra.mxu0 %v609
        %v937 = vpop.f32.mrf.mxu0
        %v938 = vadd.f32 0.0, %v937
        %939 = vmatmul.f32.gmra.mxu0 %v612
        %v940 = vpop.f32.mrf.mxu0
        %v941 = vadd.f32 0.0, %v940
        %942 = vmatmul.f32.gmra.mxu0 %v615
        %v943 = vpop.f32.mrf.mxu0
        %v944 = vadd.f32 0.0, %v943
        %945 = vmatmul.f32.gmra.mxu0 %v618
        %v946 = vpop.f32.mrf.mxu0
        %v947 = vadd.f32 0.0, %v946
        %948 = vmatmul.f32.gmra.mxu0 %v621
        %v949 = vpop.f32.mrf.mxu0
        %v950 = vadd.f32 0.0, %v949
        %951 = vmatmul.f32.gmra.mxu0 %v624
        %v952 = vpop.f32.mrf.mxu0
        %v953 = vadd.f32 0.0, %v952
        %954 = vmatmul.f32.gmra.mxu0 %v627
        %v955 = vpop.f32.mrf.mxu0
        %v956 = vadd.f32 0.0, %v955
        %957 = vmatmul.f32.gmra.mxu0 %v630
        %v958 = vpop.f32.mrf.mxu0
        %v959 = vadd.f32 0.0, %v958
        %960 = vmatmul.f32.gmra.mxu0 %v633
        %v961 = vpop.f32.mrf.mxu0
        %v962 = vadd.f32 0.0, %v961
        %963 = vmatmul.f32.gmra.mxu0 %v636
        %v964 = vpop.f32.mrf.mxu0
        %v965 = vadd.f32 0.0, %v964
        %966 = vmatmul.f32.gmra.mxu0 %v639
        %v967 = vpop.f32.mrf.mxu0
        %v968 = vadd.f32 0.0, %v967
        %969 = vmatmul.f32.gmra.mxu0 %v642
        %v970 = vpop.f32.mrf.mxu0
        %v971 = vadd.f32 0.0, %v970
        %972 = vmatmul.f32.gmra.mxu0 %v645
        %v973 = vpop.f32.mrf.mxu0
        %v974 = vadd.f32 0.0, %v973
        %975 = vmatmul.f32.gmra.mxu0 %v648
        %v976 = vpop.f32.mrf.mxu0
        %v977 = vadd.f32 0.0, %v976
        %978 = vmatmul.f32.gmra.mxu0 %v651
        %v979 = vpop.f32.mrf.mxu0
        %v980 = vadd.f32 0.0, %v979
        %981 = vmatmul.f32.gmra.mxu0 %v654
        %v982 = vpop.f32.mrf.mxu0
        %v983 = vadd.f32 0.0, %v982
        %984 = vmatmul.f32.gmra.mxu0 %v657
        %v985 = vpop.f32.mrf.mxu0
        %v986 = vadd.f32 0.0, %v985
        %987 = vmatmul.f32.gmra.mxu0 %v660
        %v988 = vpop.f32.mrf.mxu0
        %v989 = vadd.f32 0.0, %v988
        %990 = vmatmul.f32.gmra.mxu0 %v663
        %v991 = vpop.f32.mrf.mxu0
        %v992 = vadd.f32 0.0, %v991
        %993 = vmatmul.f32.gmra.mxu0 %v666
        %v994 = vpop.f32.mrf.mxu0
        %v995 = vadd.f32 0.0, %v994
        %996 = vmatmul.f32.gmra.mxu0 %v669
        %v997 = vpop.f32.mrf.mxu0
        %v998 = vadd.f32 0.0, %v997
        %999 = vmatmul.f32.gmra.mxu0 %v672
        %v1000 = vpop.f32.mrf.mxu0
        %v1001 = vadd.f32 0.0, %v1000
        %1002 = vmatmul.f32.gmra.mxu0 %v675
        %v1003 = vpop.f32.mrf.mxu0
        %v1004 = vadd.f32 0.0, %v1003
        %1005 = vmatmul.f32.gmra.mxu0 %v678
        %v1006 = vpop.f32.mrf.mxu0
        %v1007 = vadd.f32 0.0, %v1006
        %1008 = vmatmul.f32.gmra.mxu0 %v681
        %v1009 = vpop.f32.mrf.mxu0
        %v1010 = vadd.f32 0.0, %v1009
        %1011 = vmatmul.f32.gmra.mxu0 %v684
        %v1012 = vpop.f32.mrf.mxu0
        %v1013 = vadd.f32 0.0, %v1012
        %1014 = vmatmul.f32.gmra.mxu0 %v687
        %v1015 = vpop.f32.mrf.mxu0
        %v1016 = vadd.f32 0.0, %v1015
        %1017 = vmatmul.f32.gmra.mxu0 %v690
        %v1018 = vpop.f32.mrf.mxu0
        %v1019 = vadd.f32 0.0, %v1018
        %1020 = vmatmul.f32.gmra.mxu0 %v693
        %v1021 = vpop.f32.mrf.mxu0
        %v1022 = vadd.f32 0.0, %v1021
        %1023 = vmatmul.f32.gmra.mxu0 %v696
        %v1024 = vpop.f32.mrf.mxu0
        %v1025 = vadd.f32 0.0, %v1024
        %1026 = vmatmul.f32.gmra.mxu0 %v699
        %v1027 = vpop.f32.mrf.mxu0
        %v1028 = vadd.f32 0.0, %v1027
        %1029 = vmatmul.f32.gmra.mxu0 %v702
        %v1030 = vpop.f32.mrf.mxu0
        %v1031 = vadd.f32 0.0, %v1030
        %1032 = vmatmul.f32.gmra.mxu0 %v705
        %v1033 = vpop.f32.mrf.mxu0
        %v1034 = vadd.f32 0.0, %v1033
        %1035 = vmatmul.f32.gmra.mxu0 %v708
        %v1036 = vpop.f32.mrf.mxu0
        %v1037 = vadd.f32 0.0, %v1036
        %1038 = vmatmul.f32.gmra.mxu0 %v711
        %v1039 = vpop.f32.mrf.mxu0
        %v1040 = vadd.f32 0.0, %v1039
        %1041 = vmatmul.f32.gmra.mxu0 %v714
        %v1042 = vpop.f32.mrf.mxu0
        %v1043 = vadd.f32 0.0, %v1042
        %1044 = vmatmul.f32.gmra.mxu0 %v717
        %v1045 = vpop.f32.mrf.mxu0
        %v1046 = vadd.f32 0.0, %v1045
        %1047 = vmatmul.f32.gmra.mxu0 %v720
        %v1048 = vpop.f32.mrf.mxu0
        %v1049 = vadd.f32 0.0, %v1048
        %1050 = vmatmul.f32.gmra.mxu0 %v723
        %v1051 = vpop.f32.mrf.mxu0
        %v1052 = vadd.f32 0.0, %v1051
        %1053 = vmatmul.f32.gmra.mxu0 %v726
        %v1054 = vpop.f32.mrf.mxu0
        %v1055 = vadd.f32 0.0, %v1054
        %1056 = vmatmul.f32.gmra.mxu0 %v729
        %v1057 = vpop.f32.mrf.mxu0
        %v1058 = vadd.f32 0.0, %v1057
        %1059 = vmatmul.f32.gmra.mxu0 %v732
        %v1060 = vpop.f32.mrf.mxu0
        %v1061 = vadd.f32 0.0, %v1060
        %1062 = vmatmul.f32.gmra.mxu0 %v735
        %v1063 = vpop.f32.mrf.mxu0
        %v1064 = vadd.f32 0.0, %v1063
        %1065 = vmatmul.f32.gmra.mxu0 %v738
        %v1066 = vpop.f32.mrf.mxu0
        %v1067 = vadd.f32 0.0, %v1066
        %1068 = vmatmul.f32.gmra.mxu0 %v741
        %v1069 = vpop.f32.mrf.mxu0
        %v1070 = vadd.f32 0.0, %v1069
        %1071 = vmatmul.f32.gmra.mxu0 %v744
        %v1072 = vpop.f32.mrf.mxu0
        %v1073 = vadd.f32 0.0, %v1072
        %1074 = vmatmul.f32.gmra.mxu0 %v747
        %v1075 = vpop.f32.mrf.mxu0
        %v1076 = vadd.f32 0.0, %v1075
        %1077 = vdwg.mxu0
        %1078 = vst [vmem:[#allocation2] sm:$0xff] %v767
        %1079 = vst [vmem:[#allocation2 + $0x8] sm:$0xff] %v770
        %1080 = vst [vmem:[#allocation2 + $0x10] sm:$0xff] %v773
        %1081 = vst [vmem:[#allocation2 + $0x18] sm:$0xff] %v776
        %1082 = vst [vmem:[#allocation2 + $0x20] sm:$0xff] %v779
        %1083 = vst [vmem:[#allocation2 + $0x28] sm:$0xff] %v782
        %1084 = vst [vmem:[#allocation2 + $0x30] sm:$0xff] %v785
        %1085 = vst [vmem:[#allocation2 + $0x38] sm:$0xff] %v788
        %1086 = vst [vmem:[#allocation2 + $0x40] sm:$0xff] %v791
        %1087 = vst [vmem:[#allocation2 + $0x48] sm:$0xff] %v794
        %1088 = vst [vmem:[#allocation2 + $0x50] sm:$0xff] %v797
        %1089 = vst [vmem:[#allocation2 + $0x58] sm:$0xff] %v800
        %1090 = vst [vmem:[#allocation2 + $0x60] sm:$0xff] %v803
        %1091 = vst [vmem:[#allocation2 + $0x68] sm:$0xff] %v806
        %1092 = vst [vmem:[#allocation2 + $0x70] sm:$0xff] %v809
        %1093 = vst [vmem:[#allocation2 + $0x78] sm:$0xff] %v812
        %1094 = vst [vmem:[#allocation2 + $0x80] sm:$0xff] %v815
        %1095 = vst [vmem:[#allocation2 + $0x88] sm:$0xff] %v818
        %1096 = vst [vmem:[#allocation2 + $0x90] sm:$0xff] %v821
        %1097 = vst [vmem:[#allocation2 + $0x98] sm:$0xff] %v824
        %1098 = vst [vmem:[#allocation2 + $0xa0] sm:$0xff] %v827
        %1099 = vst [vmem:[#allocation2 + $0xa8] sm:$0xff] %v830
        %1100 = vst [vmem:[#allocation2 + $0xb0] sm:$0xff] %v833
        %1101 = vst [vmem:[#allocation2 + $0xb8] sm:$0xff] %v836
        %1102 = vst [vmem:[#allocation2 + $0xc0] sm:$0xff] %v839
        %1103 = vst [vmem:[#allocation2 + $0xc8] sm:$0xff] %v842
        %1104 = vst [vmem:[#allocation2 + $0xd0] sm:$0xff] %v845
        %1105 = vst [vmem:[#allocation2 + $0xd8] sm:$0xff] %v848
        %1106 = vst [vmem:[#allocation2 + $0xe0] sm:$0xff] %v851
        %1107 = vst [vmem:[#allocation2 + $0xe8] sm:$0xff] %v854
        %1108 = vst [vmem:[#allocation2 + $0xf0] sm:$0xff] %v857
        %1109 = vst [vmem:[#allocation2 + $0xf8] sm:$0xff] %v860
        %1110 = vst [vmem:[#allocation2 + $0x100] sm:$0xff] %v863
        %1111 = vst [vmem:[#allocation2 + $0x108] sm:$0xff] %v866
        %1112 = vst [vmem:[#allocation2 + $0x110] sm:$0xff] %v869
        %1113 = vst [vmem:[#allocation2 + $0x118] sm:$0xff] %v872
        %1114 = vst [vmem:[#allocation2 + $0x120] sm:$0xff] %v875
        %1115 = vst [vmem:[#allocation2 + $0x128] sm:$0xff] %v878
        %1116 = vst [vmem:[#allocation2 + $0x130] sm:$0xff] %v881
        %1117 = vst [vmem:[#allocation2 + $0x138] sm:$0xff] %v884
        %1118 = vst [vmem:[#allocation2 + $0x140] sm:$0xff] %v887
        %1119 = vst [vmem:[#allocation2 + $0x148] sm:$0xff] %v890
        %1120 = vst [vmem:[#allocation2 + $0x150] sm:$0xff] %v893
        %1121 = vst [vmem:[#allocation2 + $0x158] sm:$0xff] %v896
        %1122 = vst [vmem:[#allocation2 + $0x160] sm:$0xff] %v899
        %1123 = vst [vmem:[#allocation2 + $0x168] sm:$0xff] %v902
        %1124 = vst [vmem:[#allocation2 + $0x170] sm:$0xff] %v905
        %1125 = vst [vmem:[#allocation2 + $0x178] sm:$0xff] %v908
        %1126 = vst [vmem:[#allocation2 + $0x180] sm:$0xff] %v911
        %1127 = vst [vmem:[#allocation2 + $0x188] sm:$0xff] %v914
        %1128 = vst [vmem:[#allocation2 + $0x190] sm:$0xff] %v917
        %1129 = vst [vmem:[#allocation2 + $0x198] sm:$0xff] %v920
        %1130 = vst [vmem:[#allocation2 + $0x1a0] sm:$0xff] %v923
        %1131 = vst [vmem:[#allocation2 + $0x1a8] sm:$0xff] %v926
        %1132 = vst [vmem:[#allocation2 + $0x1b0] sm:$0xff] %v929
        %1133 = vst [vmem:[#allocation2 + $0x1b8] sm:$0xff] %v932
        %1134 = vst [vmem:[#allocation2 + $0x1c0] sm:$0xff] %v935
        %1135 = vst [vmem:[#allocation2 + $0x1c8] sm:$0xff] %v938
        %1136 = vst [vmem:[#allocation2 + $0x1d0] sm:$0xff] %v941
        %1137 = vst [vmem:[#allocation2 + $0x1d8] sm:$0xff] %v944
        %1138 = vst [vmem:[#allocation2 + $0x1e0] sm:$0xff] %v947
        %1139 = vst [vmem:[#allocation2 + $0x1e8] sm:$0xff] %v950
        %1140 = vst [vmem:[#allocation2 + $0x1f0] sm:$0xff] %v953
        %1141 = vst [vmem:[#allocation2 + $0x1f8] sm:$0xff] %v956
        %1142 = vst [vmem:[#allocation2 + $0x200] sm:$0xff] %v959
        %1143 = vst [vmem:[#allocation2 + $0x208] sm:$0xff] %v962
        %1144 = vst [vmem:[#allocation2 + $0x210] sm:$0xff] %v965
        %1145 = vst [vmem:[#allocation2 + $0x218] sm:$0xff] %v968
        %1146 = vst [vmem:[#allocation2 + $0x220] sm:$0xff] %v971
        %1147 = vst [vmem:[#allocation2 + $0x228] sm:$0xff] %v974
        %1148 = vst [vmem:[#allocation2 + $0x230] sm:$0xff] %v977
        %1149 = vst [vmem:[#allocation2 + $0x238] sm:$0xff] %v980
        %1150 = vst [vmem:[#allocation2 + $0x240] sm:$0xff] %v983
        %1151 = vst [vmem:[#allocation2 + $0x248] sm:$0xff] %v986
        %1152 = vst [vmem:[#allocation2 + $0x250] sm:$0xff] %v989
        %1153 = vst [vmem:[#allocation2 + $0x258] sm:$0xff] %v992
        %1154 = vst [vmem:[#allocation2 + $0x260] sm:$0xff] %v995
        %1155 = vst [vmem:[#allocation2 + $0x268] sm:$0xff] %v998
        %1156 = vst [vmem:[#allocation2 + $0x270] sm:$0xff] %v1001
        %1157 = vst [vmem:[#allocation2 + $0x278] sm:$0xff] %v1004
        %1158 = vst [vmem:[#allocation2 + $0x280] sm:$0xff] %v1007
        %1159 = vst [vmem:[#allocation2 + $0x288] sm:$0xff] %v1010
        %1160 = vst [vmem:[#allocation2 + $0x290] sm:$0xff] %v1013
        %1161 = vst [vmem:[#allocation2 + $0x298] sm:$0xff] %v1016
        %1162 = vst [vmem:[#allocation2 + $0x2a0] sm:$0xff] %v1019
        %1163 = vst [vmem:[#allocation2 + $0x2a8] sm:$0xff] %v1022
        %1164 = vst [vmem:[#allocation2 + $0x2b0] sm:$0xff] %v1025
        %1165 = vst [vmem:[#allocation2 + $0x2b8] sm:$0xff] %v1028
        %1166 = vst [vmem:[#allocation2 + $0x2c0] sm:$0xff] %v1031
        %1167 = vst [vmem:[#allocation2 + $0x2c8] sm:$0xff] %v1034
        %1168 = vst [vmem:[#allocation2 + $0x2d0] sm:$0xff] %v1037
        %1169 = vst [vmem:[#allocation2 + $0x2d8] sm:$0xff] %v1040
        %1170 = vst [vmem:[#allocation2 + $0x2e0] sm:$0xff] %v1043
        %1171 = vst [vmem:[#allocation2 + $0x2e8] sm:$0xff] %v1046
        %1172 = vst [vmem:[#allocation2 + $0x2f0] sm:$0xff] %v1049
        %1173 = vst [vmem:[#allocation2 + $0x2f8] sm:$0xff] %v1052
        %1174 = vst [vmem:[#allocation2 + $0x300] sm:$0xff] %v1055
        %1175 = vst [vmem:[#allocation2 + $0x308] sm:$0xff] %v1058
        %1176 = vst [vmem:[#allocation2 + $0x310] sm:$0xff] %v1061
        %1177 = vst [vmem:[#allocation2 + $0x318] sm:$0xff] %v1064
        %1178 = vst [vmem:[#allocation2 + $0x320] sm:$0xff] %v1067
        %1179 = vst [vmem:[#allocation2 + $0x328] sm:$0xff] %v1070
        %1180 = vst [vmem:[#allocation2 + $0x330] sm:$0xff] %v1073
        %1181 = vst [vmem:[#allocation2 + $0x338] sm:$0xff] %v1076
        %v1182 = vld [vmem:[#allocation2] sm:$0xff]
        %v1183 = vld [vmem:[#allocation2 + $0x8] sm:$0xff]
        %v1184 = vld [vmem:[#allocation2 + $0x10] sm:$0xff]
        %v1185 = vld [vmem:[#allocation2 + $0x18] sm:$0xff]
        %v1186 = vld [vmem:[#allocation2 + $0x20] sm:$0xff]
        %v1187 = vld [vmem:[#allocation2 + $0x28] sm:$0xff]
        %v1188 = vld [vmem:[#allocation2 + $0x30] sm:$0xff]
        %v1189 = vld [vmem:[#allocation2 + $0x38] sm:$0xff]
        %v1190 = vld [vmem:[#allocation2 + $0x40] sm:$0xff]
        %v1191 = vld [vmem:[#allocation2 + $0x48] sm:$0xff]
        %v1192 = vld [vmem:[#allocation2 + $0x50] sm:$0xff]
        %v1193 = vld [vmem:[#allocation2 + $0x58] sm:$0xff]
        %v1194 = vld [vmem:[#allocation2 + $0x60] sm:$0xff]
        %v1195 = vld [vmem:[#allocation2 + $0x68] sm:$0xff]
        %v1196 = vld [vmem:[#allocation2 + $0x70] sm:$0xff]
        %v1197 = vld [vmem:[#allocation2 + $0x78] sm:$0xff]
        %v1198 = vld [vmem:[#allocation2 + $0x80] sm:$0xff]
        %v1199 = vld [vmem:[#allocation2 + $0x88] sm:$0xff]
        %v1200 = vld [vmem:[#allocation2 + $0x90] sm:$0xff]
        %v1201 = vld [vmem:[#allocation2 + $0x98] sm:$0xff]
        %v1202 = vld [vmem:[#allocation2 + $0xa0] sm:$0xff]
        %v1203 = vld [vmem:[#allocation2 + $0xa8] sm:$0xff]
        %v1204 = vld [vmem:[#allocation2 + $0xb0] sm:$0xff]
        %v1205 = vld [vmem:[#allocation2 + $0xb8] sm:$0xff]
        %v1206 = vld [vmem:[#allocation2 + $0xc0] sm:$0xff]
        %v1207 = vld [vmem:[#allocation2 + $0xc8] sm:$0xff]
        %v1208 = vld [vmem:[#allocation2 + $0xd0] sm:$0xff]
        %v1209 = vld [vmem:[#allocation2 + $0xd8] sm:$0xff]
        %v1210 = vld [vmem:[#allocation2 + $0xe0] sm:$0xff]
        %v1211 = vld [vmem:[#allocation2 + $0xe8] sm:$0xff]
        %v1212 = vld [vmem:[#allocation2 + $0xf0] sm:$0xff]
        %v1213 = vld [vmem:[#allocation2 + $0xf8] sm:$0xff]
        %v1214 = vld [vmem:[#allocation2 + $0x100] sm:$0xff]
        %v1215 = vld [vmem:[#allocation2 + $0x108] sm:$0xff]
        %v1216 = vld [vmem:[#allocation2 + $0x110] sm:$0xff]
        %v1217 = vld [vmem:[#allocation2 + $0x118] sm:$0xff]
        %v1218 = vld [vmem:[#allocation2 + $0x120] sm:$0xff]
        %v1219 = vld [vmem:[#allocation2 + $0x128] sm:$0xff]
        %v1220 = vld [vmem:[#allocation2 + $0x130] sm:$0xff]
        %v1221 = vld [vmem:[#allocation2 + $0x138] sm:$0xff]
        %v1222 = vld [vmem:[#allocation2 + $0x140] sm:$0xff]
        %v1223 = vld [vmem:[#allocation2 + $0x148] sm:$0xff]
        %v1224 = vld [vmem:[#allocation2 + $0x150] sm:$0xff]
        %v1225 = vld [vmem:[#allocation2 + $0x158] sm:$0xff]
        %v1226 = vld [vmem:[#allocation2 + $0x160] sm:$0xff]
        %v1227 = vld [vmem:[#allocation2 + $0x168] sm:$0xff]
        %v1228 = vld [vmem:[#allocation2 + $0x170] sm:$0xff]
        %v1229 = vld [vmem:[#allocation2 + $0x178] sm:$0xff]
        %v1230 = vld [vmem:[#allocation2 + $0x180] sm:$0xff]
        %v1231 = vld [vmem:[#allocation2 + $0x188] sm:$0xff]
        %v1232 = vld [vmem:[#allocation2 + $0x190] sm:$0xff]
        %v1233 = vld [vmem:[#allocation2 + $0x198] sm:$0xff]
        %v1234 = vld [vmem:[#allocation2 + $0x1a0] sm:$0xff]
        %v1235 = vld [vmem:[#allocation2 + $0x1a8] sm:$0xff]
        %v1236 = vld [vmem:[#allocation2 + $0x1b0] sm:$0xff]
        %v1237 = vld [vmem:[#allocation2 + $0x1b8] sm:$0xff]
        %v1238 = vld [vmem:[#allocation2 + $0x1c0] sm:$0xff]
        %v1239 = vld [vmem:[#allocation2 + $0x1c8] sm:$0xff]
        %v1240 = vld [vmem:[#allocation2 + $0x1d0] sm:$0xff]
        %v1241 = vld [vmem:[#allocation2 + $0x1d8] sm:$0xff]
        %v1242 = vld [vmem:[#allocation2 + $0x1e0] sm:$0xff]
        %v1243 = vld [vmem:[#allocation2 + $0x1e8] sm:$0xff]
        %v1244 = vld [vmem:[#allocation2 + $0x1f0] sm:$0xff]
        %v1245 = vld [vmem:[#allocation2 + $0x1f8] sm:$0xff]
        %v1246 = vld [vmem:[#allocation2 + $0x200] sm:$0xff]
        %v1247 = vld [vmem:[#allocation2 + $0x208] sm:$0xff]
        %v1248 = vld [vmem:[#allocation2 + $0x210] sm:$0xff]
        %v1249 = vld [vmem:[#allocation2 + $0x218] sm:$0xff]
        %v1250 = vld [vmem:[#allocation2 + $0x220] sm:$0xff]
        %v1251 = vld [vmem:[#allocation2 + $0x228] sm:$0xff]
        %v1252 = vld [vmem:[#allocation2 + $0x230] sm:$0xff]
        %v1253 = vld [vmem:[#allocation2 + $0x238] sm:$0xff]
        %v1254 = vld [vmem:[#allocation2 + $0x240] sm:$0xff]
        %v1255 = vld [vmem:[#allocation2 + $0x248] sm:$0xff]
        %v1256 = vld [vmem:[#allocation2 + $0x250] sm:$0xff]
        %v1257 = vld [vmem:[#allocation2 + $0x258] sm:$0xff]
        %v1258 = vld [vmem:[#allocation2 + $0x260] sm:$0xff]
        %v1259 = vld [vmem:[#allocation2 + $0x268] sm:$0xff]
        %v1260 = vld [vmem:[#allocation2 + $0x270] sm:$0xff]
        %v1261 = vld [vmem:[#allocation2 + $0x278] sm:$0xff]
        %v1262 = vld [vmem:[#allocation2 + $0x280] sm:$0xff]
        %v1263 = vld [vmem:[#allocation2 + $0x288] sm:$0xff]
        %v1264 = vld [vmem:[#allocation2 + $0x290] sm:$0xff]
        %v1265 = vld [vmem:[#allocation2 + $0x298] sm:$0xff]
        %v1266 = vld [vmem:[#allocation2 + $0x2a0] sm:$0xff]
        %v1267 = vld [vmem:[#allocation2 + $0x2a8] sm:$0xff]
        %v1268 = vld [vmem:[#allocation2 + $0x2b0] sm:$0xff]
        %v1269 = vld [vmem:[#allocation2 + $0x2b8] sm:$0xff]
        %v1270 = vld [vmem:[#allocation2 + $0x2c0] sm:$0xff]
        %v1271 = vld [vmem:[#allocation2 + $0x2c8] sm:$0xff]
        %v1272 = vld [vmem:[#allocation2 + $0x2d0] sm:$0xff]
        %v1273 = vld [vmem:[#allocation2 + $0x2d8] sm:$0xff]
        %v1274 = vld [vmem:[#allocation2 + $0x2e0] sm:$0xff]
        %v1275 = vld [vmem:[#allocation2 + $0x2e8] sm:$0xff]
        %v1276 = vld [vmem:[#allocation2 + $0x2f0] sm:$0xff]
        %v1277 = vld [vmem:[#allocation2 + $0x2f8] sm:$0xff]
        %v1278 = vld [vmem:[#allocation2 + $0x300] sm:$0xff]
        %v1279 = vld [vmem:[#allocation2 + $0x308] sm:$0xff]
        %v1280 = vld [vmem:[#allocation2 + $0x310] sm:$0xff]
        %v1281 = vld [vmem:[#allocation2 + $0x318] sm:$0xff]
        %v1282 = vld [vmem:[#allocation2 + $0x320] sm:$0xff]
        %v1283 = vld [vmem:[#allocation2 + $0x328] sm:$0xff]
        %v1284 = vld [vmem:[#allocation2 + $0x330] sm:$0xff]
        %v1285 = vld [vmem:[#allocation2 + $0x338] sm:$0xff]
        %v1286 = vmax.f32 %v1182, %v1186
        %v1287 = vmax.f32 %v1183, %v1187
        %v1288 = vmax.f32 %v1184, %v1188
        %v1289 = vmax.f32 %v1185, %v1189
        %v1290 = vmax.f32 %v1190, %v1194
        %v1291 = vmax.f32 %v1191, %v1195
        %v1292 = vmax.f32 %v1192, %v1196
        %v1293 = vmax.f32 %v1193, %v1197
        %v1294 = vmax.f32 %v1198, %v1202
        %v1295 = vmax.f32 %v1199, %v1203
        %v1296 = vmax.f32 %v1200, %v1204
        %v1297 = vmax.f32 %v1201, %v1205
        %v1298 = vmax.f32 %v1206, %v1210
        %v1299 = vmax.f32 %v1207, %v1211
        %v1300 = vmax.f32 %v1208, %v1212
        %v1301 = vmax.f32 %v1209, %v1213
        %v1302 = vmax.f32 %v1214, %v1218
        %v1303 = vmax.f32 %v1215, %v1219
        %v1304 = vmax.f32 %v1216, %v1220
        %v1305 = vmax.f32 %v1217, %v1221
        %v1306 = vmax.f32 %v1222, %v1226
        %v1307 = vmax.f32 %v1223, %v1227
        %v1308 = vmax.f32 %v1224, %v1228
        %v1309 = vmax.f32 %v1225, %v1229
        %v1310 = vmax.f32 %v1230, %v1234
        %v1311 = vmax.f32 %v1231, %v1235
        %v1312 = vmax.f32 %v1232, %v1236
        %v1313 = vmax.f32 %v1233, %v1237
        %v1314 = vmax.f32 %v1238, %v1242
        %v1315 = vmax.f32 %v1239, %v1243
        %v1316 = vmax.f32 %v1240, %v1244
        %v1317 = vmax.f32 %v1241, %v1245
        %v1318 = vmax.f32 %v1246, %v1250
        %v1319 = vmax.f32 %v1247, %v1251
        %v1320 = vmax.f32 %v1248, %v1252
        %v1321 = vmax.f32 %v1249, %v1253
        %v1322 = vmax.f32 %v1254, %v1258
        %v1323 = vmax.f32 %v1255, %v1259
        %v1324 = vmax.f32 %v1256, %v1260
        %v1325 = vmax.f32 %v1257, %v1261
        %v1326 = vmax.f32 %v1262, %v1266
        %v1327 = vmax.f32 %v1263, %v1267
        %v1328 = vmax.f32 %v1264, %v1268
        %v1329 = vmax.f32 %v1265, %v1269
        %v1330 = vmax.f32 %v1270, %v1274
        %v1331 = vmax.f32 %v1271, %v1275
        %v1332 = vmax.f32 %v1272, %v1276
        %v1333 = vmax.f32 %v1273, %v1277
        %v1334 = vmax.f32 %v1278, %v1282
        %v1335 = vmax.f32 %v1279, %v1283
        %v1336 = vmax.f32 %v1280, %v1284
        %v1337 = vmax.f32 %v1281, %v1285
        %1338 = vst [vmem:[#allocation3] sm:$0xff] %v1286
        %1339 = vst [vmem:[#allocation3 + $0x8] sm:$0xff] %v1287
        %1340 = vst [vmem:[#allocation3 + $0x10] sm:$0xff] %v1288
        %1341 = vst [vmem:[#allocation3 + $0x18] sm:$0xff] %v1289
        %1342 = vst [vmem:[#allocation3 + $0x20] sm:$0xff] %v1290
        %1343 = vst [vmem:[#allocation3 + $0x28] sm:$0xff] %v1291
        %1344 = vst [vmem:[#allocation3 + $0x30] sm:$0xff] %v1292
        %1345 = vst [vmem:[#allocation3 + $0x38] sm:$0xff] %v1293
        %1346 = vst [vmem:[#allocation3 + $0x40] sm:$0xff] %v1294
        %1347 = vst [vmem:[#allocation3 + $0x48] sm:$0xff] %v1295
        %1348 = vst [vmem:[#allocation3 + $0x50] sm:$0xff] %v1296
        %1349 = vst [vmem:[#allocation3 + $0x58] sm:$0xff] %v1297
        %1350 = vst [vmem:[#allocation3 + $0x60] sm:$0xff] %v1298
        %1351 = vst [vmem:[#allocation3 + $0x68] sm:$0xff] %v1299
        %1352 = vst [vmem:[#allocation3 + $0x70] sm:$0xff] %v1300
        %1353 = vst [vmem:[#allocation3 + $0x78] sm:$0xff] %v1301
        %1354 = vst [vmem:[#allocation3 + $0x80] sm:$0xff] %v1302
        %1355 = vst [vmem:[#allocation3 + $0x88] sm:$0xff] %v1303
        %1356 = vst [vmem:[#allocation3 + $0x90] sm:$0xff] %v1304
        %1357 = vst [vmem:[#allocation3 + $0x98] sm:$0xff] %v1305
        %1358 = vst [vmem:[#allocation3 + $0xa0] sm:$0xff] %v1306
        %1359 = vst [vmem:[#allocation3 + $0xa8] sm:$0xff] %v1307
        %1360 = vst [vmem:[#allocation3 + $0xb0] sm:$0xff] %v1308
        %1361 = vst [vmem:[#allocation3 + $0xb8] sm:$0xff] %v1309
        %1362 = vst [vmem:[#allocation3 + $0xc0] sm:$0xff] %v1310
        %1363 = vst [vmem:[#allocation3 + $0xc8] sm:$0xff] %v1311
        %1364 = vst [vmem:[#allocation3 + $0xd0] sm:$0xff] %v1312
        %1365 = vst [vmem:[#allocation3 + $0xd8] sm:$0xff] %v1313
        %1366 = vst [vmem:[#allocation3 + $0xe0] sm:$0xff] %v1314
        %1367 = vst [vmem:[#allocation3 + $0xe8] sm:$0xff] %v1315
        %1368 = vst [vmem:[#allocation3 + $0xf0] sm:$0xff] %v1316
        %1369 = vst [vmem:[#allocation3 + $0xf8] sm:$0xff] %v1317
        %1370 = vst [vmem:[#allocation3 + $0x100] sm:$0xff] %v1318
        %1371 = vst [vmem:[#allocation3 + $0x108] sm:$0xff] %v1319
        %1372 = vst [vmem:[#allocation3 + $0x110] sm:$0xff] %v1320
        %1373 = vst [vmem:[#allocation3 + $0x118] sm:$0xff] %v1321
        %1374 = vst [vmem:[#allocation3 + $0x120] sm:$0xff] %v1322
        %1375 = vst [vmem:[#allocation3 + $0x128] sm:$0xff] %v1323
        %1376 = vst [vmem:[#allocation3 + $0x130] sm:$0xff] %v1324
        %1377 = vst [vmem:[#allocation3 + $0x138] sm:$0xff] %v1325
        %1378 = vst [vmem:[#allocation3 + $0x140] sm:$0xff] %v1326
        %1379 = vst [vmem:[#allocation3 + $0x148] sm:$0xff] %v1327
        %1380 = vst [vmem:[#allocation3 + $0x150] sm:$0xff] %v1328
        %1381 = vst [vmem:[#allocation3 + $0x158] sm:$0xff] %v1329
        %1382 = vst [vmem:[#allocation3 + $0x160] sm:$0xff] %v1330
        %1383 = vst [vmem:[#allocation3 + $0x168] sm:$0xff] %v1331
        %1384 = vst [vmem:[#allocation3 + $0x170] sm:$0xff] %v1332
        %1385 = vst [vmem:[#allocation3 + $0x178] sm:$0xff] %v1333
        %1386 = vst [vmem:[#allocation3 + $0x180] sm:$0xff] %v1334
        %1387 = vst [vmem:[#allocation3 + $0x188] sm:$0xff] %v1335
        %1388 = vst [vmem:[#allocation3 + $0x190] sm:$0xff] %v1336
        %1389 = vst [vmem:[#allocation3 + $0x198] sm:$0xff] %v1337
        %1390 = vst [vmem:[#allocation4 + $0xd] sm:$0x7] 0.0
        %1391 = vst [vmem:[#allocation4 + $0x1d] sm:$0x7] 0.0
        %1392 = vst [vmem:[#allocation4 + $0x2d] sm:$0x7] 0.0
        %1393 = vst [vmem:[#allocation4 + $0x3d] sm:$0x7] 0.0
        %1394 = vst [vmem:[#allocation4 + $0x4d] sm:$0x7] 0.0
        %1395 = vst [vmem:[#allocation4 + $0x5d] sm:$0x7] 0.0
        %1396 = vst [vmem:[#allocation4 + $0x6d] sm:$0x7] 0.0
        %1397 = vst [vmem:[#allocation4 + $0x7d] sm:$0x7] 0.0
        %1398 = vst [vmem:[#allocation4 + $0x8d] sm:$0x7] 0.0
        %1399 = vst [vmem:[#allocation4 + $0x9d] sm:$0x7] 0.0
        %1400 = vst [vmem:[#allocation4 + $0xad] sm:$0x7] 0.0
        %1401 = vst [vmem:[#allocation4 + $0xbd] sm:$0x7] 0.0
        %1402 = vst [vmem:[#allocation4 + $0xcd] sm:$0x7] 0.0
        %v1403 = vld [vmem:[#allocation3] ss:$2 sm:$0xff]
        %s1404 = scalar_lea.vmem [#allocation3], 16
        %v1405 = vld [vmem:[%s1404] ss:$2 sm:$0x1f]
        %s1406 = scalar_lea.vmem [#allocation3], 32
        %v1407 = vld [vmem:[%s1406] ss:$2 sm:$0xff]
        %s1408 = scalar_lea.vmem [#allocation3], 48
        %v1409 = vld [vmem:[%s1408] ss:$2 sm:$0x1f]
        %s1410 = scalar_lea.vmem [#allocation3], 64
        %v1411 = vld [vmem:[%s1410] ss:$2 sm:$0xff]
        %s1412 = scalar_lea.vmem [#allocation3], 80
        %v1413 = vld [vmem:[%s1412] ss:$2 sm:$0x1f]
        %s1414 = scalar_lea.vmem [#allocation3], 96
        %v1415 = vld [vmem:[%s1414] ss:$2 sm:$0xff]
        %s1416 = scalar_lea.vmem [#allocation3], 112
        %v1417 = vld [vmem:[%s1416] ss:$2 sm:$0x1f]
        %s1418 = scalar_lea.vmem [#allocation3], 128
        %v1419 = vld [vmem:[%s1418] ss:$2 sm:$0xff]
        %s1420 = scalar_lea.vmem [#allocation3], 144
        %v1421 = vld [vmem:[%s1420] ss:$2 sm:$0x1f]
        %s1422 = scalar_lea.vmem [#allocation3], 160
        %v1423 = vld [vmem:[%s1422] ss:$2 sm:$0xff]
        %s1424 = scalar_lea.vmem [#allocation3], 176
        %v1425 = vld [vmem:[%s1424] ss:$2 sm:$0x1f]
        %s1426 = scalar_lea.vmem [#allocation3], 192
        %v1427 = vld [vmem:[%s1426] ss:$2 sm:$0xff]
        %s1428 = scalar_lea.vmem [#allocation3], 208
        %v1429 = vld [vmem:[%s1428] ss:$2 sm:$0x1f]
        %s1430 = scalar_lea.vmem [#allocation3], 224
        %v1431 = vld [vmem:[%s1430] ss:$2 sm:$0xff]
        %s1432 = scalar_lea.vmem [#allocation3], 240
        %v1433 = vld [vmem:[%s1432] ss:$2 sm:$0x1f]
        %s1434 = scalar_lea.vmem [#allocation3], 256
        %v1435 = vld [vmem:[%s1434] ss:$2 sm:$0xff]
        %s1436 = scalar_lea.vmem [#allocation3], 272
        %v1437 = vld [vmem:[%s1436] ss:$2 sm:$0x1f]
        %s1438 = scalar_lea.vmem [#allocation3], 288
        %v1439 = vld [vmem:[%s1438] ss:$2 sm:$0xff]
        %s1440 = scalar_lea.vmem [#allocation3], 304
        %v1441 = vld [vmem:[%s1440] ss:$2 sm:$0x1f]
        %s1442 = scalar_lea.vmem [#allocation3], 320
        %v1443 = vld [vmem:[%s1442] ss:$2 sm:$0xff]
        %s1444 = scalar_lea.vmem [#allocation3], 336
        %v1445 = vld [vmem:[%s1444] ss:$2 sm:$0x1f]
        %s1446 = scalar_lea.vmem [#allocation3], 352
        %v1447 = vld [vmem:[%s1446] ss:$2 sm:$0xff]
        %s1448 = scalar_lea.vmem [#allocation3], 368
        %v1449 = vld [vmem:[%s1448] ss:$2 sm:$0x1f]
        %s1450 = scalar_lea.vmem [#allocation3], 384
        %v1451 = vld [vmem:[%s1450] ss:$2 sm:$0xff]
        %s1452 = scalar_lea.vmem [#allocation3], 400
        %v1453 = vld [vmem:[%s1452] ss:$2 sm:$0x1f]
        %s1454 = scalar_lea.vmem [#allocation3], 1
        %v1455 = vld [vmem:[%s1454] ss:$2 sm:$0xff]
        %s1456 = scalar_lea.vmem [#allocation3], 17
        %v1457 = vld [vmem:[%s1456] ss:$2 sm:$0x1f]
        %s1458 = scalar_lea.vmem [#allocation3], 33
        %v1459 = vld [vmem:[%s1458] ss:$2 sm:$0xff]
        %s1460 = scalar_lea.vmem [#allocation3], 49
        %v1461 = vld [vmem:[%s1460] ss:$2 sm:$0x1f]
        %s1462 = scalar_lea.vmem [#allocation3], 65
        %v1463 = vld [vmem:[%s1462] ss:$2 sm:$0xff]
        %s1464 = scalar_lea.vmem [#allocation3], 81
        %v1465 = vld [vmem:[%s1464] ss:$2 sm:$0x1f]
        %s1466 = scalar_lea.vmem [#allocation3], 97
        %v1467 = vld [vmem:[%s1466] ss:$2 sm:$0xff]
        %s1468 = scalar_lea.vmem [#allocation3], 113
        %v1469 = vld [vmem:[%s1468] ss:$2 sm:$0x1f]
        %s1470 = scalar_lea.vmem [#allocation3], 129
        %v1471 = vld [vmem:[%s1470] ss:$2 sm:$0xff]
        %s1472 = scalar_lea.vmem [#allocation3], 145
        %v1473 = vld [vmem:[%s1472] ss:$2 sm:$0x1f]
        %s1474 = scalar_lea.vmem [#allocation3], 161
        %v1475 = vld [vmem:[%s1474] ss:$2 sm:$0xff]
        %s1476 = scalar_lea.vmem [#allocation3], 177
        %v1477 = vld [vmem:[%s1476] ss:$2 sm:$0x1f]
        %s1478 = scalar_lea.vmem [#allocation3], 193
        %v1479 = vld [vmem:[%s1478] ss:$2 sm:$0xff]
        %s1480 = scalar_lea.vmem [#allocation3], 209
        %v1481 = vld [vmem:[%s1480] ss:$2 sm:$0x1f]
        %s1482 = scalar_lea.vmem [#allocation3], 225
        %v1483 = vld [vmem:[%s1482] ss:$2 sm:$0xff]
        %s1484 = scalar_lea.vmem [#allocation3], 241
        %v1485 = vld [vmem:[%s1484] ss:$2 sm:$0x1f]
        %s1486 = scalar_lea.vmem [#allocation3], 257
        %v1487 = vld [vmem:[%s1486] ss:$2 sm:$0xff]
        %s1488 = scalar_lea.vmem [#allocation3], 273
        %v1489 = vld [vmem:[%s1488] ss:$2 sm:$0x1f]
        %s1490 = scalar_lea.vmem [#allocation3], 289
        %v1491 = vld [vmem:[%s1490] ss:$2 sm:$0xff]
        %s1492 = scalar_lea.vmem [#allocation3], 305
        %v1493 = vld [vmem:[%s1492] ss:$2 sm:$0x1f]
        %s1494 = scalar_lea.vmem [#allocation3], 321
        %v1495 = vld [vmem:[%s1494] ss:$2 sm:$0xff]
        %s1496 = scalar_lea.vmem [#allocation3], 337
        %v1497 = vld [vmem:[%s1496] ss:$2 sm:$0x1f]
        %s1498 = scalar_lea.vmem [#allocation3], 353
        %v1499 = vld [vmem:[%s1498] ss:$2 sm:$0xff]
        %s1500 = scalar_lea.vmem [#allocation3], 369
        %v1501 = vld [vmem:[%s1500] ss:$2 sm:$0x1f]
        %s1502 = scalar_lea.vmem [#allocation3], 385
        %v1503 = vld [vmem:[%s1502] ss:$2 sm:$0xff]
        %s1504 = scalar_lea.vmem [#allocation3], 401
        %v1505 = vld [vmem:[%s1504] ss:$2 sm:$0x1f]
        %v1506 = vmax.f32 %v1403, %v1455
        %v1507 = vmax.f32 %v1405, %v1457
        %v1508 = vmax.f32 %v1407, %v1459
        %v1509 = vmax.f32 %v1409, %v1461
        %v1510 = vmax.f32 %v1411, %v1463
        %v1511 = vmax.f32 %v1413, %v1465
        %v1512 = vmax.f32 %v1415, %v1467
        %v1513 = vmax.f32 %v1417, %v1469
        %v1514 = vmax.f32 %v1419, %v1471
        %v1515 = vmax.f32 %v1421, %v1473
        %v1516 = vmax.f32 %v1423, %v1475
        %v1517 = vmax.f32 %v1425, %v1477
        %v1518 = vmax.f32 %v1427, %v1479
        %v1519 = vmax.f32 %v1429, %v1481
        %v1520 = vmax.f32 %v1431, %v1483
        %v1521 = vmax.f32 %v1433, %v1485
        %v1522 = vmax.f32 %v1435, %v1487
        %v1523 = vmax.f32 %v1437, %v1489
        %v1524 = vmax.f32 %v1439, %v1491
        %v1525 = vmax.f32 %v1441, %v1493
        %v1526 = vmax.f32 %v1443, %v1495
        %v1527 = vmax.f32 %v1445, %v1497
        %v1528 = vmax.f32 %v1447, %v1499
        %v1529 = vmax.f32 %v1449, %v1501
        %v1530 = vmax.f32 %v1451, %v1503
        %v1531 = vmax.f32 %v1453, %v1505
        %v1532 = vld [vmem:[%s2] sm:$0x1]
        %v1534 = vperm.slane %v1532, 0
        %v1536 = vadd.f32 %v1506, %v1534
        %v1537 = vadd.f32 %v1507, %v1534
        %v1538 = vadd.f32 %v1508, %v1534
        %v1539 = vadd.f32 %v1509, %v1534
        %v1540 = vadd.f32 %v1510, %v1534
        %v1541 = vadd.f32 %v1511, %v1534
        %v1542 = vadd.f32 %v1512, %v1534
        %v1543 = vadd.f32 %v1513, %v1534
        %v1544 = vadd.f32 %v1514, %v1534
        %v1545 = vadd.f32 %v1515, %v1534
        %v1546 = vadd.f32 %v1516, %v1534
        %v1547 = vadd.f32 %v1517, %v1534
        %v1548 = vadd.f32 %v1518, %v1534
        %v1549 = vadd.f32 %v1519, %v1534
        %v1550 = vadd.f32 %v1520, %v1534
        %v1551 = vadd.f32 %v1521, %v1534
        %v1552 = vadd.f32 %v1522, %v1534
        %v1553 = vadd.f32 %v1523, %v1534
        %v1554 = vadd.f32 %v1524, %v1534
        %v1555 = vadd.f32 %v1525, %v1534
        %v1556 = vadd.f32 %v1526, %v1534
        %v1557 = vadd.f32 %v1527, %v1534
        %v1558 = vadd.f32 %v1528, %v1534
        %v1559 = vadd.f32 %v1529, %v1534
        %v1560 = vadd.f32 %v1530, %v1534
        %v1561 = vadd.f32 %v1531, %v1534
        %v1562 = vmax.f32 %v1536, 0.0
        %v1563 = vmax.f32 %v1537, 0.0
        %v1564 = vmax.f32 %v1538, 0.0
        %v1565 = vmax.f32 %v1539, 0.0
        %v1566 = vmax.f32 %v1540, 0.0
        %v1567 = vmax.f32 %v1541, 0.0
        %v1568 = vmax.f32 %v1542, 0.0
        %v1569 = vmax.f32 %v1543, 0.0
        %v1570 = vmax.f32 %v1544, 0.0
        %v1571 = vmax.f32 %v1545, 0.0
        %v1572 = vmax.f32 %v1546, 0.0
        %v1573 = vmax.f32 %v1547, 0.0
        %v1574 = vmax.f32 %v1548, 0.0
        %v1575 = vmax.f32 %v1549, 0.0
        %v1576 = vmax.f32 %v1550, 0.0
        %v1577 = vmax.f32 %v1551, 0.0
        %v1578 = vmax.f32 %v1552, 0.0
        %v1579 = vmax.f32 %v1553, 0.0
        %v1580 = vmax.f32 %v1554, 0.0
        %v1581 = vmax.f32 %v1555, 0.0
        %v1582 = vmax.f32 %v1556, 0.0
        %v1583 = vmax.f32 %v1557, 0.0
        %v1584 = vmax.f32 %v1558, 0.0
        %v1585 = vmax.f32 %v1559, 0.0
        %v1586 = vmax.f32 %v1560, 0.0
        %v1587 = vmax.f32 %v1561, 0.0
        %s1588 = scalar_lea.vmem [#allocation3], 2
        %v1589 = vld [vmem:[%s1588] ss:$2 sm:$0xff]
        %s1590 = scalar_lea.vmem [#allocation3], 18
        %v1591 = vld [vmem:[%s1590] ss:$2 sm:$0x1f]
        %s1592 = scalar_lea.vmem [#allocation3], 34
        %v1593 = vld [vmem:[%s1592] ss:$2 sm:$0xff]
        %s1594 = scalar_lea.vmem [#allocation3], 50
        %v1595 = vld [vmem:[%s1594] ss:$2 sm:$0x1f]
        %s1596 = scalar_lea.vmem [#allocation3], 66
        %v1597 = vld [vmem:[%s1596] ss:$2 sm:$0xff]
        %s1598 = scalar_lea.vmem [#allocation3], 82
        %v1599 = vld [vmem:[%s1598] ss:$2 sm:$0x1f]
        %s1600 = scalar_lea.vmem [#allocation3], 98
        %v1601 = vld [vmem:[%s1600] ss:$2 sm:$0xff]
        %s1602 = scalar_lea.vmem [#allocation3], 114
        %v1603 = vld [vmem:[%s1602] ss:$2 sm:$0x1f]
        %s1604 = scalar_lea.vmem [#allocation3], 130
        %v1605 = vld [vmem:[%s1604] ss:$2 sm:$0xff]
        %s1606 = scalar_lea.vmem [#allocation3], 146
        %v1607 = vld [vmem:[%s1606] ss:$2 sm:$0x1f]
        %s1608 = scalar_lea.vmem [#allocation3], 162
        %v1609 = vld [vmem:[%s1608] ss:$2 sm:$0xff]
        %s1610 = scalar_lea.vmem [#allocation3], 178
        %v1611 = vld [vmem:[%s1610] ss:$2 sm:$0x1f]
        %s1612 = scalar_lea.vmem [#allocation3], 194
        %v1613 = vld [vmem:[%s1612] ss:$2 sm:$0xff]
        %s1614 = scalar_lea.vmem [#allocation3], 210
        %v1615 = vld [vmem:[%s1614] ss:$2 sm:$0x1f]
        %s1616 = scalar_lea.vmem [#allocation3], 226
        %v1617 = vld [vmem:[%s1616] ss:$2 sm:$0xff]
        %s1618 = scalar_lea.vmem [#allocation3], 242
        %v1619 = vld [vmem:[%s1618] ss:$2 sm:$0x1f]
        %s1620 = scalar_lea.vmem [#allocation3], 258
        %v1621 = vld [vmem:[%s1620] ss:$2 sm:$0xff]
        %s1622 = scalar_lea.vmem [#allocation3], 274
        %v1623 = vld [vmem:[%s1622] ss:$2 sm:$0x1f]
        %s1624 = scalar_lea.vmem [#allocation3], 290
        %v1625 = vld [vmem:[%s1624] ss:$2 sm:$0xff]
        %s1626 = scalar_lea.vmem [#allocation3], 306
        %v1627 = vld [vmem:[%s1626] ss:$2 sm:$0x1f]
        %s1628 = scalar_lea.vmem [#allocation3], 322
        %v1629 = vld [vmem:[%s1628] ss:$2 sm:$0xff]
        %s1630 = scalar_lea.vmem [#allocation3], 338
        %v1631 = vld [vmem:[%s1630] ss:$2 sm:$0x1f]
        %s1632 = scalar_lea.vmem [#allocation3], 354
        %v1633 = vld [vmem:[%s1632] ss:$2 sm:$0xff]
        %s1634 = scalar_lea.vmem [#allocation3], 370
        %v1635 = vld [vmem:[%s1634] ss:$2 sm:$0x1f]
        %s1636 = scalar_lea.vmem [#allocation3], 386
        %v1637 = vld [vmem:[%s1636] ss:$2 sm:$0xff]
        %s1638 = scalar_lea.vmem [#allocation3], 402
        %v1639 = vld [vmem:[%s1638] ss:$2 sm:$0x1f]
        %s1640 = scalar_lea.vmem [#allocation3], 3
        %v1641 = vld [vmem:[%s1640] ss:$2 sm:$0xff]
        %s1642 = scalar_lea.vmem [#allocation3], 19
        %v1643 = vld [vmem:[%s1642] ss:$2 sm:$0x1f]
        %s1644 = scalar_lea.vmem [#allocation3], 35
        %v1645 = vld [vmem:[%s1644] ss:$2 sm:$0xff]
        %s1646 = scalar_lea.vmem [#allocation3], 51
        %v1647 = vld [vmem:[%s1646] ss:$2 sm:$0x1f]
        %s1648 = scalar_lea.vmem [#allocation3], 67
        %v1649 = vld [vmem:[%s1648] ss:$2 sm:$0xff]
        %s1650 = scalar_lea.vmem [#allocation3], 83
        %v1651 = vld [vmem:[%s1650] ss:$2 sm:$0x1f]
        %s1652 = scalar_lea.vmem [#allocation3], 99
        %v1653 = vld [vmem:[%s1652] ss:$2 sm:$0xff]
        %s1654 = scalar_lea.vmem [#allocation3], 115
        %v1655 = vld [vmem:[%s1654] ss:$2 sm:$0x1f]
        %s1656 = scalar_lea.vmem [#allocation3], 131
        %v1657 = vld [vmem:[%s1656] ss:$2 sm:$0xff]
        %s1658 = scalar_lea.vmem [#allocation3], 147
        %v1659 = vld [vmem:[%s1658] ss:$2 sm:$0x1f]
        %s1660 = scalar_lea.vmem [#allocation3], 163
        %v1661 = vld [vmem:[%s1660] ss:$2 sm:$0xff]
        %s1662 = scalar_lea.vmem [#allocation3], 179
        %v1663 = vld [vmem:[%s1662] ss:$2 sm:$0x1f]
        %s1664 = scalar_lea.vmem [#allocation3], 195
        %v1665 = vld [vmem:[%s1664] ss:$2 sm:$0xff]
        %s1666 = scalar_lea.vmem [#allocation3], 211
        %v1667 = vld [vmem:[%s1666] ss:$2 sm:$0x1f]
        %s1668 = scalar_lea.vmem [#allocation3], 227
        %v1669 = vld [vmem:[%s1668] ss:$2 sm:$0xff]
        %s1670 = scalar_lea.vmem [#allocation3], 243
        %v1671 = vld [vmem:[%s1670] ss:$2 sm:$0x1f]
        %s1672 = scalar_lea.vmem [#allocation3], 259
        %v1673 = vld [vmem:[%s1672] ss:$2 sm:$0xff]
        %s1674 = scalar_lea.vmem [#allocation3], 275
        %v1675 = vld [vmem:[%s1674] ss:$2 sm:$0x1f]
        %s1676 = scalar_lea.vmem [#allocation3], 291
        %v1677 = vld [vmem:[%s1676] ss:$2 sm:$0xff]
        %s1678 = scalar_lea.vmem [#allocation3], 307
        %v1679 = vld [vmem:[%s1678] ss:$2 sm:$0x1f]
        %s1680 = scalar_lea.vmem [#allocation3], 323
        %v1681 = vld [vmem:[%s1680] ss:$2 sm:$0xff]
        %s1682 = scalar_lea.vmem [#allocation3], 339
        %v1683 = vld [vmem:[%s1682] ss:$2 sm:$0x1f]
        %s1684 = scalar_lea.vmem [#allocation3], 355
        %v1685 = vld [vmem:[%s1684] ss:$2 sm:$0xff]
        %s1686 = scalar_lea.vmem [#allocation3], 371
        %v1687 = vld [vmem:[%s1686] ss:$2 sm:$0x1f]
        %s1688 = scalar_lea.vmem [#allocation3], 387
        %v1689 = vld [vmem:[%s1688] ss:$2 sm:$0xff]
        %s1690 = scalar_lea.vmem [#allocation3], 403
        %v1691 = vld [vmem:[%s1690] ss:$2 sm:$0x1f]
        %v1692 = vmax.f32 %v1589, %v1641
        %v1693 = vmax.f32 %v1591, %v1643
        %v1694 = vmax.f32 %v1593, %v1645
        %v1695 = vmax.f32 %v1595, %v1647
        %v1696 = vmax.f32 %v1597, %v1649
        %v1697 = vmax.f32 %v1599, %v1651
        %v1698 = vmax.f32 %v1601, %v1653
        %v1699 = vmax.f32 %v1603, %v1655
        %v1700 = vmax.f32 %v1605, %v1657
        %v1701 = vmax.f32 %v1607, %v1659
        %v1702 = vmax.f32 %v1609, %v1661
        %v1703 = vmax.f32 %v1611, %v1663
        %v1704 = vmax.f32 %v1613, %v1665
        %v1705 = vmax.f32 %v1615, %v1667
        %v1706 = vmax.f32 %v1617, %v1669
        %v1707 = vmax.f32 %v1619, %v1671
        %v1708 = vmax.f32 %v1621, %v1673
        %v1709 = vmax.f32 %v1623, %v1675
        %v1710 = vmax.f32 %v1625, %v1677
        %v1711 = vmax.f32 %v1627, %v1679
        %v1712 = vmax.f32 %v1629, %v1681
        %v1713 = vmax.f32 %v1631, %v1683
        %v1714 = vmax.f32 %v1633, %v1685
        %v1715 = vmax.f32 %v1635, %v1687
        %v1716 = vmax.f32 %v1637, %v1689
        %v1717 = vmax.f32 %v1639, %v1691
        %v1718 = vadd.f32 %v1692, %v1534
        %v1719 = vadd.f32 %v1693, %v1534
        %v1720 = vadd.f32 %v1694, %v1534
        %v1721 = vadd.f32 %v1695, %v1534
        %v1722 = vadd.f32 %v1696, %v1534
        %v1723 = vadd.f32 %v1697, %v1534
        %v1724 = vadd.f32 %v1698, %v1534
        %v1725 = vadd.f32 %v1699, %v1534
        %v1726 = vadd.f32 %v1700, %v1534
        %v1727 = vadd.f32 %v1701, %v1534
        %v1728 = vadd.f32 %v1702, %v1534
        %v1729 = vadd.f32 %v1703, %v1534
        %v1730 = vadd.f32 %v1704, %v1534
        %v1731 = vadd.f32 %v1705, %v1534
        %v1732 = vadd.f32 %v1706, %v1534
        %v1733 = vadd.f32 %v1707, %v1534
        %v1734 = vadd.f32 %v1708, %v1534
        %v1735 = vadd.f32 %v1709, %v1534
        %v1736 = vadd.f32 %v1710, %v1534
        %v1737 = vadd.f32 %v1711, %v1534
        %v1738 = vadd.f32 %v1712, %v1534
        %v1739 = vadd.f32 %v1713, %v1534
        %v1740 = vadd.f32 %v1714, %v1534
        %v1741 = vadd.f32 %v1715, %v1534
        %v1742 = vadd.f32 %v1716, %v1534
        %v1743 = vadd.f32 %v1717, %v1534
        %v1744 = vmax.f32 %v1718, 0.0
        %v1745 = vmax.f32 %v1719, 0.0
        %v1746 = vmax.f32 %v1720, 0.0
        %v1747 = vmax.f32 %v1721, 0.0
        %v1748 = vmax.f32 %v1722, 0.0
        %v1749 = vmax.f32 %v1723, 0.0
        %v1750 = vmax.f32 %v1724, 0.0
        %v1751 = vmax.f32 %v1725, 0.0
        %v1752 = vmax.f32 %v1726, 0.0
        %v1753 = vmax.f32 %v1727, 0.0
        %v1754 = vmax.f32 %v1728, 0.0
        %v1755 = vmax.f32 %v1729, 0.0
        %v1756 = vmax.f32 %v1730, 0.0
        %v1757 = vmax.f32 %v1731, 0.0
        %v1758 = vmax.f32 %v1732, 0.0
        %v1759 = vmax.f32 %v1733, 0.0
        %v1760 = vmax.f32 %v1734, 0.0
        %v1761 = vmax.f32 %v1735, 0.0
        %v1762 = vmax.f32 %v1736, 0.0
        %v1763 = vmax.f32 %v1737, 0.0
        %v1764 = vmax.f32 %v1738, 0.0
        %v1765 = vmax.f32 %v1739, 0.0
        %v1766 = vmax.f32 %v1740, 0.0
        %v1767 = vmax.f32 %v1741, 0.0
        %v1768 = vmax.f32 %v1742, 0.0
        %v1769 = vmax.f32 %v1743, 0.0
        %1770 = vrot.lane.b32.xlu0 %v1744, 40
        %v1771 = vpop.permute.xlu0 %1770
        %1772 = vrot.lane.b32.xlu0 %v1745, 40
        %v1773 = vpop.permute.xlu0 %1772
        %1774 = vrot.lane.b32.xlu0 %v1746, 40
        %v1775 = vpop.permute.xlu0 %1774
        %1776 = vrot.lane.b32.xlu0 %v1747, 40
        %v1777 = vpop.permute.xlu0 %1776
        %1778 = vrot.lane.b32.xlu0 %v1748, 40
        %v1779 = vpop.permute.xlu0 %1778
        %1780 = vrot.lane.b32.xlu0 %v1749, 40
        %v1781 = vpop.permute.xlu0 %1780
        %1782 = vrot.lane.b32.xlu0 %v1750, 40
        %v1783 = vpop.permute.xlu0 %1782
        %1784 = vrot.lane.b32.xlu0 %v1751, 40
        %v1785 = vpop.permute.xlu0 %1784
        %1786 = vrot.lane.b32.xlu0 %v1752, 40
        %v1787 = vpop.permute.xlu0 %1786
        %1788 = vrot.lane.b32.xlu0 %v1753, 40
        %v1789 = vpop.permute.xlu0 %1788
        %1790 = vrot.lane.b32.xlu0 %v1754, 40
        %v1791 = vpop.permute.xlu0 %1790
        %1792 = vrot.lane.b32.xlu0 %v1755, 40
        %v1793 = vpop.permute.xlu0 %1792
        %1794 = vrot.lane.b32.xlu0 %v1756, 40
        %v1795 = vpop.permute.xlu0 %1794
        %1796 = vrot.lane.b32.xlu0 %v1757, 40
        %v1797 = vpop.permute.xlu0 %1796
        %1798 = vrot.lane.b32.xlu0 %v1758, 40
        %v1799 = vpop.permute.xlu0 %1798
        %1800 = vrot.lane.b32.xlu0 %v1759, 40
        %v1801 = vpop.permute.xlu0 %1800
        %1802 = vrot.lane.b32.xlu0 %v1760, 40
        %v1803 = vpop.permute.xlu0 %1802
        %1804 = vrot.lane.b32.xlu0 %v1761, 40
        %v1805 = vpop.permute.xlu0 %1804
        %1806 = vrot.lane.b32.xlu0 %v1762, 40
        %v1807 = vpop.permute.xlu0 %1806
        %1808 = vrot.lane.b32.xlu0 %v1763, 40
        %v1809 = vpop.permute.xlu0 %1808
        %1810 = vrot.lane.b32.xlu0 %v1764, 40
        %v1811 = vpop.permute.xlu0 %1810
        %1812 = vrot.lane.b32.xlu0 %v1765, 40
        %v1813 = vpop.permute.xlu0 %1812
        %1814 = vrot.lane.b32.xlu0 %v1766, 40
        %v1815 = vpop.permute.xlu0 %1814
        %1816 = vrot.lane.b32.xlu0 %v1767, 40
        %v1817 = vpop.permute.xlu0 %1816
        %1818 = vrot.lane.b32.xlu0 %v1768, 40
        %v1819 = vpop.permute.xlu0 %1818
        %1820 = vrot.lane.b32.xlu0 %v1769, 40
        %v1821 = vpop.permute.xlu0 %1820
        %v1822 = vadd.f32 %v1562, %v1771
        %v1823 = vadd.f32 %v1563, %v1773
        %v1824 = vadd.f32 %v1564, %v1775
        %v1825 = vadd.f32 %v1565, %v1777
        %v1826 = vadd.f32 %v1566, %v1779
        %v1827 = vadd.f32 %v1567, %v1781
        %v1828 = vadd.f32 %v1568, %v1783
        %v1829 = vadd.f32 %v1569, %v1785
        %v1830 = vadd.f32 %v1570, %v1787
        %v1831 = vadd.f32 %v1571, %v1789
        %v1832 = vadd.f32 %v1572, %v1791
        %v1833 = vadd.f32 %v1573, %v1793
        %v1834 = vadd.f32 %v1574, %v1795
        %v1835 = vadd.f32 %v1575, %v1797
        %v1836 = vadd.f32 %v1576, %v1799
        %v1837 = vadd.f32 %v1577, %v1801
        %v1838 = vadd.f32 %v1578, %v1803
        %v1839 = vadd.f32 %v1579, %v1805
        %v1840 = vadd.f32 %v1580, %v1807
        %v1841 = vadd.f32 %v1581, %v1809
        %v1842 = vadd.f32 %v1582, %v1811
        %v1843 = vadd.f32 %v1583, %v1813
        %v1844 = vadd.f32 %v1584, %v1815
        %v1845 = vadd.f32 %v1585, %v1817
        %v1846 = vadd.f32 %v1586, %v1819
        %v1847 = vadd.f32 %v1587, %v1821
        %s1848 = scalar_lea.vmem [#allocation3], 4
        %v1849 = vld [vmem:[%s1848] ss:$2 sm:$0xff]
        %s1850 = scalar_lea.vmem [#allocation3], 20
        %v1851 = vld [vmem:[%s1850] ss:$2 sm:$0x1f]
        %s1852 = scalar_lea.vmem [#allocation3], 36
        %v1853 = vld [vmem:[%s1852] ss:$2 sm:$0xff]
        %s1854 = scalar_lea.vmem [#allocation3], 52
        %v1855 = vld [vmem:[%s1854] ss:$2 sm:$0x1f]
        %s1856 = scalar_lea.vmem [#allocation3], 68
        %v1857 = vld [vmem:[%s1856] ss:$2 sm:$0xff]
        %s1858 = scalar_lea.vmem [#allocation3], 84
        %v1859 = vld [vmem:[%s1858] ss:$2 sm:$0x1f]
        %s1860 = scalar_lea.vmem [#allocation3], 100
        %v1861 = vld [vmem:[%s1860] ss:$2 sm:$0xff]
        %s1862 = scalar_lea.vmem [#allocation3], 116
        %v1863 = vld [vmem:[%s1862] ss:$2 sm:$0x1f]
        %s1864 = scalar_lea.vmem [#allocation3], 132
        %v1865 = vld [vmem:[%s1864] ss:$2 sm:$0xff]
        %s1866 = scalar_lea.vmem [#allocation3], 148
        %v1867 = vld [vmem:[%s1866] ss:$2 sm:$0x1f]
        %s1868 = scalar_lea.vmem [#allocation3], 164
        %v1869 = vld [vmem:[%s1868] ss:$2 sm:$0xff]
        %s1870 = scalar_lea.vmem [#allocation3], 180
        %v1871 = vld [vmem:[%s1870] ss:$2 sm:$0x1f]
        %s1872 = scalar_lea.vmem [#allocation3], 196
        %v1873 = vld [vmem:[%s1872] ss:$2 sm:$0xff]
        %s1874 = scalar_lea.vmem [#allocation3], 212
        %v1875 = vld [vmem:[%s1874] ss:$2 sm:$0x1f]
        %s1876 = scalar_lea.vmem [#allocation3], 228
        %v1877 = vld [vmem:[%s1876] ss:$2 sm:$0xff]
        %s1878 = scalar_lea.vmem [#allocation3], 244
        %v1879 = vld [vmem:[%s1878] ss:$2 sm:$0x1f]
        %s1880 = scalar_lea.vmem [#allocation3], 260
        %v1881 = vld [vmem:[%s1880] ss:$2 sm:$0xff]
        %s1882 = scalar_lea.vmem [#allocation3], 276
        %v1883 = vld [vmem:[%s1882] ss:$2 sm:$0x1f]
        %s1884 = scalar_lea.vmem [#allocation3], 292
        %v1885 = vld [vmem:[%s1884] ss:$2 sm:$0xff]
        %s1886 = scalar_lea.vmem [#allocation3], 308
        %v1887 = vld [vmem:[%s1886] ss:$2 sm:$0x1f]
        %s1888 = scalar_lea.vmem [#allocation3], 324
        %v1889 = vld [vmem:[%s1888] ss:$2 sm:$0xff]
        %s1890 = scalar_lea.vmem [#allocation3], 340
        %v1891 = vld [vmem:[%s1890] ss:$2 sm:$0x1f]
        %s1892 = scalar_lea.vmem [#allocation3], 356
        %v1893 = vld [vmem:[%s1892] ss:$2 sm:$0xff]
        %s1894 = scalar_lea.vmem [#allocation3], 372
        %v1895 = vld [vmem:[%s1894] ss:$2 sm:$0x1f]
        %s1896 = scalar_lea.vmem [#allocation3], 388
        %v1897 = vld [vmem:[%s1896] ss:$2 sm:$0xff]
        %s1898 = scalar_lea.vmem [#allocation3], 404
        %v1899 = vld [vmem:[%s1898] ss:$2 sm:$0x1f]
        %s1900 = scalar_lea.vmem [#allocation3], 5
        %v1901 = vld [vmem:[%s1900] ss:$2 sm:$0xff]
        %s1902 = scalar_lea.vmem [#allocation3], 21
        %v1903 = vld [vmem:[%s1902] ss:$2 sm:$0x1f]
        %s1904 = scalar_lea.vmem [#allocation3], 37
        %v1905 = vld [vmem:[%s1904] ss:$2 sm:$0xff]
        %s1906 = scalar_lea.vmem [#allocation3], 53
        %v1907 = vld [vmem:[%s1906] ss:$2 sm:$0x1f]
        %s1908 = scalar_lea.vmem [#allocation3], 69
        %v1909 = vld [vmem:[%s1908] ss:$2 sm:$0xff]
        %s1910 = scalar_lea.vmem [#allocation3], 85
        %v1911 = vld [vmem:[%s1910] ss:$2 sm:$0x1f]
        %s1912 = scalar_lea.vmem [#allocation3], 101
        %v1913 = vld [vmem:[%s1912] ss:$2 sm:$0xff]
        %s1914 = scalar_lea.vmem [#allocation3], 117
        %v1915 = vld [vmem:[%s1914] ss:$2 sm:$0x1f]
        %s1916 = scalar_lea.vmem [#allocation3], 133
        %v1917 = vld [vmem:[%s1916] ss:$2 sm:$0xff]
        %s1918 = scalar_lea.vmem [#allocation3], 149
        %v1919 = vld [vmem:[%s1918] ss:$2 sm:$0x1f]
        %s1920 = scalar_lea.vmem [#allocation3], 165
        %v1921 = vld [vmem:[%s1920] ss:$2 sm:$0xff]
        %s1922 = scalar_lea.vmem [#allocation3], 181
        %v1923 = vld [vmem:[%s1922] ss:$2 sm:$0x1f]
        %s1924 = scalar_lea.vmem [#allocation3], 197
        %v1925 = vld [vmem:[%s1924] ss:$2 sm:$0xff]
        %s1926 = scalar_lea.vmem [#allocation3], 213
        %v1927 = vld [vmem:[%s1926] ss:$2 sm:$0x1f]
        %s1928 = scalar_lea.vmem [#allocation3], 229
        %v1929 = vld [vmem:[%s1928] ss:$2 sm:$0xff]
        %s1930 = scalar_lea.vmem [#allocation3], 245
        %v1931 = vld [vmem:[%s1930] ss:$2 sm:$0x1f]
        %s1932 = scalar_lea.vmem [#allocation3], 261
        %v1933 = vld [vmem:[%s1932] ss:$2 sm:$0xff]
        %s1934 = scalar_lea.vmem [#allocation3], 277
        %v1935 = vld [vmem:[%s1934] ss:$2 sm:$0x1f]
        %s1936 = scalar_lea.vmem [#allocation3], 293
        %v1937 = vld [vmem:[%s1936] ss:$2 sm:$0xff]
        %s1938 = scalar_lea.vmem [#allocation3], 309
        %v1939 = vld [vmem:[%s1938] ss:$2 sm:$0x1f]
        %s1940 = scalar_lea.vmem [#allocation3], 325
        %v1941 = vld [vmem:[%s1940] ss:$2 sm:$0xff]
        %s1942 = scalar_lea.vmem [#allocation3], 341
        %v1943 = vld [vmem:[%s1942] ss:$2 sm:$0x1f]
        %s1944 = scalar_lea.vmem [#allocation3], 357
        %v1945 = vld [vmem:[%s1944] ss:$2 sm:$0xff]
        %s1946 = scalar_lea.vmem [#allocation3], 373
        %v1947 = vld [vmem:[%s1946] ss:$2 sm:$0x1f]
        %s1948 = scalar_lea.vmem [#allocation3], 389
        %v1949 = vld [vmem:[%s1948] ss:$2 sm:$0xff]
        %s1950 = scalar_lea.vmem [#allocation3], 405
        %v1951 = vld [vmem:[%s1950] ss:$2 sm:$0x1f]
        %v1952 = vmax.f32 %v1849, %v1901
        %v1953 = vmax.f32 %v1851, %v1903
        %v1954 = vmax.f32 %v1853, %v1905
        %v1955 = vmax.f32 %v1855, %v1907
        %v1956 = vmax.f32 %v1857, %v1909
        %v1957 = vmax.f32 %v1859, %v1911
        %v1958 = vmax.f32 %v1861, %v1913
        %v1959 = vmax.f32 %v1863, %v1915
        %v1960 = vmax.f32 %v1865, %v1917
        %v1961 = vmax.f32 %v1867, %v1919
        %v1962 = vmax.f32 %v1869, %v1921
        %v1963 = vmax.f32 %v1871, %v1923
        %v1964 = vmax.f32 %v1873, %v1925
        %v1965 = vmax.f32 %v1875, %v1927
        %v1966 = vmax.f32 %v1877, %v1929
        %v1967 = vmax.f32 %v1879, %v1931
        %v1968 = vmax.f32 %v1881, %v1933
        %v1969 = vmax.f32 %v1883, %v1935
        %v1970 = vmax.f32 %v1885, %v1937
        %v1971 = vmax.f32 %v1887, %v1939
        %v1972 = vmax.f32 %v1889, %v1941
        %v1973 = vmax.f32 %v1891, %v1943
        %v1974 = vmax.f32 %v1893, %v1945
        %v1975 = vmax.f32 %v1895, %v1947
        %v1976 = vmax.f32 %v1897, %v1949
        %v1977 = vmax.f32 %v1899, %v1951
        %v1978 = vadd.f32 %v1952, %v1534
        %v1979 = vadd.f32 %v1953, %v1534
        %v1980 = vadd.f32 %v1954, %v1534
        %v1981 = vadd.f32 %v1955, %v1534
        %v1982 = vadd.f32 %v1956, %v1534
        %v1983 = vadd.f32 %v1957, %v1534
        %v1984 = vadd.f32 %v1958, %v1534
        %v1985 = vadd.f32 %v1959, %v1534
        %v1986 = vadd.f32 %v1960, %v1534
        %v1987 = vadd.f32 %v1961, %v1534
        %v1988 = vadd.f32 %v1962, %v1534
        %v1989 = vadd.f32 %v1963, %v1534
        %v1990 = vadd.f32 %v1964, %v1534
        %v1991 = vadd.f32 %v1965, %v1534
        %v1992 = vadd.f32 %v1966, %v1534
        %v1993 = vadd.f32 %v1967, %v1534
        %v1994 = vadd.f32 %v1968, %v1534
        %v1995 = vadd.f32 %v1969, %v1534
        %v1996 = vadd.f32 %v1970, %v1534
        %v1997 = vadd.f32 %v1971, %v1534
        %v1998 = vadd.f32 %v1972, %v1534
        %v1999 = vadd.f32 %v1973, %v1534
        %v2000 = vadd.f32 %v1974, %v1534
        %v2001 = vadd.f32 %v1975, %v1534
        %v2002 = vadd.f32 %v1976, %v1534
        %v2003 = vadd.f32 %v1977, %v1534
        %v2004 = vmax.f32 %v1978, 0.0
        %v2005 = vmax.f32 %v1979, 0.0
        %v2006 = vmax.f32 %v1980, 0.0
        %v2007 = vmax.f32 %v1981, 0.0
        %v2008 = vmax.f32 %v1982, 0.0
        %v2009 = vmax.f32 %v1983, 0.0
        %v2010 = vmax.f32 %v1984, 0.0
        %v2011 = vmax.f32 %v1985, 0.0
        %v2012 = vmax.f32 %v1986, 0.0
        %v2013 = vmax.f32 %v1987, 0.0
        %v2014 = vmax.f32 %v1988, 0.0
        %v2015 = vmax.f32 %v1989, 0.0
        %v2016 = vmax.f32 %v1990, 0.0
        %v2017 = vmax.f32 %v1991, 0.0
        %v2018 = vmax.f32 %v1992, 0.0
        %v2019 = vmax.f32 %v1993, 0.0
        %v2020 = vmax.f32 %v1994, 0.0
        %v2021 = vmax.f32 %v1995, 0.0
        %v2022 = vmax.f32 %v1996, 0.0
        %v2023 = vmax.f32 %v1997, 0.0
        %v2024 = vmax.f32 %v1998, 0.0
        %v2025 = vmax.f32 %v1999, 0.0
        %v2026 = vmax.f32 %v2000, 0.0
        %v2027 = vmax.f32 %v2001, 0.0
        %v2028 = vmax.f32 %v2002, 0.0
        %v2029 = vmax.f32 %v2003, 0.0
        %2030 = vrot.lane.b32.xlu0 %v2004, 80
        %v2031 = vpop.permute.xlu0 %2030
        %2032 = vrot.lane.b32.xlu0 %v2005, 80
        %v2033 = vpop.permute.xlu0 %2032
        %2034 = vrot.lane.b32.xlu0 %v2006, 80
        %v2035 = vpop.permute.xlu0 %2034
        %2036 = vrot.lane.b32.xlu0 %v2007, 80
        %v2037 = vpop.permute.xlu0 %2036
        %2038 = vrot.lane.b32.xlu0 %v2008, 80
        %v2039 = vpop.permute.xlu0 %2038
        %2040 = vrot.lane.b32.xlu0 %v2009, 80
        %v2041 = vpop.permute.xlu0 %2040
        %2042 = vrot.lane.b32.xlu0 %v2010, 80
        %v2043 = vpop.permute.xlu0 %2042
        %2044 = vrot.lane.b32.xlu0 %v2011, 80
        %v2045 = vpop.permute.xlu0 %2044
        %2046 = vrot.lane.b32.xlu0 %v2012, 80
        %v2047 = vpop.permute.xlu0 %2046
        %2048 = vrot.lane.b32.xlu0 %v2013, 80
        %v2049 = vpop.permute.xlu0 %2048
        %2050 = vrot.lane.b32.xlu0 %v2014, 80
        %v2051 = vpop.permute.xlu0 %2050
        %2052 = vrot.lane.b32.xlu0 %v2015, 80
        %v2053 = vpop.permute.xlu0 %2052
        %2054 = vrot.lane.b32.xlu0 %v2016, 80
        %v2055 = vpop.permute.xlu0 %2054
        %2056 = vrot.lane.b32.xlu0 %v2017, 80
        %v2057 = vpop.permute.xlu0 %2056
        %2058 = vrot.lane.b32.xlu0 %v2018, 80
        %v2059 = vpop.permute.xlu0 %2058
        %2060 = vrot.lane.b32.xlu0 %v2019, 80
        %v2061 = vpop.permute.xlu0 %2060
        %2062 = vrot.lane.b32.xlu0 %v2020, 80
        %v2063 = vpop.permute.xlu0 %2062
        %2064 = vrot.lane.b32.xlu0 %v2021, 80
        %v2065 = vpop.permute.xlu0 %2064
        %2066 = vrot.lane.b32.xlu0 %v2022, 80
        %v2067 = vpop.permute.xlu0 %2066
        %2068 = vrot.lane.b32.xlu0 %v2023, 80
        %v2069 = vpop.permute.xlu0 %2068
        %2070 = vrot.lane.b32.xlu0 %v2024, 80
        %v2071 = vpop.permute.xlu0 %2070
        %2072 = vrot.lane.b32.xlu0 %v2025, 80
        %v2073 = vpop.permute.xlu0 %2072
        %2074 = vrot.lane.b32.xlu0 %v2026, 80
        %v2075 = vpop.permute.xlu0 %2074
        %2076 = vrot.lane.b32.xlu0 %v2027, 80
        %v2077 = vpop.permute.xlu0 %2076
        %2078 = vrot.lane.b32.xlu0 %v2028, 80
        %v2079 = vpop.permute.xlu0 %2078
        %2080 = vrot.lane.b32.xlu0 %v2029, 80
        %v2081 = vpop.permute.xlu0 %2080
        %v2082 = vadd.f32 %v1822, %v2031
        %v2083 = vadd.f32 %v1823, %v2033
        %v2084 = vadd.f32 %v1824, %v2035
        %v2085 = vadd.f32 %v1825, %v2037
        %v2086 = vadd.f32 %v1826, %v2039
        %v2087 = vadd.f32 %v1827, %v2041
        %v2088 = vadd.f32 %v1828, %v2043
        %v2089 = vadd.f32 %v1829, %v2045
        %v2090 = vadd.f32 %v1830, %v2047
        %v2091 = vadd.f32 %v1831, %v2049
        %v2092 = vadd.f32 %v1832, %v2051
        %v2093 = vadd.f32 %v1833, %v2053
        %v2094 = vadd.f32 %v1834, %v2055
        %v2095 = vadd.f32 %v1835, %v2057
        %v2096 = vadd.f32 %v1836, %v2059
        %v2097 = vadd.f32 %v1837, %v2061
        %v2098 = vadd.f32 %v1838, %v2063
        %v2099 = vadd.f32 %v1839, %v2065
        %v2100 = vadd.f32 %v1840, %v2067
        %v2101 = vadd.f32 %v1841, %v2069
        %v2102 = vadd.f32 %v1842, %v2071
        %v2103 = vadd.f32 %v1843, %v2073
        %v2104 = vadd.f32 %v1844, %v2075
        %v2105 = vadd.f32 %v1845, %v2077
        %v2106 = vadd.f32 %v1846, %v2079
        %v2107 = vadd.f32 %v1847, %v2081
        %2108 = vst [vmem:[#allocation4] sm:$0xff] %v2082
        %2109 = vst [vmem:[#allocation4 + $0x8] sm:$0x1f] %v2083
        %2110 = vst [vmem:[#allocation4 + $0x10] sm:$0xff] %v2084
        %2111 = vst [vmem:[#allocation4 + $0x18] sm:$0x1f] %v2085
        %2112 = vst [vmem:[#allocation4 + $0x20] sm:$0xff] %v2086
        %2113 = vst [vmem:[#allocation4 + $0x28] sm:$0x1f] %v2087
        %2114 = vst [vmem:[#allocation4 + $0x30] sm:$0xff] %v2088
        %2115 = vst [vmem:[#allocation4 + $0x38] sm:$0x1f] %v2089
        %2116 = vst [vmem:[#allocation4 + $0x40] sm:$0xff] %v2090
        %2117 = vst [vmem:[#allocation4 + $0x48] sm:$0x1f] %v2091
        %2118 = vst [vmem:[#allocation4 + $0x50] sm:$0xff] %v2092
        %2119 = vst [vmem:[#allocation4 + $0x58] sm:$0x1f] %v2093
        %2120 = vst [vmem:[#allocation4 + $0x60] sm:$0xff] %v2094
        %2121 = vst [vmem:[#allocation4 + $0x68] sm:$0x1f] %v2095
        %2122 = vst [vmem:[#allocation4 + $0x70] sm:$0xff] %v2096
        %2123 = vst [vmem:[#allocation4 + $0x78] sm:$0x1f] %v2097
        %2124 = vst [vmem:[#allocation4 + $0x80] sm:$0xff] %v2098
        %2125 = vst [vmem:[#allocation4 + $0x88] sm:$0x1f] %v2099
        %2126 = vst [vmem:[#allocation4 + $0x90] sm:$0xff] %v2100
        %2127 = vst [vmem:[#allocation4 + $0x98] sm:$0x1f] %v2101
        %2128 = vst [vmem:[#allocation4 + $0xa0] sm:$0xff] %v2102
        %2129 = vst [vmem:[#allocation4 + $0xa8] sm:$0x1f] %v2103
        %2130 = vst [vmem:[#allocation4 + $0xb0] sm:$0xff] %v2104
        %2131 = vst [vmem:[#allocation4 + $0xb8] sm:$0x1f] %v2105
        %2132 = vst [vmem:[#allocation4 + $0xc0] sm:$0xff] %v2106
        %2133 = vst [vmem:[#allocation4 + $0xc8] sm:$0x1f] %v2107
        %v2134 = vld [vmem:[#allocation4] sm:$0xff]
        %v2135 = vld [vmem:[#allocation4 + $0x8] sm:$0xff]
        %v2136 = vld [vmem:[#allocation4 + $0x10] sm:$0xff]
        %v2137 = vld [vmem:[#allocation4 + $0x18] sm:$0xff]
        %v2138 = vld [vmem:[#allocation4 + $0x20] sm:$0xff]
        %v2139 = vld [vmem:[#allocation4 + $0x28] sm:$0xff]
        %v2140 = vld [vmem:[#allocation4 + $0x30] sm:$0xff]
        %v2141 = vld [vmem:[#allocation4 + $0x38] sm:$0xff]
        %v2142 = vld [vmem:[#allocation4 + $0x40] sm:$0xff]
        %v2143 = vld [vmem:[#allocation4 + $0x48] sm:$0xff]
        %v2144 = vld [vmem:[#allocation4 + $0x50] sm:$0xff]
        %v2145 = vld [vmem:[#allocation4 + $0x58] sm:$0xff]
        %v2146 = vld [vmem:[#allocation4 + $0x60] sm:$0xff]
        %v2147 = vld [vmem:[#allocation4 + $0x68] sm:$0xff]
        %v2148 = vld [vmem:[#allocation4 + $0x70] sm:$0xff]
        %v2149 = vld [vmem:[#allocation4 + $0x78] sm:$0xff]
        %v2150 = vld [vmem:[#allocation4 + $0x80] sm:$0xff]
        %v2151 = vld [vmem:[#allocation4 + $0x88] sm:$0xff]
        %v2152 = vld [vmem:[#allocation4 + $0x90] sm:$0xff]
        %v2153 = vld [vmem:[#allocation4 + $0x98] sm:$0xff]
        %v2154 = vld [vmem:[#allocation4 + $0xa0] sm:$0xff]
        %v2155 = vld [vmem:[#allocation4 + $0xa8] sm:$0xff]
        %v2156 = vld [vmem:[%s3] sm:$0xff]
        %v2157 = vld [vmem:[%s3 + $0x8] sm:$0xff]
        %v2158 = vld [vmem:[%s3 + $0x10] sm:$0xff]
        %v2159 = vld [vmem:[%s3 + $0x18] sm:$0xff]
        %v2160 = vld [vmem:[%s3 + $0x20] sm:$0xff]
        %v2161 = vld [vmem:[%s3 + $0x28] sm:$0xff]
        %v2162 = vld [vmem:[%s3 + $0x30] sm:$0xff]
        %v2163 = vld [vmem:[%s3 + $0x38] sm:$0xff]
        %v2164 = vld [vmem:[%s3 + $0x40] sm:$0xff]
        %v2165 = vld [vmem:[%s3 + $0x48] sm:$0xff]
        %v2166 = vld [vmem:[%s3 + $0x50] sm:$0xff]
        %v2167 = vld [vmem:[%s3 + $0x58] sm:$0xff]
        %v2168 = vld [vmem:[%s3 + $0x60] sm:$0xff]
        %v2169 = vld [vmem:[%s3 + $0x68] sm:$0xff]
        %v2170 = vld [vmem:[%s3 + $0x70] sm:$0xff]
        %v2171 = vld [vmem:[%s3 + $0x78] sm:$0xff]
        %2172 = vmatpush.msra.mxu0 %v2171
        %2173 = vmatpush.msra.mxu0 %v2170
        %2174 = vmatpush.msra.mxu0 %v2169
        %2175 = vmatpush.msra.mxu0 %v2168
        %2176 = vmatpush.msra.mxu0 %v2167
        %2177 = vmatpush.msra.mxu0 %v2166
        %2178 = vmatpush.msra.mxu0 %v2165
        %2179 = vmatpush.msra.mxu0 %v2164
        %2180 = vmatpush.msra.mxu0 %v2163
        %2181 = vmatpush.msra.mxu0 %v2162
        %2182 = vmatpush.msra.mxu0 %v2161
        %2183 = vmatpush.msra.mxu0 %v2160
        %2184 = vmatpush.msra.mxu0 %v2159
        %2185 = vmatpush.msra.mxu0 %v2158
        %2186 = vmatpush.msra.mxu0 %v2157
        %2187 = vmatpush.msra.mxu0 %v2156
        %2188 = vmatmul.f32.gmra.mxu0 %v2134
        %v2189 = vpop.f32.mrf.mxu0
        %v2190 = vadd.f32 0.0, %v2189
        %2191 = vmatmul.f32.gmra.mxu0 %v2135
        %v2192 = vpop.f32.mrf.mxu0
        %v2193 = vadd.f32 0.0, %v2192
        %2194 = vmatmul.f32.gmra.mxu0 %v2136
        %v2195 = vpop.f32.mrf.mxu0
        %v2196 = vadd.f32 0.0, %v2195
        %2197 = vmatmul.f32.gmra.mxu0 %v2137
        %v2198 = vpop.f32.mrf.mxu0
        %v2199 = vadd.f32 0.0, %v2198
        %2200 = vmatmul.f32.gmra.mxu0 %v2138
        %v2201 = vpop.f32.mrf.mxu0
        %v2202 = vadd.f32 0.0, %v2201
        %2203 = vmatmul.f32.gmra.mxu0 %v2139
        %v2204 = vpop.f32.mrf.mxu0
        %v2205 = vadd.f32 0.0, %v2204
        %2206 = vmatmul.f32.gmra.mxu0 %v2140
        %v2207 = vpop.f32.mrf.mxu0
        %v2208 = vadd.f32 0.0, %v2207
        %2209 = vmatmul.f32.gmra.mxu0 %v2141
        %v2210 = vpop.f32.mrf.mxu0
        %v2211 = vadd.f32 0.0, %v2210
        %2212 = vmatmul.f32.gmra.mxu0 %v2142
        %v2213 = vpop.f32.mrf.mxu0
        %v2214 = vadd.f32 0.0, %v2213
        %2215 = vmatmul.f32.gmra.mxu0 %v2143
        %v2216 = vpop.f32.mrf.mxu0
        %v2217 = vadd.f32 0.0, %v2216
        %2218 = vmatmul.f32.gmra.mxu0 %v2144
        %v2219 = vpop.f32.mrf.mxu0
        %v2220 = vadd.f32 0.0, %v2219
        %2221 = vmatmul.f32.gmra.mxu0 %v2145
        %v2222 = vpop.f32.mrf.mxu0
        %v2223 = vadd.f32 0.0, %v2222
        %2224 = vmatmul.f32.gmra.mxu0 %v2146
        %v2225 = vpop.f32.mrf.mxu0
        %v2226 = vadd.f32 0.0, %v2225
        %2227 = vmatmul.f32.gmra.mxu0 %v2147
        %v2228 = vpop.f32.mrf.mxu0
        %v2229 = vadd.f32 0.0, %v2228
        %2230 = vmatmul.f32.gmra.mxu0 %v2148
        %v2231 = vpop.f32.mrf.mxu0
        %v2232 = vadd.f32 0.0, %v2231
        %2233 = vmatmul.f32.gmra.mxu0 %v2149
        %v2234 = vpop.f32.mrf.mxu0
        %v2235 = vadd.f32 0.0, %v2234
        %2236 = vmatmul.f32.gmra.mxu0 %v2150
        %v2237 = vpop.f32.mrf.mxu0
        %v2238 = vadd.f32 0.0, %v2237
        %2239 = vmatmul.f32.gmra.mxu0 %v2151
        %v2240 = vpop.f32.mrf.mxu0
        %v2241 = vadd.f32 0.0, %v2240
        %2242 = vmatmul.f32.gmra.mxu0 %v2152
        %v2243 = vpop.f32.mrf.mxu0
        %v2244 = vadd.f32 0.0, %v2243
        %2245 = vmatmul.f32.gmra.mxu0 %v2153
        %v2246 = vpop.f32.mrf.mxu0
        %v2247 = vadd.f32 0.0, %v2246
        %2248 = vmatmul.f32.gmra.mxu0 %v2154
        %v2249 = vpop.f32.mrf.mxu0
        %v2250 = vadd.f32 0.0, %v2249
        %2251 = vmatmul.f32.gmra.mxu0 %v2155
        %v2252 = vpop.f32.mrf.mxu0
        %v2253 = vadd.f32 0.0, %v2252
        %2254 = vdwg.mxu0
        %2255 = vst [vmem:[#allocation5] sm:$0xff] %v2190
        %2256 = vst [vmem:[#allocation5 + $0x8] sm:$0xff] %v2193
        %2257 = vst [vmem:[#allocation5 + $0x10] sm:$0xff] %v2196
        %2258 = vst [vmem:[#allocation5 + $0x18] sm:$0xff] %v2199
        %2259 = vst [vmem:[#allocation5 + $0x20] sm:$0xff] %v2202
        %2260 = vst [vmem:[#allocation5 + $0x28] sm:$0xff] %v2205
        %2261 = vst [vmem:[#allocation5 + $0x30] sm:$0xff] %v2208
        %2262 = vst [vmem:[#allocation5 + $0x38] sm:$0xff] %v2211
        %2263 = vst [vmem:[#allocation5 + $0x40] sm:$0xff] %v2214
        %2264 = vst [vmem:[#allocation5 + $0x48] sm:$0xff] %v2217
        %2265 = vst [vmem:[#allocation5 + $0x50] sm:$0xff] %v2220
        %2266 = vst [vmem:[#allocation5 + $0x58] sm:$0xff] %v2223
        %2267 = vst [vmem:[#allocation5 + $0x60] sm:$0xff] %v2226
        %2268 = vst [vmem:[#allocation5 + $0x68] sm:$0xff] %v2229
        %2269 = vst [vmem:[#allocation5 + $0x70] sm:$0xff] %v2232
        %2270 = vst [vmem:[#allocation5 + $0x78] sm:$0xff] %v2235
        %2271 = vst [vmem:[#allocation5 + $0x80] sm:$0xff] %v2238
        %2272 = vst [vmem:[#allocation5 + $0x88] sm:$0xff] %v2241
        %2273 = vst [vmem:[#allocation5 + $0x90] sm:$0xff] %v2244
        %2274 = vst [vmem:[#allocation5 + $0x98] sm:$0xff] %v2247
        %2275 = vst [vmem:[#allocation5 + $0xa0] sm:$0xff] %v2250
        %2276 = vst [vmem:[#allocation5 + $0xa8] sm:$0xff] %v2253
        %v2277 = vld [vmem:[#allocation5] sm:$0xff]
        %v2278 = vld [vmem:[#allocation5 + $0x8] sm:$0xff]
        %v2279 = vld [vmem:[#allocation5 + $0x10] sm:$0xff]
        %v2280 = vld [vmem:[#allocation5 + $0x18] sm:$0xff]
        %v2281 = vld [vmem:[#allocation5 + $0x20] sm:$0xff]
        %v2282 = vld [vmem:[#allocation5 + $0x28] sm:$0xff]
        %v2283 = vld [vmem:[#allocation5 + $0x30] sm:$0xff]
        %v2284 = vld [vmem:[#allocation5 + $0x38] sm:$0xff]
        %v2285 = vld [vmem:[#allocation5 + $0x40] sm:$0xff]
        %v2286 = vld [vmem:[#allocation5 + $0x48] sm:$0xff]
        %v2287 = vld [vmem:[#allocation5 + $0x50] sm:$0xff]
        %v2288 = vld [vmem:[#allocation5 + $0x58] sm:$0xff]
        %v2289 = vld [vmem:[#allocation5 + $0x60] sm:$0xff]
        %v2290 = vld [vmem:[#allocation5 + $0x68] sm:$0xff]
        %v2291 = vld [vmem:[#allocation5 + $0x70] sm:$0xff]
        %v2292 = vld [vmem:[#allocation5 + $0x78] sm:$0xff]
        %v2293 = vld [vmem:[#allocation5 + $0x80] sm:$0xff]
        %v2294 = vld [vmem:[#allocation5 + $0x88] sm:$0xff]
        %v2295 = vld [vmem:[#allocation5 + $0x90] sm:$0xff]
        %v2296 = vld [vmem:[#allocation5 + $0x98] sm:$0xff]
        %v2297 = vld [vmem:[#allocation5 + $0xa0] sm:$0xff]
        %v2298 = vld [vmem:[#allocation5 + $0xa8] sm:$0xff]
        %s2299 = scalar_lea.vmem [#allocation4], 16
        %v2300 = vld [vmem:[%s2299] sm:$0xff]
        %v2301 = vld [vmem:[%s2299 + $0x8] sm:$0xff]
        %v2302 = vld [vmem:[%s2299 + $0x10] sm:$0xff]
        %v2303 = vld [vmem:[%s2299 + $0x18] sm:$0xff]
        %v2304 = vld [vmem:[%s2299 + $0x20] sm:$0xff]
        %v2305 = vld [vmem:[%s2299 + $0x28] sm:$0xff]
        %v2306 = vld [vmem:[%s2299 + $0x30] sm:$0xff]
        %v2307 = vld [vmem:[%s2299 + $0x38] sm:$0xff]
        %v2308 = vld [vmem:[%s2299 + $0x40] sm:$0xff]
        %v2309 = vld [vmem:[%s2299 + $0x48] sm:$0xff]
        %v2310 = vld [vmem:[%s2299 + $0x50] sm:$0xff]
        %v2311 = vld [vmem:[%s2299 + $0x58] sm:$0xff]
        %v2312 = vld [vmem:[%s2299 + $0x60] sm:$0xff]
        %v2313 = vld [vmem:[%s2299 + $0x68] sm:$0xff]
        %v2314 = vld [vmem:[%s2299 + $0x70] sm:$0xff]
        %v2315 = vld [vmem:[%s2299 + $0x78] sm:$0xff]
        %v2316 = vld [vmem:[%s2299 + $0x80] sm:$0xff]
        %v2317 = vld [vmem:[%s2299 + $0x88] sm:$0xff]
        %v2318 = vld [vmem:[%s2299 + $0x90] sm:$0xff]
        %v2319 = vld [vmem:[%s2299 + $0x98] sm:$0xff]
        %v2320 = vld [vmem:[%s2299 + $0xa0] sm:$0xff]
        %v2321 = vld [vmem:[%s2299 + $0xa8] sm:$0xff]
        %s2322 = scalar_lea.vmem %s3, 128
        %v2323 = vld [vmem:[%s2322] sm:$0xff]
        %v2324 = vld [vmem:[%s2322 + $0x8] sm:$0xff]
        %v2325 = vld [vmem:[%s2322 + $0x10] sm:$0xff]
        %v2326 = vld [vmem:[%s2322 + $0x18] sm:$0xff]
        %v2327 = vld [vmem:[%s2322 + $0x20] sm:$0xff]
        %v2328 = vld [vmem:[%s2322 + $0x28] sm:$0xff]
        %v2329 = vld [vmem:[%s2322 + $0x30] sm:$0xff]
        %v2330 = vld [vmem:[%s2322 + $0x38] sm:$0xff]
        %v2331 = vld [vmem:[%s2322 + $0x40] sm:$0xff]
        %v2332 = vld [vmem:[%s2322 + $0x48] sm:$0xff]
        %v2333 = vld [vmem:[%s2322 + $0x50] sm:$0xff]
        %v2334 = vld [vmem:[%s2322 + $0x58] sm:$0xff]
        %v2335 = vld [vmem:[%s2322 + $0x60] sm:$0xff]
        %v2336 = vld [vmem:[%s2322 + $0x68] sm:$0xff]
        %v2337 = vld [vmem:[%s2322 + $0x70] sm:$0xff]
        %v2338 = vld [vmem:[%s2322 + $0x78] sm:$0xff]
        %2339 = vmatpush.msra.mxu0 %v2338
        %2340 = vmatpush.msra.mxu0 %v2337
        %2341 = vmatpush.msra.mxu0 %v2336
        %2342 = vmatpush.msra.mxu0 %v2335
        %2343 = vmatpush.msra.mxu0 %v2334
        %2344 = vmatpush.msra.mxu0 %v2333
        %2345 = vmatpush.msra.mxu0 %v2332
        %2346 = vmatpush.msra.mxu0 %v2331
        %2347 = vmatpush.msra.mxu0 %v2330
        %2348 = vmatpush.msra.mxu0 %v2329
        %2349 = vmatpush.msra.mxu0 %v2328
        %2350 = vmatpush.msra.mxu0 %v2327
        %2351 = vmatpush.msra.mxu0 %v2326
        %2352 = vmatpush.msra.mxu0 %v2325
        %2353 = vmatpush.msra.mxu0 %v2324
        %2354 = vmatpush.msra.mxu0 %v2323
        %2355 = vmatmul.f32.gmra.mxu0 %v2300
        %v2356 = vpop.f32.mrf.mxu0
        %v2357 = vadd.f32 0.0, %v2356
        %2358 = vmatmul.f32.gmra.mxu0 %v2301
        %v2359 = vpop.f32.mrf.mxu0
        %v2360 = vadd.f32 0.0, %v2359
        %2361 = vmatmul.f32.gmra.mxu0 %v2302
        %v2362 = vpop.f32.mrf.mxu0
        %v2363 = vadd.f32 0.0, %v2362
        %2364 = vmatmul.f32.gmra.mxu0 %v2303
        %v2365 = vpop.f32.mrf.mxu0
        %v2366 = vadd.f32 0.0, %v2365
        %2367 = vmatmul.f32.gmra.mxu0 %v2304
        %v2368 = vpop.f32.mrf.mxu0
        %v2369 = vadd.f32 0.0, %v2368
        %2370 = vmatmul.f32.gmra.mxu0 %v2305
        %v2371 = vpop.f32.mrf.mxu0
        %v2372 = vadd.f32 0.0, %v2371
        %2373 = vmatmul.f32.gmra.mxu0 %v2306
        %v2374 = vpop.f32.mrf.mxu0
        %v2375 = vadd.f32 0.0, %v2374
        %2376 = vmatmul.f32.gmra.mxu0 %v2307
        %v2377 = vpop.f32.mrf.mxu0
        %v2378 = vadd.f32 0.0, %v2377
        %2379 = vmatmul.f32.gmra.mxu0 %v2308
        %v2380 = vpop.f32.mrf.mxu0
        %v2381 = vadd.f32 0.0, %v2380
        %2382 = vmatmul.f32.gmra.mxu0 %v2309
        %v2383 = vpop.f32.mrf.mxu0
        %v2384 = vadd.f32 0.0, %v2383
        %2385 = vmatmul.f32.gmra.mxu0 %v2310
        %v2386 = vpop.f32.mrf.mxu0
        %v2387 = vadd.f32 0.0, %v2386
        %2388 = vmatmul.f32.gmra.mxu0 %v2311
        %v2389 = vpop.f32.mrf.mxu0
        %v2390 = vadd.f32 0.0, %v2389
        %2391 = vmatmul.f32.gmra.mxu0 %v2312
        %v2392 = vpop.f32.mrf.mxu0
        %v2393 = vadd.f32 0.0, %v2392
        %2394 = vmatmul.f32.gmra.mxu0 %v2313
        %v2395 = vpop.f32.mrf.mxu0
        %v2396 = vadd.f32 0.0, %v2395
        %2397 = vmatmul.f32.gmra.mxu0 %v2314
        %v2398 = vpop.f32.mrf.mxu0
        %v2399 = vadd.f32 0.0, %v2398
        %2400 = vmatmul.f32.gmra.mxu0 %v2315
        %v2401 = vpop.f32.mrf.mxu0
        %v2402 = vadd.f32 0.0, %v2401
        %2403 = vmatmul.f32.gmra.mxu0 %v2316
        %v2404 = vpop.f32.mrf.mxu0
        %v2405 = vadd.f32 0.0, %v2404
        %2406 = vmatmul.f32.gmra.mxu0 %v2317
        %v2407 = vpop.f32.mrf.mxu0
        %v2408 = vadd.f32 0.0, %v2407
        %2409 = vmatmul.f32.gmra.mxu0 %v2318
        %v2410 = vpop.f32.mrf.mxu0
        %v2411 = vadd.f32 0.0, %v2410
        %2412 = vmatmul.f32.gmra.mxu0 %v2319
        %v2413 = vpop.f32.mrf.mxu0
        %v2414 = vadd.f32 0.0, %v2413
        %2415 = vmatmul.f32.gmra.mxu0 %v2320
        %v2416 = vpop.f32.mrf.mxu0
        %v2417 = vadd.f32 0.0, %v2416
        %2418 = vmatmul.f32.gmra.mxu0 %v2321
        %v2419 = vpop.f32.mrf.mxu0
        %v2420 = vadd.f32 0.0, %v2419
        %2421 = vdwg.mxu0
        %v2422 = vadd.f32 %v2277, %v2357
        %v2423 = vadd.f32 %v2278, %v2360
        %v2424 = vadd.f32 %v2279, %v2363
        %v2425 = vadd.f32 %v2280, %v2366
        %v2426 = vadd.f32 %v2281, %v2369
        %v2427 = vadd.f32 %v2282, %v2372
        %v2428 = vadd.f32 %v2283, %v2375
        %v2429 = vadd.f32 %v2284, %v2378
        %v2430 = vadd.f32 %v2285, %v2381
        %v2431 = vadd.f32 %v2286, %v2384
        %v2432 = vadd.f32 %v2287, %v2387
        %v2433 = vadd.f32 %v2288, %v2390
        %v2434 = vadd.f32 %v2289, %v2393
        %v2435 = vadd.f32 %v2290, %v2396
        %v2436 = vadd.f32 %v2291, %v2399
        %v2437 = vadd.f32 %v2292, %v2402
        %v2438 = vadd.f32 %v2293, %v2405
        %v2439 = vadd.f32 %v2294, %v2408
        %v2440 = vadd.f32 %v2295, %v2411
        %v2441 = vadd.f32 %v2296, %v2414
        %v2442 = vadd.f32 %v2297, %v2417
        %v2443 = vadd.f32 %v2298, %v2420
        %2444 = vst [vmem:[#allocation5] sm:$0xff] %v2422
        %2445 = vst [vmem:[#allocation5 + $0x8] sm:$0xff] %v2423
        %2446 = vst [vmem:[#allocation5 + $0x10] sm:$0xff] %v2424
        %2447 = vst [vmem:[#allocation5 + $0x18] sm:$0xff] %v2425
        %2448 = vst [vmem:[#allocation5 + $0x20] sm:$0xff] %v2426
        %2449 = vst [vmem:[#allocation5 + $0x28] sm:$0xff] %v2427
        %2450 = vst [vmem:[#allocation5 + $0x30] sm:$0xff] %v2428
        %2451 = vst [vmem:[#allocation5 + $0x38] sm:$0xff] %v2429
        %2452 = vst [vmem:[#allocation5 + $0x40] sm:$0xff] %v2430
        %2453 = vst [vmem:[#allocation5 + $0x48] sm:$0xff] %v2431
        %2454 = vst [vmem:[#allocation5 + $0x50] sm:$0xff] %v2432
        %2455 = vst [vmem:[#allocation5 + $0x58] sm:$0xff] %v2433
        %2456 = vst [vmem:[#allocation5 + $0x60] sm:$0xff] %v2434
        %2457 = vst [vmem:[#allocation5 + $0x68] sm:$0xff] %v2435
        %2458 = vst [vmem:[#allocation5 + $0x70] sm:$0xff] %v2436
        %2459 = vst [vmem:[#allocation5 + $0x78] sm:$0xff] %v2437
        %2460 = vst [vmem:[#allocation5 + $0x80] sm:$0xff] %v2438
        %2461 = vst [vmem:[#allocation5 + $0x88] sm:$0xff] %v2439
        %2462 = vst [vmem:[#allocation5 + $0x90] sm:$0xff] %v2440
        %2463 = vst [vmem:[#allocation5 + $0x98] sm:$0xff] %v2441
        %2464 = vst [vmem:[#allocation5 + $0xa0] sm:$0xff] %v2442
        %2465 = vst [vmem:[#allocation5 + $0xa8] sm:$0xff] %v2443
        %v2466 = vld [vmem:[#allocation5] sm:$0xff]
        %v2467 = vld [vmem:[#allocation5 + $0x8] sm:$0xff]
        %v2468 = vld [vmem:[#allocation5 + $0x10] sm:$0xff]
        %v2469 = vld [vmem:[#allocation5 + $0x18] sm:$0xff]
        %v2470 = vld [vmem:[#allocation5 + $0x20] sm:$0xff]
        %v2471 = vld [vmem:[#allocation5 + $0x28] sm:$0xff]
        %v2472 = vld [vmem:[#allocation5 + $0x30] sm:$0xff]
        %v2473 = vld [vmem:[#allocation5 + $0x38] sm:$0xff]
        %v2474 = vld [vmem:[#allocation5 + $0x40] sm:$0xff]
        %v2475 = vld [vmem:[#allocation5 + $0x48] sm:$0xff]
        %v2476 = vld [vmem:[#allocation5 + $0x50] sm:$0xff]
        %v2477 = vld [vmem:[#allocation5 + $0x58] sm:$0xff]
        %v2478 = vld [vmem:[#allocation5 + $0x60] sm:$0xff]
        %v2479 = vld [vmem:[#allocation5 + $0x68] sm:$0xff]
        %v2480 = vld [vmem:[#allocation5 + $0x70] sm:$0xff]
        %v2481 = vld [vmem:[#allocation5 + $0x78] sm:$0xff]
        %v2482 = vld [vmem:[#allocation5 + $0x80] sm:$0xff]
        %v2483 = vld [vmem:[#allocation5 + $0x88] sm:$0xff]
        %v2484 = vld [vmem:[#allocation5 + $0x90] sm:$0xff]
        %v2485 = vld [vmem:[#allocation5 + $0x98] sm:$0xff]
        %v2486 = vld [vmem:[#allocation5 + $0xa0] sm:$0xff]
        %v2487 = vld [vmem:[#allocation5 + $0xa8] sm:$0xff]
        %s2488 = scalar_lea.vmem [#allocation4], 32
        %v2489 = vld [vmem:[%s2488] sm:$0xff]
        %v2490 = vld [vmem:[%s2488 + $0x8] sm:$0xff]
        %v2491 = vld [vmem:[%s2488 + $0x10] sm:$0xff]
        %v2492 = vld [vmem:[%s2488 + $0x18] sm:$0xff]
        %v2493 = vld [vmem:[%s2488 + $0x20] sm:$0xff]
        %v2494 = vld [vmem:[%s2488 + $0x28] sm:$0xff]
        %v2495 = vld [vmem:[%s2488 + $0x30] sm:$0xff]
        %v2496 = vld [vmem:[%s2488 + $0x38] sm:$0xff]
        %v2497 = vld [vmem:[%s2488 + $0x40] sm:$0xff]
        %v2498 = vld [vmem:[%s2488 + $0x48] sm:$0xff]
        %v2499 = vld [vmem:[%s2488 + $0x50] sm:$0xff]
        %v2500 = vld [vmem:[%s2488 + $0x58] sm:$0xff]
        %v2501 = vld [vmem:[%s2488 + $0x60] sm:$0xff]
        %v2502 = vld [vmem:[%s2488 + $0x68] sm:$0xff]
        %v2503 = vld [vmem:[%s2488 + $0x70] sm:$0xff]
        %v2504 = vld [vmem:[%s2488 + $0x78] sm:$0xff]
        %v2505 = vld [vmem:[%s2488 + $0x80] sm:$0xff]
        %v2506 = vld [vmem:[%s2488 + $0x88] sm:$0xff]
        %v2507 = vld [vmem:[%s2488 + $0x90] sm:$0xff]
        %v2508 = vld [vmem:[%s2488 + $0x98] sm:$0xff]
        %v2509 = vld [vmem:[%s2488 + $0xa0] sm:$0xff]
        %v2510 = vld [vmem:[%s2488 + $0xa8] sm:$0xff]
        %s2511 = scalar_lea.vmem %s3, 256
        %v2512 = vld [vmem:[%s2511] sm:$0xff]
        %v2513 = vld [vmem:[%s2511 + $0x8] sm:$0xff]
        %v2514 = vld [vmem:[%s2511 + $0x10] sm:$0xff]
        %v2515 = vld [vmem:[%s2511 + $0x18] sm:$0xff]
        %v2516 = vld [vmem:[%s2511 + $0x20] sm:$0xff]
        %v2517 = vld [vmem:[%s2511 + $0x28] sm:$0xff]
        %v2518 = vld [vmem:[%s2511 + $0x30] sm:$0xff]
        %v2519 = vld [vmem:[%s2511 + $0x38] sm:$0xff]
        %v2520 = vld [vmem:[%s2511 + $0x40] sm:$0xff]
        %v2521 = vld [vmem:[%s2511 + $0x48] sm:$0xff]
        %v2522 = vld [vmem:[%s2511 + $0x50] sm:$0xff]
        %v2523 = vld [vmem:[%s2511 + $0x58] sm:$0xff]
        %v2524 = vld [vmem:[%s2511 + $0x60] sm:$0xff]
        %v2525 = vld [vmem:[%s2511 + $0x68] sm:$0xff]
        %v2526 = vld [vmem:[%s2511 + $0x70] sm:$0xff]
        %v2527 = vld [vmem:[%s2511 + $0x78] sm:$0xff]
        %2528 = vmatpush.msra.mxu0 %v2527
        %2529 = vmatpush.msra.mxu0 %v2526
        %2530 = vmatpush.msra.mxu0 %v2525
        %2531 = vmatpush.msra.mxu0 %v2524
        %2532 = vmatpush.msra.mxu0 %v2523
        %2533 = vmatpush.msra.mxu0 %v2522
        %2534 = vmatpush.msra.mxu0 %v2521
        %2535 = vmatpush.msra.mxu0 %v2520
        %2536 = vmatpush.msra.mxu0 %v2519
        %2537 = vmatpush.msra.mxu0 %v2518
        %2538 = vmatpush.msra.mxu0 %v2517
        %2539 = vmatpush.msra.mxu0 %v2516
        %2540 = vmatpush.msra.mxu0 %v2515
        %2541 = vmatpush.msra.mxu0 %v2514
        %2542 = vmatpush.msra.mxu0 %v2513
        %2543 = vmatpush.msra.mxu0 %v2512
        %2544 = vmatmul.f32.gmra.mxu0 %v2489
        %v2545 = vpop.f32.mrf.mxu0
        %v2546 = vadd.f32 0.0, %v2545
        %2547 = vmatmul.f32.gmra.mxu0 %v2490
        %v2548 = vpop.f32.mrf.mxu0
        %v2549 = vadd.f32 0.0, %v2548
        %2550 = vmatmul.f32.gmra.mxu0 %v2491
        %v2551 = vpop.f32.mrf.mxu0
        %v2552 = vadd.f32 0.0, %v2551
        %2553 = vmatmul.f32.gmra.mxu0 %v2492
        %v2554 = vpop.f32.mrf.mxu0
        %v2555 = vadd.f32 0.0, %v2554
        %2556 = vmatmul.f32.gmra.mxu0 %v2493
        %v2557 = vpop.f32.mrf.mxu0
        %v2558 = vadd.f32 0.0, %v2557
        %2559 = vmatmul.f32.gmra.mxu0 %v2494
        %v2560 = vpop.f32.mrf.mxu0
        %v2561 = vadd.f32 0.0, %v2560
        %2562 = vmatmul.f32.gmra.mxu0 %v2495
        %v2563 = vpop.f32.mrf.mxu0
        %v2564 = vadd.f32 0.0, %v2563
        %2565 = vmatmul.f32.gmra.mxu0 %v2496
        %v2566 = vpop.f32.mrf.mxu0
        %v2567 = vadd.f32 0.0, %v2566
        %2568 = vmatmul.f32.gmra.mxu0 %v2497
        %v2569 = vpop.f32.mrf.mxu0
        %v2570 = vadd.f32 0.0, %v2569
        %2571 = vmatmul.f32.gmra.mxu0 %v2498
        %v2572 = vpop.f32.mrf.mxu0
        %v2573 = vadd.f32 0.0, %v2572
        %2574 = vmatmul.f32.gmra.mxu0 %v2499
        %v2575 = vpop.f32.mrf.mxu0
        %v2576 = vadd.f32 0.0, %v2575
        %2577 = vmatmul.f32.gmra.mxu0 %v2500
        %v2578 = vpop.f32.mrf.mxu0
        %v2579 = vadd.f32 0.0, %v2578
        %2580 = vmatmul.f32.gmra.mxu0 %v2501
        %v2581 = vpop.f32.mrf.mxu0
        %v2582 = vadd.f32 0.0, %v2581
        %2583 = vmatmul.f32.gmra.mxu0 %v2502
        %v2584 = vpop.f32.mrf.mxu0
        %v2585 = vadd.f32 0.0, %v2584
        %2586 = vmatmul.f32.gmra.mxu0 %v2503
        %v2587 = vpop.f32.mrf.mxu0
        %v2588 = vadd.f32 0.0, %v2587
        %2589 = vmatmul.f32.gmra.mxu0 %v2504
        %v2590 = vpop.f32.mrf.mxu0
        %v2591 = vadd.f32 0.0, %v2590
        %2592 = vmatmul.f32.gmra.mxu0 %v2505
        %v2593 = vpop.f32.mrf.mxu0
        %v2594 = vadd.f32 0.0, %v2593
        %2595 = vmatmul.f32.gmra.mxu0 %v2506
        %v2596 = vpop.f32.mrf.mxu0
        %v2597 = vadd.f32 0.0, %v2596
        %2598 = vmatmul.f32.gmra.mxu0 %v2507
        %v2599 = vpop.f32.mrf.mxu0
        %v2600 = vadd.f32 0.0, %v2599
        %2601 = vmatmul.f32.gmra.mxu0 %v2508
        %v2602 = vpop.f32.mrf.mxu0
        %v2603 = vadd.f32 0.0, %v2602
        %2604 = vmatmul.f32.gmra.mxu0 %v2509
        %v2605 = vpop.f32.mrf.mxu0
        %v2606 = vadd.f32 0.0, %v2605
        %2607 = vmatmul.f32.gmra.mxu0 %v2510
        %v2608 = vpop.f32.mrf.mxu0
        %v2609 = vadd.f32 0.0, %v2608
        %2610 = vdwg.mxu0
        %v2611 = vadd.f32 %v2466, %v2546
        %v2612 = vadd.f32 %v2467, %v2549
        %v2613 = vadd.f32 %v2468, %v2552
        %v2614 = vadd.f32 %v2469, %v2555
        %v2615 = vadd.f32 %v2470, %v2558
        %v2616 = vadd.f32 %v2471, %v2561
        %v2617 = vadd.f32 %v2472, %v2564
        %v2618 = vadd.f32 %v2473, %v2567
        %v2619 = vadd.f32 %v2474, %v2570
        %v2620 = vadd.f32 %v2475, %v2573
        %v2621 = vadd.f32 %v2476, %v2576
        %v2622 = vadd.f32 %v2477, %v2579
        %v2623 = vadd.f32 %v2478, %v2582
        %v2624 = vadd.f32 %v2479, %v2585
        %v2625 = vadd.f32 %v2480, %v2588
        %v2626 = vadd.f32 %v2481, %v2591
        %v2627 = vadd.f32 %v2482, %v2594
        %v2628 = vadd.f32 %v2483, %v2597
        %v2629 = vadd.f32 %v2484, %v2600
        %v2630 = vadd.f32 %v2485, %v2603
        %v2631 = vadd.f32 %v2486, %v2606
        %v2632 = vadd.f32 %v2487, %v2609
        %2633 = vst [vmem:[#allocation5] sm:$0xff] %v2611
        %2634 = vst [vmem:[#allocation5 + $0x8] sm:$0xff] %v2612
        %2635 = vst [vmem:[#allocation5 + $0x10] sm:$0xff] %v2613
        %2636 = vst [vmem:[#allocation5 + $0x18] sm:$0xff] %v2614
        %2637 = vst [vmem:[#allocation5 + $0x20] sm:$0xff] %v2615
        %2638 = vst [vmem:[#allocation5 + $0x28] sm:$0xff] %v2616
        %2639 = vst [vmem:[#allocation5 + $0x30] sm:$0xff] %v2617
        %2640 = vst [vmem:[#allocation5 + $0x38] sm:$0xff] %v2618
        %2641 = vst [vmem:[#allocation5 + $0x40] sm:$0xff] %v2619
        %2642 = vst [vmem:[#allocation5 + $0x48] sm:$0xff] %v2620
        %2643 = vst [vmem:[#allocation5 + $0x50] sm:$0xff] %v2621
        %2644 = vst [vmem:[#allocation5 + $0x58] sm:$0xff] %v2622
        %2645 = vst [vmem:[#allocation5 + $0x60] sm:$0xff] %v2623
        %2646 = vst [vmem:[#allocation5 + $0x68] sm:$0xff] %v2624
        %2647 = vst [vmem:[#allocation5 + $0x70] sm:$0xff] %v2625
        %2648 = vst [vmem:[#allocation5 + $0x78] sm:$0xff] %v2626
        %2649 = vst [vmem:[#allocation5 + $0x80] sm:$0xff] %v2627
        %2650 = vst [vmem:[#allocation5 + $0x88] sm:$0xff] %v2628
        %2651 = vst [vmem:[#allocation5 + $0x90] sm:$0xff] %v2629
        %2652 = vst [vmem:[#allocation5 + $0x98] sm:$0xff] %v2630
        %2653 = vst [vmem:[#allocation5 + $0xa0] sm:$0xff] %v2631
        %2654 = vst [vmem:[#allocation5 + $0xa8] sm:$0xff] %v2632
        %v2655 = vld [vmem:[#allocation5] sm:$0x3]
        %s2656 = scalar_lea.vmem [#allocation5], 16
        %v2657 = vld [vmem:[%s2656] sm:$0x3]
        %v2658 = vmax.f32 %v2655, %v2657
        %v2660 = vrot.slane %v2658, 1
        %v2662 = vmax.f32 %v2658, %v2660
        %v2663 = vld [vmem:[%s4] sm:$0x1]
        %v2664 = vadd.f32 %v2662, %v2663
        %v2665 = vmax.f32 %v2664, 0.0
        %v2666 = vld [vmem:[#allocation5 + $0x2] sm:$0x3]
        %v2667 = vld [vmem:[%s2656 + $0x2] sm:$0x3]
        %v2668 = vmax.f32 %v2666, %v2667
        %v2670 = vrot.slane %v2668, 1
        %v2672 = vmax.f32 %v2668, %v2670
        %v2673 = vadd.f32 %v2672, %v2663
        %v2674 = vmax.f32 %v2673, 0.0
        %2675 = vrot.lane.b32.xlu0 %v2674, 40
        %v2676 = vpop.permute.xlu0 %2675
        %v2677 = vadd.f32 %v2665, %v2676
        %v2678 = vld [vmem:[#allocation5 + $0x4] sm:$0x3]
        %v2679 = vld [vmem:[%s2656 + $0x4] sm:$0x3]
        %v2680 = vmax.f32 %v2678, %v2679
        %v2682 = vrot.slane %v2680, 1
        %v2684 = vmax.f32 %v2680, %v2682
        %v2685 = vadd.f32 %v2684, %v2663
        %v2686 = vmax.f32 %v2685, 0.0
        %2687 = vrot.lane.b32.xlu0 %v2686, 80
        %v2688 = vpop.permute.xlu0 %2687
        %v2689 = vadd.f32 %v2677, %v2688
        %v2690 = vld [vmem:[#allocation5 + $0x6] sm:$0x3]
        %v2691 = vld [vmem:[%s2656 + $0x6] sm:$0x3]
        %v2692 = vmax.f32 %v2690, %v2691
        %v2694 = vrot.slane %v2692, 1
        %v2696 = vmax.f32 %v2692, %v2694
        %v2697 = vadd.f32 %v2696, %v2663
        %v2698 = vmax.f32 %v2697, 0.0
        %v2699 = vld [vmem:[#allocation5 + $0x8] sm:$0x3]
        %v2700 = vld [vmem:[%s2656 + $0x8] sm:$0x3]
        %v2701 = vmax.f32 %v2699, %v2700
        %v2703 = vrot.slane %v2701, 1
        %v2705 = vmax.f32 %v2701, %v2703
        %v2706 = vadd.f32 %v2705, %v2663
        %v2707 = vmax.f32 %v2706, 0.0
        %2708 = vrot.lane.b32.xlu0 %v2707, 40
        %v2709 = vpop.permute.xlu0 %2708
        %v2710 = vadd.f32 %v2698, %v2709
        %s2711 = scalar_lea.vmem [#allocation5], 32
        %v2712 = vld [vmem:[%s2711] sm:$0x3]
        %s2713 = scalar_lea.vmem [#allocation5], 48
        %v2714 = vld [vmem:[%s2713] sm:$0x3]
        %v2715 = vmax.f32 %v2712, %v2714
        %v2717 = vrot.slane %v2715, 1
        %v2719 = vmax.f32 %v2715, %v2717
        %v2720 = vadd.f32 %v2719, %v2663
        %v2721 = vmax.f32 %v2720, 0.0
        %2722 = vrot.lane.b32.xlu0 %v2721, 80
        %v2723 = vpop.permute.xlu0 %2722
        %v2724 = vadd.f32 %v2710, %v2723
        %v2725 = vld [vmem:[%s2711 + $0x2] sm:$0x3]
        %v2726 = vld [vmem:[%s2713 + $0x2] sm:$0x3]
        %v2727 = vmax.f32 %v2725, %v2726
        %v2729 = vrot.slane %v2727, 1
        %v2731 = vmax.f32 %v2727, %v2729
        %v2732 = vadd.f32 %v2731, %v2663
        %v2733 = vmax.f32 %v2732, 0.0
        %v2734 = vld [vmem:[%s2711 + $0x4] sm:$0x3]
        %v2735 = vld [vmem:[%s2713 + $0x4] sm:$0x3]
        %v2736 = vmax.f32 %v2734, %v2735
        %v2738 = vrot.slane %v2736, 1
        %v2740 = vmax.f32 %v2736, %v2738
        %v2741 = vadd.f32 %v2740, %v2663
        %v2742 = vmax.f32 %v2741, 0.0
        %2743 = vrot.lane.b32.xlu0 %v2742, 40
        %v2744 = vpop.permute.xlu0 %2743
        %v2745 = vadd.f32 %v2733, %v2744
        %v2746 = vld [vmem:[%s2711 + $0x6] sm:$0x3]
        %v2747 = vld [vmem:[%s2713 + $0x6] sm:$0x3]
        %v2748 = vmax.f32 %v2746, %v2747
        %v2750 = vrot.slane %v2748, 1
        %v2752 = vmax.f32 %v2748, %v2750
        %v2753 = vadd.f32 %v2752, %v2663
        %v2754 = vmax.f32 %v2753, 0.0
        %2755 = vrot.lane.b32.xlu0 %v2754, 80
        %v2756 = vpop.permute.xlu0 %2755
        %v2757 = vadd.f32 %v2745, %v2756
        %v2758 = vld [vmem:[%s2711 + $0x8] sm:$0x3]
        %v2759 = vld [vmem:[%s2713 + $0x8] sm:$0x3]
        %v2760 = vmax.f32 %v2758, %v2759
        %v2762 = vrot.slane %v2760, 1
        %v2764 = vmax.f32 %v2760, %v2762
        %v2765 = vadd.f32 %v2764, %v2663
        %v2766 = vmax.f32 %v2765, 0.0
        %s2767 = scalar_lea.vmem [#allocation5], 64
        %v2768 = vld [vmem:[%s2767] sm:$0x3]
        %s2769 = scalar_lea.vmem [#allocation5], 80
        %v2770 = vld [vmem:[%s2769] sm:$0x3]
        %v2771 = vmax.f32 %v2768, %v2770
        %v2773 = vrot.slane %v2771, 1
        %v2775 = vmax.f32 %v2771, %v2773
        %v2776 = vadd.f32 %v2775, %v2663
        %v2777 = vmax.f32 %v2776, 0.0
        %2778 = vrot.lane.b32.xlu0 %v2777, 40
        %v2779 = vpop.permute.xlu0 %2778
        %v2780 = vadd.f32 %v2766, %v2779
        %v2781 = vld [vmem:[%s2767 + $0x2] sm:$0x3]
        %v2782 = vld [vmem:[%s2769 + $0x2] sm:$0x3]
        %v2783 = vmax.f32 %v2781, %v2782
        %v2785 = vrot.slane %v2783, 1
        %v2787 = vmax.f32 %v2783, %v2785
        %v2788 = vadd.f32 %v2787, %v2663
        %v2789 = vmax.f32 %v2788, 0.0
        %2790 = vrot.lane.b32.xlu0 %v2789, 80
        %v2791 = vpop.permute.xlu0 %2790
        %v2792 = vadd.f32 %v2780, %v2791
        %v2793 = vld [vmem:[%s2767 + $0x4] sm:$0x3]
        %v2794 = vld [vmem:[%s2769 + $0x4] sm:$0x3]
        %v2795 = vmax.f32 %v2793, %v2794
        %v2797 = vrot.slane %v2795, 1
        %v2799 = vmax.f32 %v2795, %v2797
        %v2800 = vadd.f32 %v2799, %v2663
        %v2801 = vmax.f32 %v2800, 0.0
        %v2802 = vld [vmem:[%s2767 + $0x6] sm:$0x3]
        %v2803 = vld [vmem:[%s2769 + $0x6] sm:$0x3]
        %v2804 = vmax.f32 %v2802, %v2803
        %v2806 = vrot.slane %v2804, 1
        %v2808 = vmax.f32 %v2804, %v2806
        %v2809 = vadd.f32 %v2808, %v2663
        %v2810 = vmax.f32 %v2809, 0.0
        %2811 = vrot.lane.b32.xlu0 %v2810, 40
        %v2812 = vpop.permute.xlu0 %2811
        %v2813 = vadd.f32 %v2801, %v2812
        %v2814 = vld [vmem:[%s2767 + $0x8] sm:$0x3]
        %v2815 = vld [vmem:[%s2769 + $0x8] sm:$0x3]
        %v2816 = vmax.f32 %v2814, %v2815
        %v2818 = vrot.slane %v2816, 1
        %v2820 = vmax.f32 %v2816, %v2818
        %v2821 = vadd.f32 %v2820, %v2663
        %v2822 = vmax.f32 %v2821, 0.0
        %2823 = vrot.lane.b32.xlu0 %v2822, 80
        %v2824 = vpop.permute.xlu0 %2823
        %v2825 = vadd.f32 %v2813, %v2824
        %s2826 = scalar_lea.vmem [#allocation5], 96
        %v2827 = vld [vmem:[%s2826] sm:$0x3]
        %s2828 = scalar_lea.vmem [#allocation5], 112
        %v2829 = vld [vmem:[%s2828] sm:$0x3]
        %v2830 = vmax.f32 %v2827, %v2829
        %v2832 = vrot.slane %v2830, 1
        %v2834 = vmax.f32 %v2830, %v2832
        %v2835 = vadd.f32 %v2834, %v2663
        %v2836 = vmax.f32 %v2835, 0.0
        %v2837 = vld [vmem:[%s2826 + $0x2] sm:$0x3]
        %v2838 = vld [vmem:[%s2828 + $0x2] sm:$0x3]
        %v2839 = vmax.f32 %v2837, %v2838
        %v2841 = vrot.slane %v2839, 1
        %v2843 = vmax.f32 %v2839, %v2841
        %v2844 = vadd.f32 %v2843, %v2663
        %v2845 = vmax.f32 %v2844, 0.0
        %2846 = vrot.lane.b32.xlu0 %v2845, 40
        %v2847 = vpop.permute.xlu0 %2846
        %v2848 = vadd.f32 %v2836, %v2847
        %v2849 = vld [vmem:[%s2826 + $0x4] sm:$0x3]
        %v2850 = vld [vmem:[%s2828 + $0x4] sm:$0x3]
        %v2851 = vmax.f32 %v2849, %v2850
        %v2853 = vrot.slane %v2851, 1
        %v2855 = vmax.f32 %v2851, %v2853
        %v2856 = vadd.f32 %v2855, %v2663
        %v2857 = vmax.f32 %v2856, 0.0
        %2858 = vrot.lane.b32.xlu0 %v2857, 80
        %v2859 = vpop.permute.xlu0 %2858
        %v2860 = vadd.f32 %v2848, %v2859
        %v2861 = vld [vmem:[%s2826 + $0x6] sm:$0x3]
        %v2862 = vld [vmem:[%s2828 + $0x6] sm:$0x3]
        %v2863 = vmax.f32 %v2861, %v2862
        %v2865 = vrot.slane %v2863, 1
        %v2867 = vmax.f32 %v2863, %v2865
        %v2868 = vadd.f32 %v2867, %v2663
        %v2869 = vmax.f32 %v2868, 0.0
        %v2870 = vld [vmem:[%s2826 + $0x8] sm:$0x3]
        %v2871 = vld [vmem:[%s2828 + $0x8] sm:$0x3]
        %v2872 = vmax.f32 %v2870, %v2871
        %v2874 = vrot.slane %v2872, 1
        %v2876 = vmax.f32 %v2872, %v2874
        %v2877 = vadd.f32 %v2876, %v2663
        %v2878 = vmax.f32 %v2877, 0.0
        %2879 = vrot.lane.b32.xlu0 %v2878, 40
        %v2880 = vpop.permute.xlu0 %2879
        %v2881 = vadd.f32 %v2869, %v2880
        %s2882 = scalar_lea.vmem [#allocation5], 128
        %v2883 = vld [vmem:[%s2882] sm:$0x3]
        %s2884 = scalar_lea.vmem [#allocation5], 144
        %v2885 = vld [vmem:[%s2884] sm:$0x3]
        %v2886 = vmax.f32 %v2883, %v2885
        %v2888 = vrot.slane %v2886, 1
        %v2890 = vmax.f32 %v2886, %v2888
        %v2891 = vadd.f32 %v2890, %v2663
        %v2892 = vmax.f32 %v2891, 0.0
        %2893 = vrot.lane.b32.xlu0 %v2892, 80
        %v2894 = vpop.permute.xlu0 %2893
        %v2895 = vadd.f32 %v2881, %v2894
        %v2896 = vld [vmem:[%s2882 + $0x2] sm:$0x3]
        %v2897 = vld [vmem:[%s2884 + $0x2] sm:$0x3]
        %v2898 = vmax.f32 %v2896, %v2897
        %v2900 = vrot.slane %v2898, 1
        %v2902 = vmax.f32 %v2898, %v2900
        %v2903 = vadd.f32 %v2902, %v2663
        %v2904 = vmax.f32 %v2903, 0.0
        %v2905 = vld [vmem:[%s2882 + $0x4] sm:$0x3]
        %v2906 = vld [vmem:[%s2884 + $0x4] sm:$0x3]
        %v2907 = vmax.f32 %v2905, %v2906
        %v2909 = vrot.slane %v2907, 1
        %v2911 = vmax.f32 %v2907, %v2909
        %v2912 = vadd.f32 %v2911, %v2663
        %v2913 = vmax.f32 %v2912, 0.0
        %2914 = vrot.lane.b32.xlu0 %v2913, 40
        %v2915 = vpop.permute.xlu0 %2914
        %v2916 = vadd.f32 %v2904, %v2915
        %v2917 = vld [vmem:[%s2882 + $0x6] sm:$0x3]
        %v2918 = vld [vmem:[%s2884 + $0x6] sm:$0x3]
        %v2919 = vmax.f32 %v2917, %v2918
        %v2921 = vrot.slane %v2919, 1
        %v2923 = vmax.f32 %v2919, %v2921
        %v2924 = vadd.f32 %v2923, %v2663
        %v2925 = vmax.f32 %v2924, 0.0
        %2926 = vrot.lane.b32.xlu0 %v2925, 80
        %v2927 = vpop.permute.xlu0 %2926
        %v2928 = vadd.f32 %v2916, %v2927
        %v2929 = vld [vmem:[%s2882 + $0x8] sm:$0x3]
        %v2930 = vld [vmem:[%s2884 + $0x8] sm:$0x3]
        %v2931 = vmax.f32 %v2929, %v2930
        %v2933 = vrot.slane %v2931, 1
        %v2935 = vmax.f32 %v2931, %v2933
        %v2936 = vadd.f32 %v2935, %v2663
        %v2937 = vmax.f32 %v2936, 0.0
        %v2938 = vld [vmem:[%s5] sm:$0xff]
        %v2939 = vld [vmem:[%s5 + $0x8] sm:$0xff]
        %v2940 = vld [vmem:[%s5 + $0x10] sm:$0xff]
        %v2941 = vld [vmem:[%s5 + $0x18] sm:$0xff]
        %v2942 = vld [vmem:[%s5 + $0x20] sm:$0xff]
        %v2943 = vld [vmem:[%s5 + $0x28] sm:$0xff]
        %v2944 = vld [vmem:[%s5 + $0x30] sm:$0xff]
        %v2945 = vld [vmem:[%s5 + $0x38] sm:$0xff]
        %v2946 = vld [vmem:[%s5 + $0x40] sm:$0xff]
        %v2947 = vld [vmem:[%s5 + $0x48] sm:$0xff]
        %v2948 = vld [vmem:[%s5 + $0x50] sm:$0xff]
        %v2949 = vld [vmem:[%s5 + $0x58] sm:$0xff]
        %v2950 = vld [vmem:[%s5 + $0x60] sm:$0xff]
        %v2951 = vld [vmem:[%s5 + $0x68] sm:$0xff]
        %v2952 = vld [vmem:[%s5 + $0x70] sm:$0xff]
        %v2953 = vld [vmem:[%s5 + $0x78] sm:$0xff]
        %v2954 = vld [vmem:[%s5 + $0x80] sm:$0xff]
        %v2955 = vld [vmem:[%s5 + $0x88] sm:$0xff]
        %v2956 = vld [vmem:[%s5 + $0x90] sm:$0xff]
        %v2957 = vld [vmem:[%s5 + $0x98] sm:$0xff]
        %v2958 = vld [vmem:[%s5 + $0xa0] sm:$0xff]
        %v2959 = vld [vmem:[%s5 + $0xa8] sm:$0xff]
        %v2960 = vld [vmem:[%s5 + $0xb0] sm:$0xff]
        %v2961 = vld [vmem:[%s5 + $0xb8] sm:$0xff]
        %v2962 = vld [vmem:[%s5 + $0xc0] sm:$0xff]
        %v2963 = vld [vmem:[%s5 + $0xc8] sm:$0xff]
        %v2964 = vld [vmem:[%s5 + $0xd0] sm:$0xff]
        %v2965 = vld [vmem:[%s5 + $0xd8] sm:$0xff]
        %v2966 = vld [vmem:[%s5 + $0xe0] sm:$0xff]
        %v2967 = vld [vmem:[%s5 + $0xe8] sm:$0xff]
        %v2968 = vld [vmem:[%s5 + $0xf0] sm:$0xff]
        %v2969 = vld [vmem:[%s5 + $0xf8] sm:$0xff]
        %v2970 = vld [vmem:[%s5 + $0x100] sm:$0xff]
        %v2971 = vld [vmem:[%s5 + $0x108] sm:$0xff]
        %v2972 = vld [vmem:[%s5 + $0x110] sm:$0xff]
        %v2973 = vld [vmem:[%s5 + $0x118] sm:$0xff]
        %v2974 = vld [vmem:[%s5 + $0x120] sm:$0xff]
        %v2975 = vld [vmem:[%s5 + $0x128] sm:$0xff]
        %v2976 = vld [vmem:[%s5 + $0x130] sm:$0xff]
        %v2977 = vld [vmem:[%s5 + $0x138] sm:$0xff]
        %v2978 = vld [vmem:[%s5 + $0x140] sm:$0xff]
        %v2979 = vld [vmem:[%s5 + $0x148] sm:$0xff]
        %v2980 = vld [vmem:[%s5 + $0x150] sm:$0xff]
        %v2981 = vld [vmem:[%s5 + $0x158] sm:$0xff]
        %v2982 = vld [vmem:[%s5 + $0x160] sm:$0xff]
        %v2983 = vld [vmem:[%s5 + $0x168] sm:$0xff]
        %v2984 = vld [vmem:[%s5 + $0x170] sm:$0xff]
        %v2985 = vld [vmem:[%s5 + $0x178] sm:$0xff]
        %v2986 = vld [vmem:[%s5 + $0x180] sm:$0xff]
        %v2987 = vld [vmem:[%s5 + $0x188] sm:$0xff]
        %v2988 = vld [vmem:[%s5 + $0x190] sm:$0xff]
        %v2989 = vld [vmem:[%s5 + $0x198] sm:$0xff]
        %v2990 = vld [vmem:[%s5 + $0x1a0] sm:$0xff]
        %v2991 = vld [vmem:[%s5 + $0x1a8] sm:$0xff]
        %v2992 = vld [vmem:[%s5 + $0x1b0] sm:$0xff]
        %v2993 = vld [vmem:[%s5 + $0x1b8] sm:$0xff]
        %v2994 = vld [vmem:[%s5 + $0x1c0] sm:$0xff]
        %v2995 = vld [vmem:[%s5 + $0x1c8] sm:$0xff]
        %v2996 = vld [vmem:[%s5 + $0x1d0] sm:$0xff]
        %v2997 = vld [vmem:[%s5 + $0x1d8] sm:$0xff]
        %v2998 = vld [vmem:[%s5 + $0x1e0] sm:$0xff]
        %v2999 = vld [vmem:[%s5 + $0x1e8] sm:$0xff]
        %v3000 = vld [vmem:[%s5 + $0x1f0] sm:$0xff]
        %v3001 = vld [vmem:[%s5 + $0x1f8] sm:$0xff]
        %v3002 = vld [vmem:[%s5 + $0x200] sm:$0xff]
        %v3003 = vld [vmem:[%s5 + $0x208] sm:$0xff]
        %v3004 = vld [vmem:[%s5 + $0x210] sm:$0xff]
        %v3005 = vld [vmem:[%s5 + $0x218] sm:$0xff]
        %v3006 = vld [vmem:[%s5 + $0x220] sm:$0xff]
        %v3007 = vld [vmem:[%s5 + $0x228] sm:$0xff]
        %v3008 = vld [vmem:[%s5 + $0x230] sm:$0xff]
        %v3009 = vld [vmem:[%s5 + $0x238] sm:$0xff]
        %v3010 = vld [vmem:[%s5 + $0x240] sm:$0xff]
        %v3011 = vld [vmem:[%s5 + $0x248] sm:$0xff]
        %v3012 = vld [vmem:[%s5 + $0x250] sm:$0xff]
        %v3013 = vld [vmem:[%s5 + $0x258] sm:$0xff]
        %v3014 = vld [vmem:[%s5 + $0x260] sm:$0xff]
        %v3015 = vld [vmem:[%s5 + $0x268] sm:$0xff]
        %v3016 = vld [vmem:[%s5 + $0x270] sm:$0xff]
        %v3017 = vld [vmem:[%s5 + $0x278] sm:$0xff]
        %v3018 = vld [vmem:[%s5 + $0x280] sm:$0xff]
        %v3019 = vld [vmem:[%s5 + $0x288] sm:$0xff]
        %v3020 = vld [vmem:[%s5 + $0x290] sm:$0xff]
        %v3021 = vld [vmem:[%s5 + $0x298] sm:$0xff]
        %v3022 = vld [vmem:[%s5 + $0x2a0] sm:$0xff]
        %v3023 = vld [vmem:[%s5 + $0x2a8] sm:$0xff]
        %v3024 = vld [vmem:[%s5 + $0x2b0] sm:$0xff]
        %v3025 = vld [vmem:[%s5 + $0x2b8] sm:$0xff]
        %v3026 = vld [vmem:[%s5 + $0x2c0] sm:$0xff]
        %v3027 = vld [vmem:[%s5 + $0x2c8] sm:$0xff]
        %v3028 = vld [vmem:[%s5 + $0x2d0] sm:$0xff]
        %v3029 = vld [vmem:[%s5 + $0x2d8] sm:$0xff]
        %v3030 = vld [vmem:[%s5 + $0x2e0] sm:$0xff]
        %v3031 = vld [vmem:[%s5 + $0x2e8] sm:$0xff]
        %v3032 = vld [vmem:[%s5 + $0x2f0] sm:$0xff]
        %v3033 = vld [vmem:[%s5 + $0x2f8] sm:$0xff]
        %v3034 = vld [vmem:[%s5 + $0x300] sm:$0xff]
        %v3035 = vld [vmem:[%s5 + $0x308] sm:$0xff]
        %v3036 = vld [vmem:[%s5 + $0x310] sm:$0xff]
        %v3037 = vld [vmem:[%s5 + $0x318] sm:$0xff]
        %v3038 = vld [vmem:[%s5 + $0x320] sm:$0xff]
        %v3039 = vld [vmem:[%s5 + $0x328] sm:$0xff]
        %v3040 = vld [vmem:[%s5 + $0x330] sm:$0xff]
        %v3041 = vld [vmem:[%s5 + $0x338] sm:$0xff]
        %v3042 = vld [vmem:[%s5 + $0x340] sm:$0xff]
        %v3043 = vld [vmem:[%s5 + $0x348] sm:$0xff]
        %v3044 = vld [vmem:[%s5 + $0x350] sm:$0xff]
        %v3045 = vld [vmem:[%s5 + $0x358] sm:$0xff]
        %v3046 = vld [vmem:[%s5 + $0x360] sm:$0xff]
        %v3047 = vld [vmem:[%s5 + $0x368] sm:$0xff]
        %v3048 = vld [vmem:[%s5 + $0x370] sm:$0xff]
        %v3049 = vld [vmem:[%s5 + $0x378] sm:$0xff]
        %v3050 = vld [vmem:[%s5 + $0x380] sm:$0xff]
        %v3051 = vld [vmem:[%s5 + $0x388] sm:$0xff]
        %v3052 = vld [vmem:[%s5 + $0x390] sm:$0xff]
        %v3053 = vld [vmem:[%s5 + $0x398] sm:$0xff]
        %v3054 = vld [vmem:[%s5 + $0x3a0] sm:$0xff]
        %v3055 = vld [vmem:[%s5 + $0x3a8] sm:$0xff]
        %v3056 = vld [vmem:[%s5 + $0x3b0] sm:$0xff]
        %v3057 = vld [vmem:[%s5 + $0x3b8] sm:$0xff]
        %v3058 = vld [vmem:[%s5 + $0x3c0] sm:$0xff]
        %v3059 = vld [vmem:[%s5 + $0x3c8] sm:$0xff]
        %v3060 = vld [vmem:[%s5 + $0x3d0] sm:$0xff]
        %v3061 = vld [vmem:[%s5 + $0x3d8] sm:$0xff]
        %v3062 = vld [vmem:[%s5 + $0x3e0] sm:$0xff]
        %v3063 = vld [vmem:[%s5 + $0x3e8] sm:$0xff]
        %v3064 = vld [vmem:[%s5 + $0x3f0] sm:$0xff]
        %v3065 = vld [vmem:[%s5 + $0x3f8] sm:$0xff]
        %v3066 = vld [vmem:[%s5 + $0x400] sm:$0xff]
        %v3067 = vld [vmem:[%s5 + $0x408] sm:$0xff]
        %v3068 = vld [vmem:[%s5 + $0x410] sm:$0xff]
        %v3069 = vld [vmem:[%s5 + $0x418] sm:$0xff]
        %v3070 = vld [vmem:[%s5 + $0x420] sm:$0xff]
        %v3071 = vld [vmem:[%s5 + $0x428] sm:$0xff]
        %v3072 = vld [vmem:[%s5 + $0x430] sm:$0xff]
        %v3073 = vld [vmem:[%s5 + $0x438] sm:$0xff]
        %v3074 = vld [vmem:[%s5 + $0x440] sm:$0xff]
        %v3075 = vld [vmem:[%s5 + $0x448] sm:$0xff]
        %v3076 = vld [vmem:[%s5 + $0x450] sm:$0xff]
        %v3077 = vld [vmem:[%s5 + $0x458] sm:$0xff]
        %v3078 = vld [vmem:[%s5 + $0x460] sm:$0xff]
        %v3079 = vld [vmem:[%s5 + $0x468] sm:$0xff]
        %v3080 = vld [vmem:[%s5 + $0x470] sm:$0xff]
        %v3081 = vld [vmem:[%s5 + $0x478] sm:$0xff]
        %v3082 = vld [vmem:[%s6] sm:$0x1]
        %3083 = vmatpush.msra.mxu0 %v2953
        %3084 = vmatpush.msra.mxu0 %v2952
        %3085 = vmatpush.msra.mxu0 %v2951
        %3086 = vmatpush.msra.mxu0 %v2950
        %3087 = vmatpush.msra.mxu0 %v2949
        %3088 = vmatpush.msra.mxu0 %v2948
        %3089 = vmatpush.msra.mxu0 %v2947
        %3090 = vmatpush.msra.mxu0 %v2946
        %3091 = vmatpush.msra.mxu0 %v2945
        %3092 = vmatpush.msra.mxu0 %v2944
        %3093 = vmatpush.msra.mxu0 %v2943
        %3094 = vmatpush.msra.mxu0 %v2942
        %3095 = vmatpush.msra.mxu0 %v2941
        %3096 = vmatpush.msra.mxu0 %v2940
        %3097 = vmatpush.msra.mxu0 %v2939
        %3098 = vmatpush.msra.mxu0 %v2938
        %3099 = vmatmul.f32.gmra.mxu0 %v2689
        %v3100 = vpop.f32.mrf.mxu0
        %v3101 = vadd.f32 %v3082, %v3100
        %3102 = vdwg.mxu0
        %3103 = vmatpush.msra.mxu0 %v2969
        %3104 = vmatpush.msra.mxu0 %v2968
        %3105 = vmatpush.msra.mxu0 %v2967
        %3106 = vmatpush.msra.mxu0 %v2966
        %3107 = vmatpush.msra.mxu0 %v2965
        %3108 = vmatpush.msra.mxu0 %v2964
        %3109 = vmatpush.msra.mxu0 %v2963
        %3110 = vmatpush.msra.mxu0 %v2962
        %3111 = vmatpush.msra.mxu0 %v2961
        %3112 = vmatpush.msra.mxu0 %v2960
        %3113 = vmatpush.msra.mxu0 %v2959
        %3114 = vmatpush.msra.mxu0 %v2958
        %3115 = vmatpush.msra.mxu0 %v2957
        %3116 = vmatpush.msra.mxu0 %v2956
        %3117 = vmatpush.msra.mxu0 %v2955
        %3118 = vmatpush.msra.mxu0 %v2954
        %3119 = vmatmul.f32.gmra.mxu0 %v2724
        %v3120 = vpop.f32.mrf.mxu0
        %v3121 = vadd.f32 %v3101, %v3120
        %3122 = vdwg.mxu0
        %3123 = vmatpush.msra.mxu0 %v2985
        %3124 = vmatpush.msra.mxu0 %v2984
        %3125 = vmatpush.msra.mxu0 %v2983
        %3126 = vmatpush.msra.mxu0 %v2982
        %3127 = vmatpush.msra.mxu0 %v2981
        %3128 = vmatpush.msra.mxu0 %v2980
        %3129 = vmatpush.msra.mxu0 %v2979
        %3130 = vmatpush.msra.mxu0 %v2978
        %3131 = vmatpush.msra.mxu0 %v2977
        %3132 = vmatpush.msra.mxu0 %v2976
        %3133 = vmatpush.msra.mxu0 %v2975
        %3134 = vmatpush.msra.mxu0 %v2974
        %3135 = vmatpush.msra.mxu0 %v2973
        %3136 = vmatpush.msra.mxu0 %v2972
        %3137 = vmatpush.msra.mxu0 %v2971
        %3138 = vmatpush.msra.mxu0 %v2970
        %3139 = vmatmul.f32.gmra.mxu0 %v2757
        %v3140 = vpop.f32.mrf.mxu0
        %v3141 = vadd.f32 %v3121, %v3140
        %3142 = vdwg.mxu0
        %3143 = vmatpush.msra.mxu0 %v3001
        %3144 = vmatpush.msra.mxu0 %v3000
        %3145 = vmatpush.msra.mxu0 %v2999
        %3146 = vmatpush.msra.mxu0 %v2998
        %3147 = vmatpush.msra.mxu0 %v2997
        %3148 = vmatpush.msra.mxu0 %v2996
        %3149 = vmatpush.msra.mxu0 %v2995
        %3150 = vmatpush.msra.mxu0 %v2994
        %3151 = vmatpush.msra.mxu0 %v2993
        %3152 = vmatpush.msra.mxu0 %v2992
        %3153 = vmatpush.msra.mxu0 %v2991
        %3154 = vmatpush.msra.mxu0 %v2990
        %3155 = vmatpush.msra.mxu0 %v2989
        %3156 = vmatpush.msra.mxu0 %v2988
        %3157 = vmatpush.msra.mxu0 %v2987
        %3158 = vmatpush.msra.mxu0 %v2986
        %3159 = vmatmul.f32.gmra.mxu0 %v2792
        %v3160 = vpop.f32.mrf.mxu0
        %v3161 = vadd.f32 %v3141, %v3160
        %3162 = vdwg.mxu0
        %3163 = vmatpush.msra.mxu0 %v3017
        %3164 = vmatpush.msra.mxu0 %v3016
        %3165 = vmatpush.msra.mxu0 %v3015
        %3166 = vmatpush.msra.mxu0 %v3014
        %3167 = vmatpush.msra.mxu0 %v3013
        %3168 = vmatpush.msra.mxu0 %v3012
        %3169 = vmatpush.msra.mxu0 %v3011
        %3170 = vmatpush.msra.mxu0 %v3010
        %3171 = vmatpush.msra.mxu0 %v3009
        %3172 = vmatpush.msra.mxu0 %v3008
        %3173 = vmatpush.msra.mxu0 %v3007
        %3174 = vmatpush.msra.mxu0 %v3006
        %3175 = vmatpush.msra.mxu0 %v3005
        %3176 = vmatpush.msra.mxu0 %v3004
        %3177 = vmatpush.msra.mxu0 %v3003
        %3178 = vmatpush.msra.mxu0 %v3002
        %3179 = vmatmul.f32.gmra.mxu0 %v2825
        %v3180 = vpop.f32.mrf.mxu0
        %v3181 = vadd.f32 %v3161, %v3180
        %3182 = vdwg.mxu0
        %3183 = vmatpush.msra.mxu0 %v3033
        %3184 = vmatpush.msra.mxu0 %v3032
        %3185 = vmatpush.msra.mxu0 %v3031
        %3186 = vmatpush.msra.mxu0 %v3030
        %3187 = vmatpush.msra.mxu0 %v3029
        %3188 = vmatpush.msra.mxu0 %v3028
        %3189 = vmatpush.msra.mxu0 %v3027
        %3190 = vmatpush.msra.mxu0 %v3026
        %3191 = vmatpush.msra.mxu0 %v3025
        %3192 = vmatpush.msra.mxu0 %v3024
        %3193 = vmatpush.msra.mxu0 %v3023
        %3194 = vmatpush.msra.mxu0 %v3022
        %3195 = vmatpush.msra.mxu0 %v3021
        %3196 = vmatpush.msra.mxu0 %v3020
        %3197 = vmatpush.msra.mxu0 %v3019
        %3198 = vmatpush.msra.mxu0 %v3018
        %3199 = vmatmul.f32.gmra.mxu0 %v2860
        %v3200 = vpop.f32.mrf.mxu0
        %v3201 = vadd.f32 %v3181, %v3200
        %3202 = vdwg.mxu0
        %3203 = vmatpush.msra.mxu0 %v3049
        %3204 = vmatpush.msra.mxu0 %v3048
        %3205 = vmatpush.msra.mxu0 %v3047
        %3206 = vmatpush.msra.mxu0 %v3046
        %3207 = vmatpush.msra.mxu0 %v3045
        %3208 = vmatpush.msra.mxu0 %v3044
        %3209 = vmatpush.msra.mxu0 %v3043
        %3210 = vmatpush.msra.mxu0 %v3042
        %3211 = vmatpush.msra.mxu0 %v3041
        %3212 = vmatpush.msra.mxu0 %v3040
        %3213 = vmatpush.msra.mxu0 %v3039
        %3214 = vmatpush.msra.mxu0 %v3038
        %3215 = vmatpush.msra.mxu0 %v3037
        %3216 = vmatpush.msra.mxu0 %v3036
        %3217 = vmatpush.msra.mxu0 %v3035
        %3218 = vmatpush.msra.mxu0 %v3034
        %3219 = vmatmul.f32.gmra.mxu0 %v2895
        %v3220 = vpop.f32.mrf.mxu0
        %v3221 = vadd.f32 %v3201, %v3220
        %3222 = vdwg.mxu0
        %3223 = vmatpush.msra.mxu0 %v3065
        %3224 = vmatpush.msra.mxu0 %v3064
        %3225 = vmatpush.msra.mxu0 %v3063
        %3226 = vmatpush.msra.mxu0 %v3062
        %3227 = vmatpush.msra.mxu0 %v3061
        %3228 = vmatpush.msra.mxu0 %v3060
        %3229 = vmatpush.msra.mxu0 %v3059
        %3230 = vmatpush.msra.mxu0 %v3058
        %3231 = vmatpush.msra.mxu0 %v3057
        %3232 = vmatpush.msra.mxu0 %v3056
        %3233 = vmatpush.msra.mxu0 %v3055
        %3234 = vmatpush.msra.mxu0 %v3054
        %3235 = vmatpush.msra.mxu0 %v3053
        %3236 = vmatpush.msra.mxu0 %v3052
        %3237 = vmatpush.msra.mxu0 %v3051
        %3238 = vmatpush.msra.mxu0 %v3050
        %3239 = vmatmul.f32.gmra.mxu0 %v2928
        %v3240 = vpop.f32.mrf.mxu0
        %v3241 = vadd.f32 %v3221, %v3240
        %3242 = vdwg.mxu0
        %3243 = vmatpush.msra.mxu0 %v3081
        %3244 = vmatpush.msra.mxu0 %v3080
        %3245 = vmatpush.msra.mxu0 %v3079
        %3246 = vmatpush.msra.mxu0 %v3078
        %3247 = vmatpush.msra.mxu0 %v3077
        %3248 = vmatpush.msra.mxu0 %v3076
        %3249 = vmatpush.msra.mxu0 %v3075
        %3250 = vmatpush.msra.mxu0 %v3074
        %3251 = vmatpush.msra.mxu0 %v3073
        %3252 = vmatpush.msra.mxu0 %v3072
        %3253 = vmatpush.msra.mxu0 %v3071
        %3254 = vmatpush.msra.mxu0 %v3070
        %3255 = vmatpush.msra.mxu0 %v3069
        %3256 = vmatpush.msra.mxu0 %v3068
        %3257 = vmatpush.msra.mxu0 %v3067
        %3258 = vmatpush.msra.mxu0 %v3066
        %3259 = vmatmul.f32.gmra.mxu0 %v2937
        %v3260 = vpop.f32.mrf.mxu0
        %v3261 = vadd.f32 %v3241, %v3260
        %3262 = vdwg.mxu0
        %v3263 = vmax.f32 %v3261, 0.0
        %v3264 = vld [vmem:[%s7] sm:$0xff]
        %v3265 = vld [vmem:[%s7 + $0x8] sm:$0xff]
        %v3266 = vld [vmem:[%s7 + $0x10] sm:$0xff]
        %v3267 = vld [vmem:[%s7 + $0x18] sm:$0xff]
        %v3268 = vld [vmem:[%s7 + $0x20] sm:$0xff]
        %v3269 = vld [vmem:[%s8] sm:$0x1]
        %vm3270 = vcmask 326656
        %v3272 = vsel %vm3270, %v3263, 0
        %3274 = vmatpush.msra.mxu0 0.0
        %3275 = vmatpush.msra.mxu0 0.0
        %3276 = vmatpush.msra.mxu0 0.0
        %3277 = vmatpush.msra.mxu0 0.0
        %3278 = vmatpush.msra.mxu0 0.0
        %3279 = vmatpush.msra.mxu0 0.0
        %3280 = vmatpush.msra.mxu0 0.0
        %3281 = vmatpush.msra.mxu0 0.0
        %3282 = vmatpush.msra.mxu0 0.0
        %3283 = vmatpush.msra.mxu0 0.0
        %3284 = vmatpush.msra.mxu0 0.0
        %3285 = vmatpush.msra.mxu0 %v3268
        %3286 = vmatpush.msra.mxu0 %v3267
        %3287 = vmatpush.msra.mxu0 %v3266
        %3288 = vmatpush.msra.mxu0 %v3265
        %3289 = vmatpush.msra.mxu0 %v3264
        %3290 = vmatmul.f32.gmra.mxu0 %v3272
        %v3291 = vpop.f32.mrf.mxu0
        %v3292 = vadd.f32 %v3269, %v3291
        %3293 = vdwg.mxu0
        %vm3294 = vcmask 73728
        %3295 = vst.msk [vmem:[%s324] sm:$0x1] %vm3294, %v3292
        %s3296 = sand.u32 %s225, 1
        %s3297 = scalar_lea.sflag [#allocation7], %s3296
        %s3298 = sand.u32 %s225, 1
        %s3299 = scalar_lea.vmem [#allocation6], %s3298
        // Predicated region
        $region57: #{lenet_forward.1} parent=55 // pred_check
          %p3300 = pneg %p235
        $region58: #{lenet_forward.1} parent=55 // pred_check_branch
          %3302 = sbr.rel (%p3300) target = $region60
        $region59: #{lenet_forward.1} parent=55 // pred_region
          %3304 = vsyncadd %s3297, 0
          %s3305 = scalar_lea.hbm %s9, %s23
          %s3307 = sshll.u32 %s3299, 4
          %s3308 = int_to_ptr.vmem [resolvable:$true] %s3307
          %s3309 = sshll.u32 %s3305, 4
          %s3310 = int_to_ptr.hbm [resolvable:$true] %s3309
          %3312 = dma.vmem_to_hbm [thread:$0]  %s3308, 16, %s3310, %s3297
        $region60: #{lenet_forward.1} parent=55 // pred_fallthru
          _
      $region56: #{lenet_forward.1} parent=5 // pred_fallthru
        _
      %p3313 = scmp.le.s32.totalorder 2, %s18
      // Predicated region
      $region61: #{lenet_forward.1} parent=5 // pred_check
        %p3314 = pneg %p3313
      $region62: #{lenet_forward.1} parent=5 // pred_check_branch
        %3316 = sbr.rel (%p3314) target = $region64
      $region63: #{lenet_forward.1} parent=5 // pred_region
        %s3317 = ssub.s32 %s18, 2
        // Predicated region
        $region65: #{lenet_forward.1} parent=63 // pred_check
          %p3318 = pneg %p241
        $region66: #{lenet_forward.1} parent=63 // pred_check_branch
          %3320 = sbr.rel (%p3318) target = $region68
        $region67: #{lenet_forward.1} parent=63 // pred_region
          %s3321 = sand.u32 %s226, 1
          %s3322 = scalar_lea.sflag [#allocation7], %s3321
          %s3323 = sand.u32 %s226, 1
          %s3324 = scalar_lea.vmem [#allocation6], %s3323
          %3326 = dma.done %s3322, 16
        $region68: #{lenet_forward.1} parent=63 // pred_fallthru
          _
      $region64: #{lenet_forward.1} parent=5 // pred_fallthru
        _
    $region6: #{lenet_forward.1} parent=1 // loop_footer
      %s22 = sadd.s32 1, %s18
    $region7: #{lenet_forward.1} parent=1 // loop_footer_branch
      %17 = sbr.rel target = $region3
    $region8: #{lenet_forward.1} parent=1 // loop_exit
      _
    %3327 = vsyncpa [#allocation7], 1
    %s3328 = scalar_lea.sflag [#allocation7], 1
    %3329 = vsyncpa %s3328, 1

</llo_original>
